<compile_context>
chip_gen: v7x
topology: tpu7x:2x2x1
jax: 0.10.0
libtpu: 0.0.40
codegen_flags: <defaults>
</compile_context>

<pallas_src>
import jax
import jax.numpy as jnp
from jax.experimental import pallas as pl
from jax.experimental.pallas import tpu as pltpu
import numpy as np

LANE = 128  # TPU lane width


# ----------------------------------------------------------------------------
# Fused Pallas kernel (all LSTM layers + FC head)
# ----------------------------------------------------------------------------
def _make_fused_kernel(num_layers, T, B, Hp, unroll):
    """Builds the fused kernel for a fixed (num_layers, T, B, Hp)."""

    def kernel(*refs):
        # Inputs: x, then (w_ih, w_hh, bias) per layer, then fc_w, fc_b.
        x_ref = refs[0]
        layer_refs = refs[1:1 + 3 * num_layers]
        fc_w_ref = refs[1 + 3 * num_layers]       # (1, Hp)
        fc_b_ref = refs[2 + 3 * num_layers]       # (1, 1)
        out_ref = refs[3 + 3 * num_layers]        # (B, 1)
        seq_a, seq_b, gx_sc, h_sc, c_sc = refs[4 + 3 * num_layers:]
        seq_bufs = (seq_a, seq_b)

        for layer in range(num_layers):
            # Hoisted full-tile weight reads (outside the time loop).
            wih = layer_refs[3 * layer][...]      # (D_in, 4Hp)
            whh = layer_refs[3 * layer + 1][...]  # (Hp, 4Hp)
            bias = layer_refs[3 * layer + 2][...] # (1, 4Hp)

            if layer == 0:
                xin = x_ref[...]                  # (T, B, D_in)
            else:
                xin = seq_bufs[(layer - 1) % 2][...]  # (T, B, Hp)
            d_in = xin.shape[-1]

            # ---- One big MXU matmul for the whole sequence (bias folded in).
            gx = jnp.dot(xin.reshape(T * B, d_in), wih,
                         preferred_element_type=jnp.float32) + bias
            gx_sc[...] = gx.reshape(T, B, 4 * Hp)

            # ---- Time recurrence: only the (B,Hp)@(Hp,4Hp) dot is serial.
            h_sc[...] = jnp.zeros_like(h_sc)
            c_sc[...] = jnp.zeros_like(c_sc)

            out_seq = seq_bufs[layer % 2]
            is_last = layer == num_layers - 1

            def step(t, carry, whh=whh, out_seq=out_seq, is_last=is_last):
                gates = gx_sc[t] + jnp.dot(
                    h_sc[...], whh, preferred_element_type=jnp.float32)
                # PyTorch gate order [i, f, g, o]; each slice is a whole
                # 128-lane-aligned block (Hp is a multiple of 128).
                i_g = jax.nn.sigmoid(gates[:, 0 * Hp:1 * Hp])
                f_g = jax.nn.sigmoid(gates[:, 1 * Hp:2 * Hp])
                g_g = jnp.tanh(gates[:, 2 * Hp:3 * Hp])
                o_g = jax.nn.sigmoid(gates[:, 3 * Hp:4 * Hp])

                c_new = f_g * c_sc[...] + i_g * g_g
                h_new = o_g * jnp.tanh(c_new)
                c_sc[...] = c_new
                h_sc[...] = h_new
                if not is_last:
                    out_seq[t] = h_new            # feed the next layer
                return carry

            jax.lax.fori_loop(0, T, step, 0, unroll=unroll)

        # ---- Final Linear(H, 1) fused in as a VPU reduction (no N=1 MXU pass).
        h_last = h_sc[...]                        # (B, Hp), padded lanes are 0
        out_ref[...] = (
            jnp.sum(h_last * fc_w_ref[...], axis=-1, keepdims=True)
            + fc_b_ref[...]
        )

    return kernel


# ----------------------------------------------------------------------------
# Weight layout helpers (lane-aligned gate blocks)
# ----------------------------------------------------------------------------
def _pad_gate_cols(w, H, Hp):
    """(rows, 4H) -> (rows, 4Hp): each gate block zero-padded to Hp lanes."""
    if Hp == H:
        return w
    rows = w.shape[0]
    w4 = w.reshape(rows, 4, H)
    w4 = jnp.pad(w4, ((0, 0), (0, 0), (0, Hp - H)))
    return w4.reshape(rows, 4 * Hp)


# ----------------------------------------------------------------------------
# Public wrapper: x is (B, T, input_size) batch-first, like the PyTorch module.
# ----------------------------------------------------------------------------
def lstm_model_forward(x, params, *, unroll=True):
    x = x.astype(jnp.float32)
    B, T, _ = x.shape
    num_layers = len(params["lstm"])
    H = params["lstm"][0][1].shape[1]             # w_hh: (4H, H)
    Hp = ((H + LANE - 1) // LANE) * LANE          # lane-aligned hidden size

    x_tbd = jnp.transpose(x, (1, 0, 2))           # time-major (T, B, D_in)

    args = [x_tbd]
    for layer, (w_ih, w_hh, b_ih, b_hh) in enumerate(params["lstm"]):
        wih_t = _pad_gate_cols(w_ih.T.astype(jnp.float32), H, Hp)      # (D_in, 4Hp)
        if layer > 0:
            wih_t = jnp.pad(wih_t, ((0, Hp - H), (0, 0)))              # (Hp, 4Hp)
        whh_t = jnp.pad(_pad_gate_cols(w_hh.T.astype(jnp.float32), H, Hp),
                        ((0, Hp - H), (0, 0)))                         # (Hp, 4Hp)
        bias = _pad_gate_cols((b_ih + b_hh).astype(jnp.float32).reshape(1, 4 * H),
                              H, Hp)                                   # (1, 4Hp)
        args += [wih_t, whh_t, bias]

    fc_w = jnp.pad(params["fc_w"].astype(jnp.float32).reshape(1, H),
                   ((0, 0), (0, Hp - H)))                              # (1, Hp)
    fc_b = params["fc_b"].astype(jnp.float32).reshape(1, 1)            # (1, 1)
    args += [fc_w, fc_b]

    kernel = _make_fused_kernel(num_layers, T, B, Hp, unroll)
    vmem = pl.BlockSpec(memory_space=pltpu.MemorySpace.VMEM)

    return pl.pallas_call(
        kernel,
        out_shape=jax.ShapeDtypeStruct((B, 1), jnp.float32),
        in_specs=[vmem] * len(args),
        out_specs=vmem,
        scratch_shapes=[
            pltpu.VMEM((T, B, Hp), jnp.float32),      # inter-layer seq (ping)
            pltpu.VMEM((T, B, Hp), jnp.float32),      # inter-layer seq (pong)
            pltpu.VMEM((T, B, 4 * Hp), jnp.float32),  # precomputed x-gates
            pltpu.VMEM((B, Hp), jnp.float32),         # h carry
            pltpu.VMEM((B, Hp), jnp.float32),         # c carry
        ],
    )(*args)


# ----------------------------------------------------------------------------
# Pure-JAX reference (PyTorch nn.LSTM semantics) for correctness checking
# ----------------------------------------------------------------------------
def lstm_model_reference(x, params):
    B = x.shape[0]
    seq = x.astype(jnp.float32)
    for (w_ih, w_hh, b_ih, b_hh) in params["lstm"]:
        H = w_hh.shape[1]
        h = jnp.zeros((B, H), jnp.float32)
        c = jnp.zeros((B, H), jnp.float32)
        outs = []
        for t in range(seq.shape[1]):
            gates = seq[:, t, :] @ w_ih.T + b_ih + h @ w_hh.T + b_hh
            i_g = jax.nn.sigmoid(gates[:, 0 * H:1 * H])
            f_g = jax.nn.sigmoid(gates[:, 1 * H:2 * H])
            g_g = jnp.tanh(gates[:, 2 * H:3 * H])
            o_g = jax.nn.sigmoid(gates[:, 3 * H:4 * H])
            c = f_g * c + i_g * g_g
            h = o_g * jnp.tanh(c)
            outs.append(h)
        seq = jnp.stack(outs, axis=1)
    return seq[:, -1, :] @ params["fc_w"].T + params["fc_b"]


# ----------------------------------------------------------------------------
# Deterministic parameter init (PyTorch-style uniform(-1/sqrt(H), 1/sqrt(H)))
# ----------------------------------------------------------------------------
def init_params(key, input_size, hidden_size, num_layers):
    bound = 1.0 / np.sqrt(hidden_size)
    lstm_params = []
    for layer in range(num_layers):
        d_in = input_size if layer == 0 else hidden_size
        key, k1, k2, k3, k4 = jax.random.split(key, 5)
        w_ih = jax.random.uniform(k1, (4 * hidden_size, d_in), jnp.float32, -bound, bound)
        w_hh = jax.random.uniform(k2, (4 * hidden_size, hidden_size), jnp.float32, -bound, bound)
        b_ih = jax.random.uniform(k3, (4 * hidden_size,), jnp.float32, -bound, bound)
        b_hh = jax.random.uniform(k4, (4 * hidden_size,), jnp.float32, -bound, bound)
        lstm_params.append((w_ih, w_hh, b_ih, b_hh))
    key, k5, k6 = jax.random.split(key, 3)
    fc_w = jax.random.uniform(k5, (1, hidden_size), jnp.float32, -bound, bound)
    fc_b = jax.random.uniform(k6, (1,), jnp.float32, -bound, bound)
    return {"lstm": lstm_params, "fc_w": fc_w, "fc_b": fc_b}


# ----------------------------------------------------------------------------
if __name__ == "__main__":
    batch, seq_len, input_size, hidden_size, num_layers = 2, 8, 4, 32, 2

    key = jax.random.PRNGKey(0)
    key, xk = jax.random.split(key)
    x = jax.random.normal(xk, (batch, seq_len, input_size), jnp.float32)

    params = init_params(key, input_size, hidden_size, num_layers)

    out = jax.block_until_ready(lstm_model_forward(x, params))
    ref = jax.block_until_ready(lstm_model_reference(x, params))

    np.testing.assert_allclose(np.asarray(out), np.asarray(ref), rtol=1e-5, atol=1e-5)
    assert out.shape == (batch, 1)
    print("KERNEL_OK")
</pallas_src>

<mosaic_0001>
module attributes {stable_mosaic.version = 11 : i64} {
  func.func @kernel(%arg0: memref<8x2x4xf32, #tpu.memory_space<vmem>>, %arg1: memref<4x512xf32, #tpu.memory_space<vmem>>, %arg2: memref<128x512xf32, #tpu.memory_space<vmem>>, %arg3: memref<1x512xf32, #tpu.memory_space<vmem>>, %arg4: memref<128x512xf32, #tpu.memory_space<vmem>>, %arg5: memref<128x512xf32, #tpu.memory_space<vmem>>, %arg6: memref<1x512xf32, #tpu.memory_space<vmem>>, %arg7: memref<1x128xf32, #tpu.memory_space<vmem>>, %arg8: memref<1x1xf32, #tpu.memory_space<vmem>>, %arg9: memref<2x1xf32, #tpu.memory_space<vmem>>, %arg10: memref<8x2x128xf32, #tpu.memory_space<vmem>>, %arg11: memref<8x2x128xf32, #tpu.memory_space<vmem>>, %arg12: memref<8x2x512xf32, #tpu.memory_space<vmem>>, %arg13: memref<2x128xf32, #tpu.memory_space<vmem>>, %arg14: memref<2x128xf32, #tpu.memory_space<vmem>>) attributes {dimension_semantics = [], scalar_prefetch = 0 : i64, scratch_operands = 5 : i64, tpu.core_type = #tpu.core_type<tc>} {
    %c0 = arith.constant 0 : index
    %c0_0 = arith.constant 0 : index
    %0 = vector.load %arg1[%c0, %c0_0] : memref<4x512xf32, #tpu.memory_space<vmem>>, vector<4x512xf32>
    %c0_1 = arith.constant 0 : index
    %c0_2 = arith.constant 0 : index
    %1 = vector.load %arg2[%c0_1, %c0_2] : memref<128x512xf32, #tpu.memory_space<vmem>>, vector<128x512xf32>
    %c0_3 = arith.constant 0 : index
    %c0_4 = arith.constant 0 : index
    %2 = vector.load %arg3[%c0_3, %c0_4] : memref<1x512xf32, #tpu.memory_space<vmem>>, vector<1x512xf32>
    %c0_5 = arith.constant 0 : index
    %c0_6 = arith.constant 0 : index
    %c0_7 = arith.constant 0 : index
    %3 = vector.load %arg0[%c0_5, %c0_6, %c0_7] : memref<8x2x4xf32, #tpu.memory_space<vmem>>, vector<8x2x4xf32>
    %4 = vector.shape_cast %3 : vector<8x2x4xf32> to vector<16x4xf32>
    %cst = arith.constant dense<0.000000e+00> : vector<16x512xf32>
    %5 = tpu.matmul %4, %0, %cst {dimension_numbers = #tpu.dot_dimension_numbers<[1], [0], [0], [1], [0, 0, 1, 1], [], []>} : vector<16x4xf32>, vector<4x512xf32>, vector<16x512xf32> -> vector<16x512xf32>
    %6 = vector.broadcast %2 : vector<1x512xf32> to vector<16x512xf32>
    %7 = arith.addf %5, %6 : vector<16x512xf32>
    %8 = vector.shape_cast %7 : vector<16x512xf32> to vector<8x2x512xf32>
    %c0_8 = arith.constant 0 : index
    %c0_9 = arith.constant 0 : index
    %c0_10 = arith.constant 0 : index
    %9 = vector.load %arg12[%c0_8, %c0_9, %c0_10] : memref<8x2x512xf32, #tpu.memory_space<vmem>>, vector<8x2x512xf32>
    tpu.vector_store %arg12[%c0_8, %c0_9, %c0_10], %8 {strides = array<i32>} : memref<8x2x512xf32, #tpu.memory_space<vmem>>, vector<8x2x512xf32>,
    %cst_11 = arith.constant 0.000000e+00 : f32
    %10 = vector.broadcast %cst_11 : f32 to vector<2x128xf32>
    %c0_12 = arith.constant 0 : index
    %c0_13 = arith.constant 0 : index
    %11 = vector.load %arg13[%c0_12, %c0_13] : memref<2x128xf32, #tpu.memory_space<vmem>>, vector<2x128xf32>
    tpu.vector_store %arg13[%c0_12, %c0_13], %10 {strides = array<i32>} : memref<2x128xf32, #tpu.memory_space<vmem>>, vector<2x128xf32>,
    %cst_14 = arith.constant 0.000000e+00 : f32
    %12 = vector.broadcast %cst_14 : f32 to vector<2x128xf32>
    %c0_15 = arith.constant 0 : index
    %c0_16 = arith.constant 0 : index
    %13 = vector.load %arg14[%c0_15, %c0_16] : memref<2x128xf32, #tpu.memory_space<vmem>>, vector<2x128xf32>
    tpu.vector_store %arg14[%c0_15, %c0_16], %12 {strides = array<i32>} : memref<2x128xf32, #tpu.memory_space<vmem>>, vector<2x128xf32>,
    %c0_i32 = arith.constant 0 : i32
    %14 = arith.index_cast %c0_i32 : i32 to index
    %c0_17 = arith.constant 0 : index
    %c0_18 = arith.constant 0 : index
    %15 = vector.load %arg12[%14, %c0_17, %c0_18] : memref<8x2x512xf32, #tpu.memory_space<vmem>>, vector<1x2x512xf32>
    %16 = vector.shape_cast %15 : vector<1x2x512xf32> to vector<2x512xf32>
    %c0_19 = arith.constant 0 : index
    %c0_20 = arith.constant 0 : index
    %17 = vector.load %arg13[%c0_19, %c0_20] : memref<2x128xf32, #tpu.memory_space<vmem>>, vector<2x128xf32>
    %cst_21 = arith.constant dense<0.000000e+00> : vector<2x512xf32>
    %18 = tpu.matmul %17, %1, %cst_21 {dimension_numbers = #tpu.dot_dimension_numbers<[1], [0], [0], [1], [0, 0, 1, 1], [], []>} : vector<2x128xf32>, vector<128x512xf32>, vector<2x512xf32> -> vector<2x512xf32>
    %19 = arith.addf %16, %18 : vector<2x512xf32>
    %20 = vector.extract_strided_slice %19 {offsets = [0, 0], sizes = [2, 128], strides = [1, 1]} : vector<2x512xf32> to vector<2x128xf32>
    %21 = arith.negf %20 : vector<2x128xf32>
    %22 = math.exp %21 : vector<2x128xf32>
    %cst_22 = arith.constant 1.000000e+00 : f32
    %23 = vector.broadcast %cst_22 : f32 to vector<2x128xf32>
    %24 = arith.addf %23, %22 : vector<2x128xf32>
    %25 = arith.divf %23, %24 : vector<2x128xf32>
    %26 = vector.extract_strided_slice %19 {offsets = [0, 128], sizes = [2, 128], strides = [1, 1]} : vector<2x512xf32> to vector<2x128xf32>
    %27 = arith.negf %26 : vector<2x128xf32>
    %28 = math.exp %27 : vector<2x128xf32>
    %cst_23 = arith.constant 1.000000e+00 : f32
    %29 = vector.broadcast %cst_23 : f32 to vector<2x128xf32>
    %30 = arith.addf %29, %28 : vector<2x128xf32>
    %31 = arith.divf %29, %30 : vector<2x128xf32>
    %32 = vector.extract_strided_slice %19 {offsets = [0, 256], sizes = [2, 128], strides = [1, 1]} : vector<2x512xf32> to vector<2x128xf32>
    %33 = math.tanh %32 : vector<2x128xf32>
    %34 = vector.extract_strided_slice %19 {offsets = [0, 384], sizes = [2, 128], strides = [1, 1]} : vector<2x512xf32> to vector<2x128xf32>
    %35 = arith.negf %34 : vector<2x128xf32>
    %36 = math.exp %35 : vector<2x128xf32>
    %cst_24 = arith.constant 1.000000e+00 : f32
    %37 = vector.broadcast %cst_24 : f32 to vector<2x128xf32>
    %38 = arith.addf %37, %36 : vector<2x128xf32>
    %39 = arith.divf %37, %38 : vector<2x128xf32>
    %c0_25 = arith.constant 0 : index
    %c0_26 = arith.constant 0 : index
    %40 = vector.load %arg14[%c0_25, %c0_26] : memref<2x128xf32, #tpu.memory_space<vmem>>, vector<2x128xf32>
    %41 = arith.mulf %31, %40 : vector<2x128xf32>
    %42 = arith.mulf %25, %33 : vector<2x128xf32>
    %43 = arith.addf %41, %42 : vector<2x128xf32>
    %44 = math.tanh %43 : vector<2x128xf32>
    %45 = arith.mulf %39, %44 : vector<2x128xf32>
    %c0_27 = arith.constant 0 : index
    %c0_28 = arith.constant 0 : index
    %46 = vector.load %arg14[%c0_27, %c0_28] : memref<2x128xf32, #tpu.memory_space<vmem>>, vector<2x128xf32>
    tpu.vector_store %arg14[%c0_27, %c0_28], %43 {strides = array<i32>} : memref<2x128xf32, #tpu.memory_space<vmem>>, vector<2x128xf32>,
    %c0_29 = arith.constant 0 : index
    %c0_30 = arith.constant 0 : index
    %47 = vector.load %arg13[%c0_29, %c0_30] : memref<2x128xf32, #tpu.memory_space<vmem>>, vector<2x128xf32>
    tpu.vector_store %arg13[%c0_29, %c0_30], %45 {strides = array<i32>} : memref<2x128xf32, #tpu.memory_space<vmem>>, vector<2x128xf32>,
    %48 = arith.index_cast %c0_i32 : i32 to index
    %c0_31 = arith.constant 0 : index
    %c0_32 = arith.constant 0 : index
    %49 = vector.load %arg10[%48, %c0_31, %c0_32] : memref<8x2x128xf32, #tpu.memory_space<vmem>>, vector<1x2x128xf32>
    %50 = vector.shape_cast %49 : vector<1x2x128xf32> to vector<2x128xf32>
    %51 = vector.shape_cast %45 : vector<2x128xf32> to vector<1x2x128xf32>
    tpu.vector_store %arg10[%48, %c0_31, %c0_32], %51 {strides = array<i32>} : memref<8x2x128xf32, #tpu.memory_space<vmem>>, vector<1x2x128xf32>,
    %c1_i32 = arith.constant 1 : i32
    %52 = arith.index_cast %c1_i32 : i32 to index
    %c0_33 = arith.constant 0 : index
    %c0_34 = arith.constant 0 : index
    %53 = vector.load %arg12[%52, %c0_33, %c0_34] : memref<8x2x512xf32, #tpu.memory_space<vmem>>, vector<1x2x512xf32>
    %54 = vector.shape_cast %53 : vector<1x2x512xf32> to vector<2x512xf32>
    %c0_35 = arith.constant 0 : index
    %c0_36 = arith.constant 0 : index
    %55 = vector.load %arg13[%c0_35, %c0_36] : memref<2x128xf32, #tpu.memory_space<vmem>>, vector<2x128xf32>
    %cst_37 = arith.constant dense<0.000000e+00> : vector<2x512xf32>
    %56 = tpu.matmul %55, %1, %cst_37 {dimension_numbers = #tpu.dot_dimension_numbers<[1], [0], [0], [1], [0, 0, 1, 1], [], []>} : vector<2x128xf32>, vector<128x512xf32>, vector<2x512xf32> -> vector<2x512xf32>
    %57 = arith.addf %54, %56 : vector<2x512xf32>
    %58 = vector.extract_strided_slice %57 {offsets = [0, 0], sizes = [2, 128], strides = [1, 1]} : vector<2x512xf32> to vector<2x128xf32>
    %59 = arith.negf %58 : vector<2x128xf32>
    %60 = math.exp %59 : vector<2x128xf32>
    %cst_38 = arith.constant 1.000000e+00 : f32
    %61 = vector.broadcast %cst_38 : f32 to vector<2x128xf32>
    %62 = arith.addf %61, %60 : vector<2x128xf32>
    %63 = arith.divf %61, %62 : vector<2x128xf32>
    %64 = vector.extract_strided_slice %57 {offsets = [0, 128], sizes = [2, 128], strides = [1, 1]} : vector<2x512xf32> to vector<2x128xf32>
    %65 = arith.negf %64 : vector<2x128xf32>
    %66 = math.exp %65 : vector<2x128xf32>
    %cst_39 = arith.constant 1.000000e+00 : f32
    %67 = vector.broadcast %cst_39 : f32 to vector<2x128xf32>
    %68 = arith.addf %67, %66 : vector<2x128xf32>
    %69 = arith.divf %67, %68 : vector<2x128xf32>
    %70 = vector.extract_strided_slice %57 {offsets = [0, 256], sizes = [2, 128], strides = [1, 1]} : vector<2x512xf32> to vector<2x128xf32>
    %71 = math.tanh %70 : vector<2x128xf32>
    %72 = vector.extract_strided_slice %57 {offsets = [0, 384], sizes = [2, 128], strides = [1, 1]} : vector<2x512xf32> to vector<2x128xf32>
    %73 = arith.negf %72 : vector<2x128xf32>
    %74 = math.exp %73 : vector<2x128xf32>
    %cst_40 = arith.constant 1.000000e+00 : f32
    %75 = vector.broadcast %cst_40 : f32 to vector<2x128xf32>
    %76 = arith.addf %75, %74 : vector<2x128xf32>
    %77 = arith.divf %75, %76 : vector<2x128xf32>
    %c0_41 = arith.constant 0 : index
    %c0_42 = arith.constant 0 : index
    %78 = vector.load %arg14[%c0_41, %c0_42] : memref<2x128xf32, #tpu.memory_space<vmem>>, vector<2x128xf32>
    %79 = arith.mulf %69, %78 : vector<2x128xf32>
    %80 = arith.mulf %63, %71 : vector<2x128xf32>
    %81 = arith.addf %79, %80 : vector<2x128xf32>
    %82 = math.tanh %81 : vector<2x128xf32>
    %83 = arith.mulf %77, %82 : vector<2x128xf32>
    %c0_43 = arith.constant 0 : index
    %c0_44 = arith.constant 0 : index
    %84 = vector.load %arg14[%c0_43, %c0_44] : memref<2x128xf32, #tpu.memory_space<vmem>>, vector<2x128xf32>
    tpu.vector_store %arg14[%c0_43, %c0_44], %81 {strides = array<i32>} : memref<2x128xf32, #tpu.memory_space<vmem>>, vector<2x128xf32>,
    %c0_45 = arith.constant 0 : index
    %c0_46 = arith.constant 0 : index
    %85 = vector.load %arg13[%c0_45, %c0_46] : memref<2x128xf32, #tpu.memory_space<vmem>>, vector<2x128xf32>
    tpu.vector_store %arg13[%c0_45, %c0_46], %83 {strides = array<i32>} : memref<2x128xf32, #tpu.memory_space<vmem>>, vector<2x128xf32>,
    %86 = arith.index_cast %c1_i32 : i32 to index
    %c0_47 = arith.constant 0 : index
    %c0_48 = arith.constant 0 : index
    %87 = vector.load %arg10[%86, %c0_47, %c0_48] : memref<8x2x128xf32, #tpu.memory_space<vmem>>, vector<1x2x128xf32>
    %88 = vector.shape_cast %87 : vector<1x2x128xf32> to vector<2x128xf32>
    %89 = vector.shape_cast %83 : vector<2x128xf32> to vector<1x2x128xf32>
    tpu.vector_store %arg10[%86, %c0_47, %c0_48], %89 {strides = array<i32>} : memref<8x2x128xf32, #tpu.memory_space<vmem>>, vector<1x2x128xf32>,
    %c2_i32 = arith.constant 2 : i32
    %90 = arith.index_cast %c2_i32 : i32 to index
    %c0_49 = arith.constant 0 : index
    %c0_50 = arith.constant 0 : index
    %91 = vector.load %arg12[%90, %c0_49, %c0_50] : memref<8x2x512xf32, #tpu.memory_space<vmem>>, vector<1x2x512xf32>
    %92 = vector.shape_cast %91 : vector<1x2x512xf32> to vector<2x512xf32>
    %c0_51 = arith.constant 0 : index
    %c0_52 = arith.constant 0 : index
    %93 = vector.load %arg13[%c0_51, %c0_52] : memref<2x128xf32, #tpu.memory_space<vmem>>, vector<2x128xf32>
    %cst_53 = arith.constant dense<0.000000e+00> : vector<2x512xf32>
    %94 = tpu.matmul %93, %1, %cst_53 {dimension_numbers = #tpu.dot_dimension_numbers<[1], [0], [0], [1], [0, 0, 1, 1], [], []>} : vector<2x128xf32>, vector<128x512xf32>, vector<2x512xf32> -> vector<2x512xf32>
    %95 = arith.addf %92, %94 : vector<2x512xf32>
    %96 = vector.extract_strided_slice %95 {offsets = [0, 0], sizes = [2, 128], strides = [1, 1]} : vector<2x512xf32> to vector<2x128xf32>
    %97 = arith.negf %96 : vector<2x128xf32>
    %98 = math.exp %97 : vector<2x128xf32>
    %cst_54 = arith.constant 1.000000e+00 : f32
    %99 = vector.broadcast %cst_54 : f32 to vector<2x128xf32>
    %100 = arith.addf %99, %98 : vector<2x128xf32>
    %101 = arith.divf %99, %100 : vector<2x128xf32>
    %102 = vector.extract_strided_slice %95 {offsets = [0, 128], sizes = [2, 128], strides = [1, 1]} : vector<2x512xf32> to vector<2x128xf32>
    %103 = arith.negf %102 : vector<2x128xf32>
    %104 = math.exp %103 : vector<2x128xf32>
    %cst_55 = arith.constant 1.000000e+00 : f32
    %105 = vector.broadcast %cst_55 : f32 to vector<2x128xf32>
    %106 = arith.addf %105, %104 : vector<2x128xf32>
    %107 = arith.divf %105, %106 : vector<2x128xf32>
    %108 = vector.extract_strided_slice %95 {offsets = [0, 256], sizes = [2, 128], strides = [1, 1]} : vector<2x512xf32> to vector<2x128xf32>
    %109 = math.tanh %108 : vector<2x128xf32>
    %110 = vector.extract_strided_slice %95 {offsets = [0, 384], sizes = [2, 128], strides = [1, 1]} : vector<2x512xf32> to vector<2x128xf32>
    %111 = arith.negf %110 : vector<2x128xf32>
    %112 = math.exp %111 : vector<2x128xf32>
    %cst_56 = arith.constant 1.000000e+00 : f32
    %113 = vector.broadcast %cst_56 : f32 to vector<2x128xf32>
    %114 = arith.addf %113, %112 : vector<2x128xf32>
    %115 = arith.divf %113, %114 : vector<2x128xf32>
    %c0_57 = arith.constant 0 : index
    %c0_58 = arith.constant 0 : index
    %116 = vector.load %arg14[%c0_57, %c0_58] : memref<2x128xf32, #tpu.memory_space<vmem>>, vector<2x128xf32>
    %117 = arith.mulf %107, %116 : vector<2x128xf32>
    %118 = arith.mulf %101, %109 : vector<2x128xf32>
    %119 = arith.addf %117, %118 : vector<2x128xf32>
    %120 = math.tanh %119 : vector<2x128xf32>
    %121 = arith.mulf %115, %120 : vector<2x128xf32>
    %c0_59 = arith.constant 0 : index
    %c0_60 = arith.constant 0 : index
    %122 = vector.load %arg14[%c0_59, %c0_60] : memref<2x128xf32, #tpu.memory_space<vmem>>, vector<2x128xf32>
    tpu.vector_store %arg14[%c0_59, %c0_60], %119 {strides = array<i32>} : memref<2x128xf32, #tpu.memory_space<vmem>>, vector<2x128xf32>,
    %c0_61 = arith.constant 0 : index
    %c0_62 = arith.constant 0 : index
    %123 = vector.load %arg13[%c0_61, %c0_62] : memref<2x128xf32, #tpu.memory_space<vmem>>, vector<2x128xf32>
    tpu.vector_store %arg13[%c0_61, %c0_62], %121 {strides = array<i32>} : memref<2x128xf32, #tpu.memory_space<vmem>>, vector<2x128xf32>,
    %124 = arith.index_cast %c2_i32 : i32 to index
    %c0_63 = arith.constant 0 : index
    %c0_64 = arith.constant 0 : index
    %125 = vector.load %arg10[%124, %c0_63, %c0_64] : memref<8x2x128xf32, #tpu.memory_space<vmem>>, vector<1x2x128xf32>
    %126 = vector.shape_cast %125 : vector<1x2x128xf32> to vector<2x128xf32>
    %127 = vector.shape_cast %121 : vector<2x128xf32> to vector<1x2x128xf32>
    tpu.vector_store %arg10[%124, %c0_63, %c0_64], %127 {strides = array<i32>} : memref<8x2x128xf32, #tpu.memory_space<vmem>>, vector<1x2x128xf32>,
    %c3_i32 = arith.constant 3 : i32
    %128 = arith.index_cast %c3_i32 : i32 to index
    %c0_65 = arith.constant 0 : index
    %c0_66 = arith.constant 0 : index
    %129 = vector.load %arg12[%128, %c0_65, %c0_66] : memref<8x2x512xf32, #tpu.memory_space<vmem>>, vector<1x2x512xf32>
    %130 = vector.shape_cast %129 : vector<1x2x512xf32> to vector<2x512xf32>
    %c0_67 = arith.constant 0 : index
    %c0_68 = arith.constant 0 : index
    %131 = vector.load %arg13[%c0_67, %c0_68] : memref<2x128xf32, #tpu.memory_space<vmem>>, vector<2x128xf32>
    %cst_69 = arith.constant dense<0.000000e+00> : vector<2x512xf32>
    %132 = tpu.matmul %131, %1, %cst_69 {dimension_numbers = #tpu.dot_dimension_numbers<[1], [0], [0], [1], [0, 0, 1, 1], [], []>} : vector<2x128xf32>, vector<128x512xf32>, vector<2x512xf32> -> vector<2x512xf32>
    %133 = arith.addf %130, %132 : vector<2x512xf32>
    %134 = vector.extract_strided_slice %133 {offsets = [0, 0], sizes = [2, 128], strides = [1, 1]} : vector<2x512xf32> to vector<2x128xf32>
    %135 = arith.negf %134 : vector<2x128xf32>
    %136 = math.exp %135 : vector<2x128xf32>
    %cst_70 = arith.constant 1.000000e+00 : f32
    %137 = vector.broadcast %cst_70 : f32 to vector<2x128xf32>
    %138 = arith.addf %137, %136 : vector<2x128xf32>
    %139 = arith.divf %137, %138 : vector<2x128xf32>
    %140 = vector.extract_strided_slice %133 {offsets = [0, 128], sizes = [2, 128], strides = [1, 1]} : vector<2x512xf32> to vector<2x128xf32>
    %141 = arith.negf %140 : vector<2x128xf32>
    %142 = math.exp %141 : vector<2x128xf32>
    %cst_71 = arith.constant 1.000000e+00 : f32
    %143 = vector.broadcast %cst_71 : f32 to vector<2x128xf32>
    %144 = arith.addf %143, %142 : vector<2x128xf32>
    %145 = arith.divf %143, %144 : vector<2x128xf32>
    %146 = vector.extract_strided_slice %133 {offsets = [0, 256], sizes = [2, 128], strides = [1, 1]} : vector<2x512xf32> to vector<2x128xf32>
    %147 = math.tanh %146 : vector<2x128xf32>
    %148 = vector.extract_strided_slice %133 {offsets = [0, 384], sizes = [2, 128], strides = [1, 1]} : vector<2x512xf32> to vector<2x128xf32>
    %149 = arith.negf %148 : vector<2x128xf32>
    %150 = math.exp %149 : vector<2x128xf32>
    %cst_72 = arith.constant 1.000000e+00 : f32
    %151 = vector.broadcast %cst_72 : f32 to vector<2x128xf32>
    %152 = arith.addf %151, %150 : vector<2x128xf32>
    %153 = arith.divf %151, %152 : vector<2x128xf32>
    %c0_73 = arith.constant 0 : index
    %c0_74 = arith.constant 0 : index
    %154 = vector.load %arg14[%c0_73, %c0_74] : memref<2x128xf32, #tpu.memory_space<vmem>>, vector<2x128xf32>
    %155 = arith.mulf %145, %154 : vector<2x128xf32>
    %156 = arith.mulf %139, %147 : vector<2x128xf32>
    %157 = arith.addf %155, %156 : vector<2x128xf32>
    %158 = math.tanh %157 : vector<2x128xf32>
    %159 = arith.mulf %153, %158 : vector<2x128xf32>
    %c0_75 = arith.constant 0 : index
    %c0_76 = arith.constant 0 : index
    %160 = vector.load %arg14[%c0_75, %c0_76] : memref<2x128xf32, #tpu.memory_space<vmem>>, vector<2x128xf32>
    tpu.vector_store %arg14[%c0_75, %c0_76], %157 {strides = array<i32>} : memref<2x128xf32, #tpu.memory_space<vmem>>, vector<2x128xf32>,
    %c0_77 = arith.constant 0 : index
    %c0_78 = arith.constant 0 : index
    %161 = vector.load %arg13[%c0_77, %c0_78] : memref<2x128xf32, #tpu.memory_space<vmem>>, vector<2x128xf32>
    tpu.vector_store %arg13[%c0_77, %c0_78], %159 {strides = array<i32>} : memref<2x128xf32, #tpu.memory_space<vmem>>, vector<2x128xf32>,
    %162 = arith.index_cast %c3_i32 : i32 to index
    %c0_79 = arith.constant 0 : index
    %c0_80 = arith.constant 0 : index
    %163 = vector.load %arg10[%162, %c0_79, %c0_80] : memref<8x2x128xf32, #tpu.memory_space<vmem>>, vector<1x2x128xf32>
    %164 = vector.shape_cast %163 : vector<1x2x128xf32> to vector<2x128xf32>
    %165 = vector.shape_cast %159 : vector<2x128xf32> to vector<1x2x128xf32>
    tpu.vector_store %arg10[%162, %c0_79, %c0_80], %165 {strides = array<i32>} : memref<8x2x128xf32, #tpu.memory_space<vmem>>, vector<1x2x128xf32>,
    %c4_i32 = arith.constant 4 : i32
    %166 = arith.index_cast %c4_i32 : i32 to index
    %c0_81 = arith.constant 0 : index
    %c0_82 = arith.constant 0 : index
    %167 = vector.load %arg12[%166, %c0_81, %c0_82] : memref<8x2x512xf32, #tpu.memory_space<vmem>>, vector<1x2x512xf32>
    %168 = vector.shape_cast %167 : vector<1x2x512xf32> to vector<2x512xf32>
    %c0_83 = arith.constant 0 : index
    %c0_84 = arith.constant 0 : index
    %169 = vector.load %arg13[%c0_83, %c0_84] : memref<2x128xf32, #tpu.memory_space<vmem>>, vector<2x128xf32>
    %cst_85 = arith.constant dense<0.000000e+00> : vector<2x512xf32>
    %170 = tpu.matmul %169, %1, %cst_85 {dimension_numbers = #tpu.dot_dimension_numbers<[1], [0], [0], [1], [0, 0, 1, 1], [], []>} : vector<2x128xf32>, vector<128x512xf32>, vector<2x512xf32> -> vector<2x512xf32>
    %171 = arith.addf %168, %170 : vector<2x512xf32>
    %172 = vector.extract_strided_slice %171 {offsets = [0, 0], sizes = [2, 128], strides = [1, 1]} : vector<2x512xf32> to vector<2x128xf32>
    %173 = arith.negf %172 : vector<2x128xf32>
    %174 = math.exp %173 : vector<2x128xf32>
    %cst_86 = arith.constant 1.000000e+00 : f32
    %175 = vector.broadcast %cst_86 : f32 to vector<2x128xf32>
    %176 = arith.addf %175, %174 : vector<2x128xf32>
    %177 = arith.divf %175, %176 : vector<2x128xf32>
    %178 = vector.extract_strided_slice %171 {offsets = [0, 128], sizes = [2, 128], strides = [1, 1]} : vector<2x512xf32> to vector<2x128xf32>
    %179 = arith.negf %178 : vector<2x128xf32>
    %180 = math.exp %179 : vector<2x128xf32>
    %cst_87 = arith.constant 1.000000e+00 : f32
    %181 = vector.broadcast %cst_87 : f32 to vector<2x128xf32>
    %182 = arith.addf %181, %180 : vector<2x128xf32>
    %183 = arith.divf %181, %182 : vector<2x128xf32>
    %184 = vector.extract_strided_slice %171 {offsets = [0, 256], sizes = [2, 128], strides = [1, 1]} : vector<2x512xf32> to vector<2x128xf32>
    %185 = math.tanh %184 : vector<2x128xf32>
    %186 = vector.extract_strided_slice %171 {offsets = [0, 384], sizes = [2, 128], strides = [1, 1]} : vector<2x512xf32> to vector<2x128xf32>
    %187 = arith.negf %186 : vector<2x128xf32>
    %188 = math.exp %187 : vector<2x128xf32>
    %cst_88 = arith.constant 1.000000e+00 : f32
    %189 = vector.broadcast %cst_88 : f32 to vector<2x128xf32>
    %190 = arith.addf %189, %188 : vector<2x128xf32>
    %191 = arith.divf %189, %190 : vector<2x128xf32>
    %c0_89 = arith.constant 0 : index
    %c0_90 = arith.constant 0 : index
    %192 = vector.load %arg14[%c0_89, %c0_90] : memref<2x128xf32, #tpu.memory_space<vmem>>, vector<2x128xf32>
    %193 = arith.mulf %183, %192 : vector<2x128xf32>
    %194 = arith.mulf %177, %185 : vector<2x128xf32>
    %195 = arith.addf %193, %194 : vector<2x128xf32>
    %196 = math.tanh %195 : vector<2x128xf32>
    %197 = arith.mulf %191, %196 : vector<2x128xf32>
    %c0_91 = arith.constant 0 : index
    %c0_92 = arith.constant 0 : index
    %198 = vector.load %arg14[%c0_91, %c0_92] : memref<2x128xf32, #tpu.memory_space<vmem>>, vector<2x128xf32>
    tpu.vector_store %arg14[%c0_91, %c0_92], %195 {strides = array<i32>} : memref<2x128xf32, #tpu.memory_space<vmem>>, vector<2x128xf32>,
    %c0_93 = arith.constant 0 : index
    %c0_94 = arith.constant 0 : index
    %199 = vector.load %arg13[%c0_93, %c0_94] : memref<2x128xf32, #tpu.memory_space<vmem>>, vector<2x128xf32>
    tpu.vector_store %arg13[%c0_93, %c0_94], %197 {strides = array<i32>} : memref<2x128xf32, #tpu.memory_space<vmem>>, vector<2x128xf32>,
    %200 = arith.index_cast %c4_i32 : i32 to index
    %c0_95 = arith.constant 0 : index
    %c0_96 = arith.constant 0 : index
    %201 = vector.load %arg10[%200, %c0_95, %c0_96] : memref<8x2x128xf32, #tpu.memory_space<vmem>>, vector<1x2x128xf32>
    %202 = vector.shape_cast %201 : vector<1x2x128xf32> to vector<2x128xf32>
    %203 = vector.shape_cast %197 : vector<2x128xf32> to vector<1x2x128xf32>
    tpu.vector_store %arg10[%200, %c0_95, %c0_96], %203 {strides = array<i32>} : memref<8x2x128xf32, #tpu.memory_space<vmem>>, vector<1x2x128xf32>,
    %c5_i32 = arith.constant 5 : i32
    %204 = arith.index_cast %c5_i32 : i32 to index
    %c0_97 = arith.constant 0 : index
    %c0_98 = arith.constant 0 : index
    %205 = vector.load %arg12[%204, %c0_97, %c0_98] : memref<8x2x512xf32, #tpu.memory_space<vmem>>, vector<1x2x512xf32>
    %206 = vector.shape_cast %205 : vector<1x2x512xf32> to vector<2x512xf32>
    %c0_99 = arith.constant 0 : index
    %c0_100 = arith.constant 0 : index
    %207 = vector.load %arg13[%c0_99, %c0_100] : memref<2x128xf32, #tpu.memory_space<vmem>>, vector<2x128xf32>
    %cst_101 = arith.constant dense<0.000000e+00> : vector<2x512xf32>
    %208 = tpu.matmul %207, %1, %cst_101 {dimension_numbers = #tpu.dot_dimension_numbers<[1], [0], [0], [1], [0, 0, 1, 1], [], []>} : vector<2x128xf32>, vector<128x512xf32>, vector<2x512xf32> -> vector<2x512xf32>
    %209 = arith.addf %206, %208 : vector<2x512xf32>
    %210 = vector.extract_strided_slice %209 {offsets = [0, 0], sizes = [2, 128], strides = [1, 1]} : vector<2x512xf32> to vector<2x128xf32>
    %211 = arith.negf %210 : vector<2x128xf32>
    %212 = math.exp %211 : vector<2x128xf32>
    %cst_102 = arith.constant 1.000000e+00 : f32
    %213 = vector.broadcast %cst_102 : f32 to vector<2x128xf32>
    %214 = arith.addf %213, %212 : vector<2x128xf32>
    %215 = arith.divf %213, %214 : vector<2x128xf32>
    %216 = vector.extract_strided_slice %209 {offsets = [0, 128], sizes = [2, 128], strides = [1, 1]} : vector<2x512xf32> to vector<2x128xf32>
    %217 = arith.negf %216 : vector<2x128xf32>
    %218 = math.exp %217 : vector<2x128xf32>
    %cst_103 = arith.constant 1.000000e+00 : f32
    %219 = vector.broadcast %cst_103 : f32 to vector<2x128xf32>
    %220 = arith.addf %219, %218 : vector<2x128xf32>
    %221 = arith.divf %219, %220 : vector<2x128xf32>
    %222 = vector.extract_strided_slice %209 {offsets = [0, 256], sizes = [2, 128], strides = [1, 1]} : vector<2x512xf32> to vector<2x128xf32>
    %223 = math.tanh %222 : vector<2x128xf32>
    %224 = vector.extract_strided_slice %209 {offsets = [0, 384], sizes = [2, 128], strides = [1, 1]} : vector<2x512xf32> to vector<2x128xf32>
    %225 = arith.negf %224 : vector<2x128xf32>
    %226 = math.exp %225 : vector<2x128xf32>
    %cst_104 = arith.constant 1.000000e+00 : f32
    %227 = vector.broadcast %cst_104 : f32 to vector<2x128xf32>
    %228 = arith.addf %227, %226 : vector<2x128xf32>
    %229 = arith.divf %227, %228 : vector<2x128xf32>
    %c0_105 = arith.constant 0 : index
    %c0_106 = arith.constant 0 : index
    %230 = vector.load %arg14[%c0_105, %c0_106] : memref<2x128xf32, #tpu.memory_space<vmem>>, vector<2x128xf32>
    %231 = arith.mulf %221, %230 : vector<2x128xf32>
    %232 = arith.mulf %215, %223 : vector<2x128xf32>
    %233 = arith.addf %231, %232 : vector<2x128xf32>
    %234 = math.tanh %233 : vector<2x128xf32>
    %235 = arith.mulf %229, %234 : vector<2x128xf32>
    %c0_107 = arith.constant 0 : index
    %c0_108 = arith.constant 0 : index
    %236 = vector.load %arg14[%c0_107, %c0_108] : memref<2x128xf32, #tpu.memory_space<vmem>>, vector<2x128xf32>
    tpu.vector_store %arg14[%c0_107, %c0_108], %233 {strides = array<i32>} : memref<2x128xf32, #tpu.memory_space<vmem>>, vector<2x128xf32>,
    %c0_109 = arith.constant 0 : index
    %c0_110 = arith.constant 0 : index
    %237 = vector.load %arg13[%c0_109, %c0_110] : memref<2x128xf32, #tpu.memory_space<vmem>>, vector<2x128xf32>
    tpu.vector_store %arg13[%c0_109, %c0_110], %235 {strides = array<i32>} : memref<2x128xf32, #tpu.memory_space<vmem>>, vector<2x128xf32>,
    %238 = arith.index_cast %c5_i32 : i32 to index
    %c0_111 = arith.constant 0 : index
    %c0_112 = arith.constant 0 : index
    %239 = vector.load %arg10[%238, %c0_111, %c0_112] : memref<8x2x128xf32, #tpu.memory_space<vmem>>, vector<1x2x128xf32>
    %240 = vector.shape_cast %239 : vector<1x2x128xf32> to vector<2x128xf32>
    %241 = vector.shape_cast %235 : vector<2x128xf32> to vector<1x2x128xf32>
    tpu.vector_store %arg10[%238, %c0_111, %c0_112], %241 {strides = array<i32>} : memref<8x2x128xf32, #tpu.memory_space<vmem>>, vector<1x2x128xf32>,
    %c6_i32 = arith.constant 6 : i32
    %242 = arith.index_cast %c6_i32 : i32 to index
    %c0_113 = arith.constant 0 : index
    %c0_114 = arith.constant 0 : index
    %243 = vector.load %arg12[%242, %c0_113, %c0_114] : memref<8x2x512xf32, #tpu.memory_space<vmem>>, vector<1x2x512xf32>
    %244 = vector.shape_cast %243 : vector<1x2x512xf32> to vector<2x512xf32>
    %c0_115 = arith.constant 0 : index
    %c0_116 = arith.constant 0 : index
    %245 = vector.load %arg13[%c0_115, %c0_116] : memref<2x128xf32, #tpu.memory_space<vmem>>, vector<2x128xf32>
    %cst_117 = arith.constant dense<0.000000e+00> : vector<2x512xf32>
    %246 = tpu.matmul %245, %1, %cst_117 {dimension_numbers = #tpu.dot_dimension_numbers<[1], [0], [0], [1], [0, 0, 1, 1], [], []>} : vector<2x128xf32>, vector<128x512xf32>, vector<2x512xf32> -> vector<2x512xf32>
    %247 = arith.addf %244, %246 : vector<2x512xf32>
    %248 = vector.extract_strided_slice %247 {offsets = [0, 0], sizes = [2, 128], strides = [1, 1]} : vector<2x512xf32> to vector<2x128xf32>
    %249 = arith.negf %248 : vector<2x128xf32>
    %250 = math.exp %249 : vector<2x128xf32>
    %cst_118 = arith.constant 1.000000e+00 : f32
    %251 = vector.broadcast %cst_118 : f32 to vector<2x128xf32>
    %252 = arith.addf %251, %250 : vector<2x128xf32>
    %253 = arith.divf %251, %252 : vector<2x128xf32>
    %254 = vector.extract_strided_slice %247 {offsets = [0, 128], sizes = [2, 128], strides = [1, 1]} : vector<2x512xf32> to vector<2x128xf32>
    %255 = arith.negf %254 : vector<2x128xf32>
    %256 = math.exp %255 : vector<2x128xf32>
    %cst_119 = arith.constant 1.000000e+00 : f32
    %257 = vector.broadcast %cst_119 : f32 to vector<2x128xf32>
    %258 = arith.addf %257, %256 : vector<2x128xf32>
    %259 = arith.divf %257, %258 : vector<2x128xf32>
    %260 = vector.extract_strided_slice %247 {offsets = [0, 256], sizes = [2, 128], strides = [1, 1]} : vector<2x512xf32> to vector<2x128xf32>
    %261 = math.tanh %260 : vector<2x128xf32>
    %262 = vector.extract_strided_slice %247 {offsets = [0, 384], sizes = [2, 128], strides = [1, 1]} : vector<2x512xf32> to vector<2x128xf32>
    %263 = arith.negf %262 : vector<2x128xf32>
    %264 = math.exp %263 : vector<2x128xf32>
    %cst_120 = arith.constant 1.000000e+00 : f32
    %265 = vector.broadcast %cst_120 : f32 to vector<2x128xf32>
    %266 = arith.addf %265, %264 : vector<2x128xf32>
    %267 = arith.divf %265, %266 : vector<2x128xf32>
    %c0_121 = arith.constant 0 : index
    %c0_122 = arith.constant 0 : index
    %268 = vector.load %arg14[%c0_121, %c0_122] : memref<2x128xf32, #tpu.memory_space<vmem>>, vector<2x128xf32>
    %269 = arith.mulf %259, %268 : vector<2x128xf32>
    %270 = arith.mulf %253, %261 : vector<2x128xf32>
    %271 = arith.addf %269, %270 : vector<2x128xf32>
    %272 = math.tanh %271 : vector<2x128xf32>
    %273 = arith.mulf %267, %272 : vector<2x128xf32>
    %c0_123 = arith.constant 0 : index
    %c0_124 = arith.constant 0 : index
    %274 = vector.load %arg14[%c0_123, %c0_124] : memref<2x128xf32, #tpu.memory_space<vmem>>, vector<2x128xf32>
    tpu.vector_store %arg14[%c0_123, %c0_124], %271 {strides = array<i32>} : memref<2x128xf32, #tpu.memory_space<vmem>>, vector<2x128xf32>,
    %c0_125 = arith.constant 0 : index
    %c0_126 = arith.constant 0 : index
    %275 = vector.load %arg13[%c0_125, %c0_126] : memref<2x128xf32, #tpu.memory_space<vmem>>, vector<2x128xf32>
    tpu.vector_store %arg13[%c0_125, %c0_126], %273 {strides = array<i32>} : memref<2x128xf32, #tpu.memory_space<vmem>>, vector<2x128xf32>,
    %276 = arith.index_cast %c6_i32 : i32 to index
    %c0_127 = arith.constant 0 : index
    %c0_128 = arith.constant 0 : index
    %277 = vector.load %arg10[%276, %c0_127, %c0_128] : memref<8x2x128xf32, #tpu.memory_space<vmem>>, vector<1x2x128xf32>
    %278 = vector.shape_cast %277 : vector<1x2x128xf32> to vector<2x128xf32>
    %279 = vector.shape_cast %273 : vector<2x128xf32> to vector<1x2x128xf32>
    tpu.vector_store %arg10[%276, %c0_127, %c0_128], %279 {strides = array<i32>} : memref<8x2x128xf32, #tpu.memory_space<vmem>>, vector<1x2x128xf32>,
    %c7_i32 = arith.constant 7 : i32
    %280 = arith.index_cast %c7_i32 : i32 to index
    %c0_129 = arith.constant 0 : index
    %c0_130 = arith.constant 0 : index
    %281 = vector.load %arg12[%280, %c0_129, %c0_130] : memref<8x2x512xf32, #tpu.memory_space<vmem>>, vector<1x2x512xf32>
    %282 = vector.shape_cast %281 : vector<1x2x512xf32> to vector<2x512xf32>
    %c0_131 = arith.constant 0 : index
    %c0_132 = arith.constant 0 : index
    %283 = vector.load %arg13[%c0_131, %c0_132] : memref<2x128xf32, #tpu.memory_space<vmem>>, vector<2x128xf32>
    %cst_133 = arith.constant dense<0.000000e+00> : vector<2x512xf32>
    %284 = tpu.matmul %283, %1, %cst_133 {dimension_numbers = #tpu.dot_dimension_numbers<[1], [0], [0], [1], [0, 0, 1, 1], [], []>} : vector<2x128xf32>, vector<128x512xf32>, vector<2x512xf32> -> vector<2x512xf32>
    %285 = arith.addf %282, %284 : vector<2x512xf32>
    %286 = vector.extract_strided_slice %285 {offsets = [0, 0], sizes = [2, 128], strides = [1, 1]} : vector<2x512xf32> to vector<2x128xf32>
    %287 = arith.negf %286 : vector<2x128xf32>
    %288 = math.exp %287 : vector<2x128xf32>
    %cst_134 = arith.constant 1.000000e+00 : f32
    %289 = vector.broadcast %cst_134 : f32 to vector<2x128xf32>
    %290 = arith.addf %289, %288 : vector<2x128xf32>
    %291 = arith.divf %289, %290 : vector<2x128xf32>
    %292 = vector.extract_strided_slice %285 {offsets = [0, 128], sizes = [2, 128], strides = [1, 1]} : vector<2x512xf32> to vector<2x128xf32>
    %293 = arith.negf %292 : vector<2x128xf32>
    %294 = math.exp %293 : vector<2x128xf32>
    %cst_135 = arith.constant 1.000000e+00 : f32
    %295 = vector.broadcast %cst_135 : f32 to vector<2x128xf32>
    %296 = arith.addf %295, %294 : vector<2x128xf32>
    %297 = arith.divf %295, %296 : vector<2x128xf32>
    %298 = vector.extract_strided_slice %285 {offsets = [0, 256], sizes = [2, 128], strides = [1, 1]} : vector<2x512xf32> to vector<2x128xf32>
    %299 = math.tanh %298 : vector<2x128xf32>
    %300 = vector.extract_strided_slice %285 {offsets = [0, 384], sizes = [2, 128], strides = [1, 1]} : vector<2x512xf32> to vector<2x128xf32>
    %301 = arith.negf %300 : vector<2x128xf32>
    %302 = math.exp %301 : vector<2x128xf32>
    %cst_136 = arith.constant 1.000000e+00 : f32
    %303 = vector.broadcast %cst_136 : f32 to vector<2x128xf32>
    %304 = arith.addf %303, %302 : vector<2x128xf32>
    %305 = arith.divf %303, %304 : vector<2x128xf32>
    %c0_137 = arith.constant 0 : index
    %c0_138 = arith.constant 0 : index
    %306 = vector.load %arg14[%c0_137, %c0_138] : memref<2x128xf32, #tpu.memory_space<vmem>>, vector<2x128xf32>
    %307 = arith.mulf %297, %306 : vector<2x128xf32>
    %308 = arith.mulf %291, %299 : vector<2x128xf32>
    %309 = arith.addf %307, %308 : vector<2x128xf32>
    %310 = math.tanh %309 : vector<2x128xf32>
    %311 = arith.mulf %305, %310 : vector<2x128xf32>
    %c0_139 = arith.constant 0 : index
    %c0_140 = arith.constant 0 : index
    %312 = vector.load %arg14[%c0_139, %c0_140] : memref<2x128xf32, #tpu.memory_space<vmem>>, vector<2x128xf32>
    tpu.vector_store %arg14[%c0_139, %c0_140], %309 {strides = array<i32>} : memref<2x128xf32, #tpu.memory_space<vmem>>, vector<2x128xf32>,
    %c0_141 = arith.constant 0 : index
    %c0_142 = arith.constant 0 : index
    %313 = vector.load %arg13[%c0_141, %c0_142] : memref<2x128xf32, #tpu.memory_space<vmem>>, vector<2x128xf32>
    tpu.vector_store %arg13[%c0_141, %c0_142], %311 {strides = array<i32>} : memref<2x128xf32, #tpu.memory_space<vmem>>, vector<2x128xf32>,
    %314 = arith.index_cast %c7_i32 : i32 to index
    %c0_143 = arith.constant 0 : index
    %c0_144 = arith.constant 0 : index
    %315 = vector.load %arg10[%314, %c0_143, %c0_144] : memref<8x2x128xf32, #tpu.memory_space<vmem>>, vector<1x2x128xf32>
    %316 = vector.shape_cast %315 : vector<1x2x128xf32> to vector<2x128xf32>
    %317 = vector.shape_cast %311 : vector<2x128xf32> to vector<1x2x128xf32>
    tpu.vector_store %arg10[%314, %c0_143, %c0_144], %317 {strides = array<i32>} : memref<8x2x128xf32, #tpu.memory_space<vmem>>, vector<1x2x128xf32>,
    %c8_i32 = arith.constant 8 : i32
    %c0_145 = arith.constant 0 : index
    %c0_146 = arith.constant 0 : index
    %318 = vector.load %arg4[%c0_145, %c0_146] : memref<128x512xf32, #tpu.memory_space<vmem>>, vector<128x512xf32>
    %c0_147 = arith.constant 0 : index
    %c0_148 = arith.constant 0 : index
    %319 = vector.load %arg5[%c0_147, %c0_148] : memref<128x512xf32, #tpu.memory_space<vmem>>, vector<128x512xf32>
    %c0_149 = arith.constant 0 : index
    %c0_150 = arith.constant 0 : index
    %320 = vector.load %arg6[%c0_149, %c0_150] : memref<1x512xf32, #tpu.memory_space<vmem>>, vector<1x512xf32>
    %c0_151 = arith.constant 0 : index
    %c0_152 = arith.constant 0 : index
    %c0_153 = arith.constant 0 : index
    %321 = vector.load %arg10[%c0_151, %c0_152, %c0_153] : memref<8x2x128xf32, #tpu.memory_space<vmem>>, vector<8x2x128xf32>
    %322 = vector.shape_cast %321 : vector<8x2x128xf32> to vector<16x128xf32>
    %cst_154 = arith.constant dense<0.000000e+00> : vector<16x512xf32>
    %323 = tpu.matmul %322, %318, %cst_154 {dimension_numbers = #tpu.dot_dimension_numbers<[1], [0], [0], [1], [0, 0, 1, 1], [], []>} : vector<16x128xf32>, vector<128x512xf32>, vector<16x512xf32> -> vector<16x512xf32>
    %324 = vector.broadcast %320 : vector<1x512xf32> to vector<16x512xf32>
    %325 = arith.addf %323, %324 : vector<16x512xf32>
    %326 = vector.shape_cast %325 : vector<16x512xf32> to vector<8x2x512xf32>
    %c0_155 = arith.constant 0 : index
    %c0_156 = arith.constant 0 : index
    %c0_157 = arith.constant 0 : index
    %327 = vector.load %arg12[%c0_155, %c0_156, %c0_157] : memref<8x2x512xf32, #tpu.memory_space<vmem>>, vector<8x2x512xf32>
    tpu.vector_store %arg12[%c0_155, %c0_156, %c0_157], %326 {strides = array<i32>} : memref<8x2x512xf32, #tpu.memory_space<vmem>>, vector<8x2x512xf32>,
    %cst_158 = arith.constant 0.000000e+00 : f32
    %328 = vector.broadcast %cst_158 : f32 to vector<2x128xf32>
    %c0_159 = arith.constant 0 : index
    %c0_160 = arith.constant 0 : index
    %329 = vector.load %arg13[%c0_159, %c0_160] : memref<2x128xf32, #tpu.memory_space<vmem>>, vector<2x128xf32>
    tpu.vector_store %arg13[%c0_159, %c0_160], %328 {strides = array<i32>} : memref<2x128xf32, #tpu.memory_space<vmem>>, vector<2x128xf32>,
    %cst_161 = arith.constant 0.000000e+00 : f32
    %330 = vector.broadcast %cst_161 : f32 to vector<2x128xf32>
    %c0_162 = arith.constant 0 : index
    %c0_163 = arith.constant 0 : index
    %331 = vector.load %arg14[%c0_162, %c0_163] : memref<2x128xf32, #tpu.memory_space<vmem>>, vector<2x128xf32>
    tpu.vector_store %arg14[%c0_162, %c0_163], %330 {strides = array<i32>} : memref<2x128xf32, #tpu.memory_space<vmem>>, vector<2x128xf32>,
    %c0_i32_164 = arith.constant 0 : i32
    %332 = arith.index_cast %c0_i32_164 : i32 to index
    %c0_165 = arith.constant 0 : index
    %c0_166 = arith.constant 0 : index
    %333 = vector.load %arg12[%332, %c0_165, %c0_166] : memref<8x2x512xf32, #tpu.memory_space<vmem>>, vector<1x2x512xf32>
    %334 = vector.shape_cast %333 : vector<1x2x512xf32> to vector<2x512xf32>
    %c0_167 = arith.constant 0 : index
    %c0_168 = arith.constant 0 : index
    %335 = vector.load %arg13[%c0_167, %c0_168] : memref<2x128xf32, #tpu.memory_space<vmem>>, vector<2x128xf32>
    %cst_169 = arith.constant dense<0.000000e+00> : vector<2x512xf32>
    %336 = tpu.matmul %335, %319, %cst_169 {dimension_numbers = #tpu.dot_dimension_numbers<[1], [0], [0], [1], [0, 0, 1, 1], [], []>} : vector<2x128xf32>, vector<128x512xf32>, vector<2x512xf32> -> vector<2x512xf32>
    %337 = arith.addf %334, %336 : vector<2x512xf32>
    %338 = vector.extract_strided_slice %337 {offsets = [0, 0], sizes = [2, 128], strides = [1, 1]} : vector<2x512xf32> to vector<2x128xf32>
    %339 = arith.negf %338 : vector<2x128xf32>
    %340 = math.exp %339 : vector<2x128xf32>
    %cst_170 = arith.constant 1.000000e+00 : f32
    %341 = vector.broadcast %cst_170 : f32 to vector<2x128xf32>
    %342 = arith.addf %341, %340 : vector<2x128xf32>
    %343 = arith.divf %341, %342 : vector<2x128xf32>
    %344 = vector.extract_strided_slice %337 {offsets = [0, 128], sizes = [2, 128], strides = [1, 1]} : vector<2x512xf32> to vector<2x128xf32>
    %345 = arith.negf %344 : vector<2x128xf32>
    %346 = math.exp %345 : vector<2x128xf32>
    %cst_171 = arith.constant 1.000000e+00 : f32
    %347 = vector.broadcast %cst_171 : f32 to vector<2x128xf32>
    %348 = arith.addf %347, %346 : vector<2x128xf32>
    %349 = arith.divf %347, %348 : vector<2x128xf32>
    %350 = vector.extract_strided_slice %337 {offsets = [0, 256], sizes = [2, 128], strides = [1, 1]} : vector<2x512xf32> to vector<2x128xf32>
    %351 = math.tanh %350 : vector<2x128xf32>
    %352 = vector.extract_strided_slice %337 {offsets = [0, 384], sizes = [2, 128], strides = [1, 1]} : vector<2x512xf32> to vector<2x128xf32>
    %353 = arith.negf %352 : vector<2x128xf32>
    %354 = math.exp %353 : vector<2x128xf32>
    %cst_172 = arith.constant 1.000000e+00 : f32
    %355 = vector.broadcast %cst_172 : f32 to vector<2x128xf32>
    %356 = arith.addf %355, %354 : vector<2x128xf32>
    %357 = arith.divf %355, %356 : vector<2x128xf32>
    %c0_173 = arith.constant 0 : index
    %c0_174 = arith.constant 0 : index
    %358 = vector.load %arg14[%c0_173, %c0_174] : memref<2x128xf32, #tpu.memory_space<vmem>>, vector<2x128xf32>
    %359 = arith.mulf %349, %358 : vector<2x128xf32>
    %360 = arith.mulf %343, %351 : vector<2x128xf32>
    %361 = arith.addf %359, %360 : vector<2x128xf32>
    %362 = math.tanh %361 : vector<2x128xf32>
    %363 = arith.mulf %357, %362 : vector<2x128xf32>
    %c0_175 = arith.constant 0 : index
    %c0_176 = arith.constant 0 : index
    %364 = vector.load %arg14[%c0_175, %c0_176] : memref<2x128xf32, #tpu.memory_space<vmem>>, vector<2x128xf32>
    tpu.vector_store %arg14[%c0_175, %c0_176], %361 {strides = array<i32>} : memref<2x128xf32, #tpu.memory_space<vmem>>, vector<2x128xf32>,
    %c0_177 = arith.constant 0 : index
    %c0_178 = arith.constant 0 : index
    %365 = vector.load %arg13[%c0_177, %c0_178] : memref<2x128xf32, #tpu.memory_space<vmem>>, vector<2x128xf32>
    tpu.vector_store %arg13[%c0_177, %c0_178], %363 {strides = array<i32>} : memref<2x128xf32, #tpu.memory_space<vmem>>, vector<2x128xf32>,
    %c1_i32_179 = arith.constant 1 : i32
    %366 = arith.index_cast %c1_i32_179 : i32 to index
    %c0_180 = arith.constant 0 : index
    %c0_181 = arith.constant 0 : index
    %367 = vector.load %arg12[%366, %c0_180, %c0_181] : memref<8x2x512xf32, #tpu.memory_space<vmem>>, vector<1x2x512xf32>
    %368 = vector.shape_cast %367 : vector<1x2x512xf32> to vector<2x512xf32>
    %c0_182 = arith.constant 0 : index
    %c0_183 = arith.constant 0 : index
    %369 = vector.load %arg13[%c0_182, %c0_183] : memref<2x128xf32, #tpu.memory_space<vmem>>, vector<2x128xf32>
    %cst_184 = arith.constant dense<0.000000e+00> : vector<2x512xf32>
    %370 = tpu.matmul %369, %319, %cst_184 {dimension_numbers = #tpu.dot_dimension_numbers<[1], [0], [0], [1], [0, 0, 1, 1], [], []>} : vector<2x128xf32>, vector<128x512xf32>, vector<2x512xf32> -> vector<2x512xf32>
    %371 = arith.addf %368, %370 : vector<2x512xf32>
    %372 = vector.extract_strided_slice %371 {offsets = [0, 0], sizes = [2, 128], strides = [1, 1]} : vector<2x512xf32> to vector<2x128xf32>
    %373 = arith.negf %372 : vector<2x128xf32>
    %374 = math.exp %373 : vector<2x128xf32>
    %cst_185 = arith.constant 1.000000e+00 : f32
    %375 = vector.broadcast %cst_185 : f32 to vector<2x128xf32>
    %376 = arith.addf %375, %374 : vector<2x128xf32>
    %377 = arith.divf %375, %376 : vector<2x128xf32>
    %378 = vector.extract_strided_slice %371 {offsets = [0, 128], sizes = [2, 128], strides = [1, 1]} : vector<2x512xf32> to vector<2x128xf32>
    %379 = arith.negf %378 : vector<2x128xf32>
    %380 = math.exp %379 : vector<2x128xf32>
    %cst_186 = arith.constant 1.000000e+00 : f32
    %381 = vector.broadcast %cst_186 : f32 to vector<2x128xf32>
    %382 = arith.addf %381, %380 : vector<2x128xf32>
    %383 = arith.divf %381, %382 : vector<2x128xf32>
    %384 = vector.extract_strided_slice %371 {offsets = [0, 256], sizes = [2, 128], strides = [1, 1]} : vector<2x512xf32> to vector<2x128xf32>
    %385 = math.tanh %384 : vector<2x128xf32>
    %386 = vector.extract_strided_slice %371 {offsets = [0, 384], sizes = [2, 128], strides = [1, 1]} : vector<2x512xf32> to vector<2x128xf32>
    %387 = arith.negf %386 : vector<2x128xf32>
    %388 = math.exp %387 : vector<2x128xf32>
    %cst_187 = arith.constant 1.000000e+00 : f32
    %389 = vector.broadcast %cst_187 : f32 to vector<2x128xf32>
    %390 = arith.addf %389, %388 : vector<2x128xf32>
    %391 = arith.divf %389, %390 : vector<2x128xf32>
    %c0_188 = arith.constant 0 : index
    %c0_189 = arith.constant 0 : index
    %392 = vector.load %arg14[%c0_188, %c0_189] : memref<2x128xf32, #tpu.memory_space<vmem>>, vector<2x128xf32>
    %393 = arith.mulf %383, %392 : vector<2x128xf32>
    %394 = arith.mulf %377, %385 : vector<2x128xf32>
    %395 = arith.addf %393, %394 : vector<2x128xf32>
    %396 = math.tanh %395 : vector<2x128xf32>
    %397 = arith.mulf %391, %396 : vector<2x128xf32>
    %c0_190 = arith.constant 0 : index
    %c0_191 = arith.constant 0 : index
    %398 = vector.load %arg14[%c0_190, %c0_191] : memref<2x128xf32, #tpu.memory_space<vmem>>, vector<2x128xf32>
    tpu.vector_store %arg14[%c0_190, %c0_191], %395 {strides = array<i32>} : memref<2x128xf32, #tpu.memory_space<vmem>>, vector<2x128xf32>,
    %c0_192 = arith.constant 0 : index
    %c0_193 = arith.constant 0 : index
    %399 = vector.load %arg13[%c0_192, %c0_193] : memref<2x128xf32, #tpu.memory_space<vmem>>, vector<2x128xf32>
    tpu.vector_store %arg13[%c0_192, %c0_193], %397 {strides = array<i32>} : memref<2x128xf32, #tpu.memory_space<vmem>>, vector<2x128xf32>,
    %c2_i32_194 = arith.constant 2 : i32
    %400 = arith.index_cast %c2_i32_194 : i32 to index
    %c0_195 = arith.constant 0 : index
    %c0_196 = arith.constant 0 : index
    %401 = vector.load %arg12[%400, %c0_195, %c0_196] : memref<8x2x512xf32, #tpu.memory_space<vmem>>, vector<1x2x512xf32>
    %402 = vector.shape_cast %401 : vector<1x2x512xf32> to vector<2x512xf32>
    %c0_197 = arith.constant 0 : index
    %c0_198 = arith.constant 0 : index
    %403 = vector.load %arg13[%c0_197, %c0_198] : memref<2x128xf32, #tpu.memory_space<vmem>>, vector<2x128xf32>
    %cst_199 = arith.constant dense<0.000000e+00> : vector<2x512xf32>
    %404 = tpu.matmul %403, %319, %cst_199 {dimension_numbers = #tpu.dot_dimension_numbers<[1], [0], [0], [1], [0, 0, 1, 1], [], []>} : vector<2x128xf32>, vector<128x512xf32>, vector<2x512xf32> -> vector<2x512xf32>
    %405 = arith.addf %402, %404 : vector<2x512xf32>
    %406 = vector.extract_strided_slice %405 {offsets = [0, 0], sizes = [2, 128], strides = [1, 1]} : vector<2x512xf32> to vector<2x128xf32>
    %407 = arith.negf %406 : vector<2x128xf32>
    %408 = math.exp %407 : vector<2x128xf32>
    %cst_200 = arith.constant 1.000000e+00 : f32
    %409 = vector.broadcast %cst_200 : f32 to vector<2x128xf32>
    %410 = arith.addf %409, %408 : vector<2x128xf32>
    %411 = arith.divf %409, %410 : vector<2x128xf32>
    %412 = vector.extract_strided_slice %405 {offsets = [0, 128], sizes = [2, 128], strides = [1, 1]} : vector<2x512xf32> to vector<2x128xf32>
    %413 = arith.negf %412 : vector<2x128xf32>
    %414 = math.exp %413 : vector<2x128xf32>
    %cst_201 = arith.constant 1.000000e+00 : f32
    %415 = vector.broadcast %cst_201 : f32 to vector<2x128xf32>
    %416 = arith.addf %415, %414 : vector<2x128xf32>
    %417 = arith.divf %415, %416 : vector<2x128xf32>
    %418 = vector.extract_strided_slice %405 {offsets = [0, 256], sizes = [2, 128], strides = [1, 1]} : vector<2x512xf32> to vector<2x128xf32>
    %419 = math.tanh %418 : vector<2x128xf32>
    %420 = vector.extract_strided_slice %405 {offsets = [0, 384], sizes = [2, 128], strides = [1, 1]} : vector<2x512xf32> to vector<2x128xf32>
    %421 = arith.negf %420 : vector<2x128xf32>
    %422 = math.exp %421 : vector<2x128xf32>
    %cst_202 = arith.constant 1.000000e+00 : f32
    %423 = vector.broadcast %cst_202 : f32 to vector<2x128xf32>
    %424 = arith.addf %423, %422 : vector<2x128xf32>
    %425 = arith.divf %423, %424 : vector<2x128xf32>
    %c0_203 = arith.constant 0 : index
    %c0_204 = arith.constant 0 : index
    %426 = vector.load %arg14[%c0_203, %c0_204] : memref<2x128xf32, #tpu.memory_space<vmem>>, vector<2x128xf32>
    %427 = arith.mulf %417, %426 : vector<2x128xf32>
    %428 = arith.mulf %411, %419 : vector<2x128xf32>
    %429 = arith.addf %427, %428 : vector<2x128xf32>
    %430 = math.tanh %429 : vector<2x128xf32>
    %431 = arith.mulf %425, %430 : vector<2x128xf32>
    %c0_205 = arith.constant 0 : index
    %c0_206 = arith.constant 0 : index
    %432 = vector.load %arg14[%c0_205, %c0_206] : memref<2x128xf32, #tpu.memory_space<vmem>>, vector<2x128xf32>
    tpu.vector_store %arg14[%c0_205, %c0_206], %429 {strides = array<i32>} : memref<2x128xf32, #tpu.memory_space<vmem>>, vector<2x128xf32>,
    %c0_207 = arith.constant 0 : index
    %c0_208 = arith.constant 0 : index
    %433 = vector.load %arg13[%c0_207, %c0_208] : memref<2x128xf32, #tpu.memory_space<vmem>>, vector<2x128xf32>
    tpu.vector_store %arg13[%c0_207, %c0_208], %431 {strides = array<i32>} : memref<2x128xf32, #tpu.memory_space<vmem>>, vector<2x128xf32>,
    %c3_i32_209 = arith.constant 3 : i32
    %434 = arith.index_cast %c3_i32_209 : i32 to index
    %c0_210 = arith.constant 0 : index
    %c0_211 = arith.constant 0 : index
    %435 = vector.load %arg12[%434, %c0_210, %c0_211] : memref<8x2x512xf32, #tpu.memory_space<vmem>>, vector<1x2x512xf32>
    %436 = vector.shape_cast %435 : vector<1x2x512xf32> to vector<2x512xf32>
    %c0_212 = arith.constant 0 : index
    %c0_213 = arith.constant 0 : index
    %437 = vector.load %arg13[%c0_212, %c0_213] : memref<2x128xf32, #tpu.memory_space<vmem>>, vector<2x128xf32>
    %cst_214 = arith.constant dense<0.000000e+00> : vector<2x512xf32>
    %438 = tpu.matmul %437, %319, %cst_214 {dimension_numbers = #tpu.dot_dimension_numbers<[1], [0], [0], [1], [0, 0, 1, 1], [], []>} : vector<2x128xf32>, vector<128x512xf32>, vector<2x512xf32> -> vector<2x512xf32>
    %439 = arith.addf %436, %438 : vector<2x512xf32>
    %440 = vector.extract_strided_slice %439 {offsets = [0, 0], sizes = [2, 128], strides = [1, 1]} : vector<2x512xf32> to vector<2x128xf32>
    %441 = arith.negf %440 : vector<2x128xf32>
    %442 = math.exp %441 : vector<2x128xf32>
    %cst_215 = arith.constant 1.000000e+00 : f32
    %443 = vector.broadcast %cst_215 : f32 to vector<2x128xf32>
    %444 = arith.addf %443, %442 : vector<2x128xf32>
    %445 = arith.divf %443, %444 : vector<2x128xf32>
    %446 = vector.extract_strided_slice %439 {offsets = [0, 128], sizes = [2, 128], strides = [1, 1]} : vector<2x512xf32> to vector<2x128xf32>
    %447 = arith.negf %446 : vector<2x128xf32>
    %448 = math.exp %447 : vector<2x128xf32>
    %cst_216 = arith.constant 1.000000e+00 : f32
    %449 = vector.broadcast %cst_216 : f32 to vector<2x128xf32>
    %450 = arith.addf %449, %448 : vector<2x128xf32>
    %451 = arith.divf %449, %450 : vector<2x128xf32>
    %452 = vector.extract_strided_slice %439 {offsets = [0, 256], sizes = [2, 128], strides = [1, 1]} : vector<2x512xf32> to vector<2x128xf32>
    %453 = math.tanh %452 : vector<2x128xf32>
    %454 = vector.extract_strided_slice %439 {offsets = [0, 384], sizes = [2, 128], strides = [1, 1]} : vector<2x512xf32> to vector<2x128xf32>
    %455 = arith.negf %454 : vector<2x128xf32>
    %456 = math.exp %455 : vector<2x128xf32>
    %cst_217 = arith.constant 1.000000e+00 : f32
    %457 = vector.broadcast %cst_217 : f32 to vector<2x128xf32>
    %458 = arith.addf %457, %456 : vector<2x128xf32>
    %459 = arith.divf %457, %458 : vector<2x128xf32>
    %c0_218 = arith.constant 0 : index
    %c0_219 = arith.constant 0 : index
    %460 = vector.load %arg14[%c0_218, %c0_219] : memref<2x128xf32, #tpu.memory_space<vmem>>, vector<2x128xf32>
    %461 = arith.mulf %451, %460 : vector<2x128xf32>
    %462 = arith.mulf %445, %453 : vector<2x128xf32>
    %463 = arith.addf %461, %462 : vector<2x128xf32>
    %464 = math.tanh %463 : vector<2x128xf32>
    %465 = arith.mulf %459, %464 : vector<2x128xf32>
    %c0_220 = arith.constant 0 : index
    %c0_221 = arith.constant 0 : index
    %466 = vector.load %arg14[%c0_220, %c0_221] : memref<2x128xf32, #tpu.memory_space<vmem>>, vector<2x128xf32>
    tpu.vector_store %arg14[%c0_220, %c0_221], %463 {strides = array<i32>} : memref<2x128xf32, #tpu.memory_space<vmem>>, vector<2x128xf32>,
    %c0_222 = arith.constant 0 : index
    %c0_223 = arith.constant 0 : index
    %467 = vector.load %arg13[%c0_222, %c0_223] : memref<2x128xf32, #tpu.memory_space<vmem>>, vector<2x128xf32>
    tpu.vector_store %arg13[%c0_222, %c0_223], %465 {strides = array<i32>} : memref<2x128xf32, #tpu.memory_space<vmem>>, vector<2x128xf32>,
    %c4_i32_224 = arith.constant 4 : i32
    %468 = arith.index_cast %c4_i32_224 : i32 to index
    %c0_225 = arith.constant 0 : index
    %c0_226 = arith.constant 0 : index
    %469 = vector.load %arg12[%468, %c0_225, %c0_226] : memref<8x2x512xf32, #tpu.memory_space<vmem>>, vector<1x2x512xf32>
    %470 = vector.shape_cast %469 : vector<1x2x512xf32> to vector<2x512xf32>
    %c0_227 = arith.constant 0 : index
    %c0_228 = arith.constant 0 : index
    %471 = vector.load %arg13[%c0_227, %c0_228] : memref<2x128xf32, #tpu.memory_space<vmem>>, vector<2x128xf32>
    %cst_229 = arith.constant dense<0.000000e+00> : vector<2x512xf32>
    %472 = tpu.matmul %471, %319, %cst_229 {dimension_numbers = #tpu.dot_dimension_numbers<[1], [0], [0], [1], [0, 0, 1, 1], [], []>} : vector<2x128xf32>, vector<128x512xf32>, vector<2x512xf32> -> vector<2x512xf32>
    %473 = arith.addf %470, %472 : vector<2x512xf32>
    %474 = vector.extract_strided_slice %473 {offsets = [0, 0], sizes = [2, 128], strides = [1, 1]} : vector<2x512xf32> to vector<2x128xf32>
    %475 = arith.negf %474 : vector<2x128xf32>
    %476 = math.exp %475 : vector<2x128xf32>
    %cst_230 = arith.constant 1.000000e+00 : f32
    %477 = vector.broadcast %cst_230 : f32 to vector<2x128xf32>
    %478 = arith.addf %477, %476 : vector<2x128xf32>
    %479 = arith.divf %477, %478 : vector<2x128xf32>
    %480 = vector.extract_strided_slice %473 {offsets = [0, 128], sizes = [2, 128], strides = [1, 1]} : vector<2x512xf32> to vector<2x128xf32>
    %481 = arith.negf %480 : vector<2x128xf32>
    %482 = math.exp %481 : vector<2x128xf32>
    %cst_231 = arith.constant 1.000000e+00 : f32
    %483 = vector.broadcast %cst_231 : f32 to vector<2x128xf32>
    %484 = arith.addf %483, %482 : vector<2x128xf32>
    %485 = arith.divf %483, %484 : vector<2x128xf32>
    %486 = vector.extract_strided_slice %473 {offsets = [0, 256], sizes = [2, 128], strides = [1, 1]} : vector<2x512xf32> to vector<2x128xf32>
    %487 = math.tanh %486 : vector<2x128xf32>
    %488 = vector.extract_strided_slice %473 {offsets = [0, 384], sizes = [2, 128], strides = [1, 1]} : vector<2x512xf32> to vector<2x128xf32>
    %489 = arith.negf %488 : vector<2x128xf32>
    %490 = math.exp %489 : vector<2x128xf32>
    %cst_232 = arith.constant 1.000000e+00 : f32
    %491 = vector.broadcast %cst_232 : f32 to vector<2x128xf32>
    %492 = arith.addf %491, %490 : vector<2x128xf32>
    %493 = arith.divf %491, %492 : vector<2x128xf32>
    %c0_233 = arith.constant 0 : index
    %c0_234 = arith.constant 0 : index
    %494 = vector.load %arg14[%c0_233, %c0_234] : memref<2x128xf32, #tpu.memory_space<vmem>>, vector<2x128xf32>
    %495 = arith.mulf %485, %494 : vector<2x128xf32>
    %496 = arith.mulf %479, %487 : vector<2x128xf32>
    %497 = arith.addf %495, %496 : vector<2x128xf32>
    %498 = math.tanh %497 : vector<2x128xf32>
    %499 = arith.mulf %493, %498 : vector<2x128xf32>
    %c0_235 = arith.constant 0 : index
    %c0_236 = arith.constant 0 : index
    %500 = vector.load %arg14[%c0_235, %c0_236] : memref<2x128xf32, #tpu.memory_space<vmem>>, vector<2x128xf32>
    tpu.vector_store %arg14[%c0_235, %c0_236], %497 {strides = array<i32>} : memref<2x128xf32, #tpu.memory_space<vmem>>, vector<2x128xf32>,
    %c0_237 = arith.constant 0 : index
    %c0_238 = arith.constant 0 : index
    %501 = vector.load %arg13[%c0_237, %c0_238] : memref<2x128xf32, #tpu.memory_space<vmem>>, vector<2x128xf32>
    tpu.vector_store %arg13[%c0_237, %c0_238], %499 {strides = array<i32>} : memref<2x128xf32, #tpu.memory_space<vmem>>, vector<2x128xf32>,
    %c5_i32_239 = arith.constant 5 : i32
    %502 = arith.index_cast %c5_i32_239 : i32 to index
    %c0_240 = arith.constant 0 : index
    %c0_241 = arith.constant 0 : index
    %503 = vector.load %arg12[%502, %c0_240, %c0_241] : memref<8x2x512xf32, #tpu.memory_space<vmem>>, vector<1x2x512xf32>
    %504 = vector.shape_cast %503 : vector<1x2x512xf32> to vector<2x512xf32>
    %c0_242 = arith.constant 0 : index
    %c0_243 = arith.constant 0 : index
    %505 = vector.load %arg13[%c0_242, %c0_243] : memref<2x128xf32, #tpu.memory_space<vmem>>, vector<2x128xf32>
    %cst_244 = arith.constant dense<0.000000e+00> : vector<2x512xf32>
    %506 = tpu.matmul %505, %319, %cst_244 {dimension_numbers = #tpu.dot_dimension_numbers<[1], [0], [0], [1], [0, 0, 1, 1], [], []>} : vector<2x128xf32>, vector<128x512xf32>, vector<2x512xf32> -> vector<2x512xf32>
    %507 = arith.addf %504, %506 : vector<2x512xf32>
    %508 = vector.extract_strided_slice %507 {offsets = [0, 0], sizes = [2, 128], strides = [1, 1]} : vector<2x512xf32> to vector<2x128xf32>
    %509 = arith.negf %508 : vector<2x128xf32>
    %510 = math.exp %509 : vector<2x128xf32>
    %cst_245 = arith.constant 1.000000e+00 : f32
    %511 = vector.broadcast %cst_245 : f32 to vector<2x128xf32>
    %512 = arith.addf %511, %510 : vector<2x128xf32>
    %513 = arith.divf %511, %512 : vector<2x128xf32>
    %514 = vector.extract_strided_slice %507 {offsets = [0, 128], sizes = [2, 128], strides = [1, 1]} : vector<2x512xf32> to vector<2x128xf32>
    %515 = arith.negf %514 : vector<2x128xf32>
    %516 = math.exp %515 : vector<2x128xf32>
    %cst_246 = arith.constant 1.000000e+00 : f32
    %517 = vector.broadcast %cst_246 : f32 to vector<2x128xf32>
    %518 = arith.addf %517, %516 : vector<2x128xf32>
    %519 = arith.divf %517, %518 : vector<2x128xf32>
    %520 = vector.extract_strided_slice %507 {offsets = [0, 256], sizes = [2, 128], strides = [1, 1]} : vector<2x512xf32> to vector<2x128xf32>
    %521 = math.tanh %520 : vector<2x128xf32>
    %522 = vector.extract_strided_slice %507 {offsets = [0, 384], sizes = [2, 128], strides = [1, 1]} : vector<2x512xf32> to vector<2x128xf32>
    %523 = arith.negf %522 : vector<2x128xf32>
    %524 = math.exp %523 : vector<2x128xf32>
    %cst_247 = arith.constant 1.000000e+00 : f32
    %525 = vector.broadcast %cst_247 : f32 to vector<2x128xf32>
    %526 = arith.addf %525, %524 : vector<2x128xf32>
    %527 = arith.divf %525, %526 : vector<2x128xf32>
    %c0_248 = arith.constant 0 : index
    %c0_249 = arith.constant 0 : index
    %528 = vector.load %arg14[%c0_248, %c0_249] : memref<2x128xf32, #tpu.memory_space<vmem>>, vector<2x128xf32>
    %529 = arith.mulf %519, %528 : vector<2x128xf32>
    %530 = arith.mulf %513, %521 : vector<2x128xf32>
    %531 = arith.addf %529, %530 : vector<2x128xf32>
    %532 = math.tanh %531 : vector<2x128xf32>
    %533 = arith.mulf %527, %532 : vector<2x128xf32>
    %c0_250 = arith.constant 0 : index
    %c0_251 = arith.constant 0 : index
    %534 = vector.load %arg14[%c0_250, %c0_251] : memref<2x128xf32, #tpu.memory_space<vmem>>, vector<2x128xf32>
    tpu.vector_store %arg14[%c0_250, %c0_251], %531 {strides = array<i32>} : memref<2x128xf32, #tpu.memory_space<vmem>>, vector<2x128xf32>,
    %c0_252 = arith.constant 0 : index
    %c0_253 = arith.constant 0 : index
    %535 = vector.load %arg13[%c0_252, %c0_253] : memref<2x128xf32, #tpu.memory_space<vmem>>, vector<2x128xf32>
    tpu.vector_store %arg13[%c0_252, %c0_253], %533 {strides = array<i32>} : memref<2x128xf32, #tpu.memory_space<vmem>>, vector<2x128xf32>,
    %c6_i32_254 = arith.constant 6 : i32
    %536 = arith.index_cast %c6_i32_254 : i32 to index
    %c0_255 = arith.constant 0 : index
    %c0_256 = arith.constant 0 : index
    %537 = vector.load %arg12[%536, %c0_255, %c0_256] : memref<8x2x512xf32, #tpu.memory_space<vmem>>, vector<1x2x512xf32>
    %538 = vector.shape_cast %537 : vector<1x2x512xf32> to vector<2x512xf32>
    %c0_257 = arith.constant 0 : index
    %c0_258 = arith.constant 0 : index
    %539 = vector.load %arg13[%c0_257, %c0_258] : memref<2x128xf32, #tpu.memory_space<vmem>>, vector<2x128xf32>
    %cst_259 = arith.constant dense<0.000000e+00> : vector<2x512xf32>
    %540 = tpu.matmul %539, %319, %cst_259 {dimension_numbers = #tpu.dot_dimension_numbers<[1], [0], [0], [1], [0, 0, 1, 1], [], []>} : vector<2x128xf32>, vector<128x512xf32>, vector<2x512xf32> -> vector<2x512xf32>
    %541 = arith.addf %538, %540 : vector<2x512xf32>
    %542 = vector.extract_strided_slice %541 {offsets = [0, 0], sizes = [2, 128], strides = [1, 1]} : vector<2x512xf32> to vector<2x128xf32>
    %543 = arith.negf %542 : vector<2x128xf32>
    %544 = math.exp %543 : vector<2x128xf32>
    %cst_260 = arith.constant 1.000000e+00 : f32
    %545 = vector.broadcast %cst_260 : f32 to vector<2x128xf32>
    %546 = arith.addf %545, %544 : vector<2x128xf32>
    %547 = arith.divf %545, %546 : vector<2x128xf32>
    %548 = vector.extract_strided_slice %541 {offsets = [0, 128], sizes = [2, 128], strides = [1, 1]} : vector<2x512xf32> to vector<2x128xf32>
    %549 = arith.negf %548 : vector<2x128xf32>
    %550 = math.exp %549 : vector<2x128xf32>
    %cst_261 = arith.constant 1.000000e+00 : f32
    %551 = vector.broadcast %cst_261 : f32 to vector<2x128xf32>
    %552 = arith.addf %551, %550 : vector<2x128xf32>
    %553 = arith.divf %551, %552 : vector<2x128xf32>
    %554 = vector.extract_strided_slice %541 {offsets = [0, 256], sizes = [2, 128], strides = [1, 1]} : vector<2x512xf32> to vector<2x128xf32>
    %555 = math.tanh %554 : vector<2x128xf32>
    %556 = vector.extract_strided_slice %541 {offsets = [0, 384], sizes = [2, 128], strides = [1, 1]} : vector<2x512xf32> to vector<2x128xf32>
    %557 = arith.negf %556 : vector<2x128xf32>
    %558 = math.exp %557 : vector<2x128xf32>
    %cst_262 = arith.constant 1.000000e+00 : f32
    %559 = vector.broadcast %cst_262 : f32 to vector<2x128xf32>
    %560 = arith.addf %559, %558 : vector<2x128xf32>
    %561 = arith.divf %559, %560 : vector<2x128xf32>
    %c0_263 = arith.constant 0 : index
    %c0_264 = arith.constant 0 : index
    %562 = vector.load %arg14[%c0_263, %c0_264] : memref<2x128xf32, #tpu.memory_space<vmem>>, vector<2x128xf32>
    %563 = arith.mulf %553, %562 : vector<2x128xf32>
    %564 = arith.mulf %547, %555 : vector<2x128xf32>
    %565 = arith.addf %563, %564 : vector<2x128xf32>
    %566 = math.tanh %565 : vector<2x128xf32>
    %567 = arith.mulf %561, %566 : vector<2x128xf32>
    %c0_265 = arith.constant 0 : index
    %c0_266 = arith.constant 0 : index
    %568 = vector.load %arg14[%c0_265, %c0_266] : memref<2x128xf32, #tpu.memory_space<vmem>>, vector<2x128xf32>
    tpu.vector_store %arg14[%c0_265, %c0_266], %565 {strides = array<i32>} : memref<2x128xf32, #tpu.memory_space<vmem>>, vector<2x128xf32>,
    %c0_267 = arith.constant 0 : index
    %c0_268 = arith.constant 0 : index
    %569 = vector.load %arg13[%c0_267, %c0_268] : memref<2x128xf32, #tpu.memory_space<vmem>>, vector<2x128xf32>
    tpu.vector_store %arg13[%c0_267, %c0_268], %567 {strides = array<i32>} : memref<2x128xf32, #tpu.memory_space<vmem>>, vector<2x128xf32>,
    %c7_i32_269 = arith.constant 7 : i32
    %570 = arith.index_cast %c7_i32_269 : i32 to index
    %c0_270 = arith.constant 0 : index
    %c0_271 = arith.constant 0 : index
    %571 = vector.load %arg12[%570, %c0_270, %c0_271] : memref<8x2x512xf32, #tpu.memory_space<vmem>>, vector<1x2x512xf32>
    %572 = vector.shape_cast %571 : vector<1x2x512xf32> to vector<2x512xf32>
    %c0_272 = arith.constant 0 : index
    %c0_273 = arith.constant 0 : index
    %573 = vector.load %arg13[%c0_272, %c0_273] : memref<2x128xf32, #tpu.memory_space<vmem>>, vector<2x128xf32>
    %cst_274 = arith.constant dense<0.000000e+00> : vector<2x512xf32>
    %574 = tpu.matmul %573, %319, %cst_274 {dimension_numbers = #tpu.dot_dimension_numbers<[1], [0], [0], [1], [0, 0, 1, 1], [], []>} : vector<2x128xf32>, vector<128x512xf32>, vector<2x512xf32> -> vector<2x512xf32>
    %575 = arith.addf %572, %574 : vector<2x512xf32>
    %576 = vector.extract_strided_slice %575 {offsets = [0, 0], sizes = [2, 128], strides = [1, 1]} : vector<2x512xf32> to vector<2x128xf32>
    %577 = arith.negf %576 : vector<2x128xf32>
    %578 = math.exp %577 : vector<2x128xf32>
    %cst_275 = arith.constant 1.000000e+00 : f32
    %579 = vector.broadcast %cst_275 : f32 to vector<2x128xf32>
    %580 = arith.addf %579, %578 : vector<2x128xf32>
    %581 = arith.divf %579, %580 : vector<2x128xf32>
    %582 = vector.extract_strided_slice %575 {offsets = [0, 128], sizes = [2, 128], strides = [1, 1]} : vector<2x512xf32> to vector<2x128xf32>
    %583 = arith.negf %582 : vector<2x128xf32>
    %584 = math.exp %583 : vector<2x128xf32>
    %cst_276 = arith.constant 1.000000e+00 : f32
    %585 = vector.broadcast %cst_276 : f32 to vector<2x128xf32>
    %586 = arith.addf %585, %584 : vector<2x128xf32>
    %587 = arith.divf %585, %586 : vector<2x128xf32>
    %588 = vector.extract_strided_slice %575 {offsets = [0, 256], sizes = [2, 128], strides = [1, 1]} : vector<2x512xf32> to vector<2x128xf32>
    %589 = math.tanh %588 : vector<2x128xf32>
    %590 = vector.extract_strided_slice %575 {offsets = [0, 384], sizes = [2, 128], strides = [1, 1]} : vector<2x512xf32> to vector<2x128xf32>
    %591 = arith.negf %590 : vector<2x128xf32>
    %592 = math.exp %591 : vector<2x128xf32>
    %cst_277 = arith.constant 1.000000e+00 : f32
    %593 = vector.broadcast %cst_277 : f32 to vector<2x128xf32>
    %594 = arith.addf %593, %592 : vector<2x128xf32>
    %595 = arith.divf %593, %594 : vector<2x128xf32>
    %c0_278 = arith.constant 0 : index
    %c0_279 = arith.constant 0 : index
    %596 = vector.load %arg14[%c0_278, %c0_279] : memref<2x128xf32, #tpu.memory_space<vmem>>, vector<2x128xf32>
    %597 = arith.mulf %587, %596 : vector<2x128xf32>
    %598 = arith.mulf %581, %589 : vector<2x128xf32>
    %599 = arith.addf %597, %598 : vector<2x128xf32>
    %600 = math.tanh %599 : vector<2x128xf32>
    %601 = arith.mulf %595, %600 : vector<2x128xf32>
    %c0_280 = arith.constant 0 : index
    %c0_281 = arith.constant 0 : index
    %602 = vector.load %arg14[%c0_280, %c0_281] : memref<2x128xf32, #tpu.memory_space<vmem>>, vector<2x128xf32>
    tpu.vector_store %arg14[%c0_280, %c0_281], %599 {strides = array<i32>} : memref<2x128xf32, #tpu.memory_space<vmem>>, vector<2x128xf32>,
    %c0_282 = arith.constant 0 : index
    %c0_283 = arith.constant 0 : index
    %603 = vector.load %arg13[%c0_282, %c0_283] : memref<2x128xf32, #tpu.memory_space<vmem>>, vector<2x128xf32>
    tpu.vector_store %arg13[%c0_282, %c0_283], %601 {strides = array<i32>} : memref<2x128xf32, #tpu.memory_space<vmem>>, vector<2x128xf32>,
    %c8_i32_284 = arith.constant 8 : i32
    %c0_285 = arith.constant 0 : index
    %c0_286 = arith.constant 0 : index
    %604 = vector.load %arg13[%c0_285, %c0_286] : memref<2x128xf32, #tpu.memory_space<vmem>>, vector<2x128xf32>
    %c0_287 = arith.constant 0 : index
    %c0_288 = arith.constant 0 : index
    %605 = vector.load %arg7[%c0_287, %c0_288] : memref<1x128xf32, #tpu.memory_space<vmem>>, vector<1x128xf32>
    %606 = vector.broadcast %605 : vector<1x128xf32> to vector<2x128xf32>
    %607 = arith.mulf %604, %606 : vector<2x128xf32>
    %cst_289 = arith.constant dense<0.000000e+00> : vector<2xf32>
    %608 = vector.multi_reduction <add>, %607, %cst_289 [1] : vector<2x128xf32> to vector<2xf32>
    %609 = vector.shape_cast %608 : vector<2xf32> to vector<2x1xf32>
    %c0_290 = arith.constant 0 : index
    %c0_291 = arith.constant 0 : index
    %610 = vector.load %arg8[%c0_290, %c0_291] : memref<1x1xf32, #tpu.memory_space<vmem>>, vector<1x1xf32>
    %611 = vector.broadcast %610 : vector<1x1xf32> to vector<2x1xf32>
    %612 = arith.addf %609, %611 : vector<2x1xf32>
    %c0_292 = arith.constant 0 : index
    %c0_293 = arith.constant 0 : index
    %613 = vector.load %arg9[%c0_292, %c0_293] : memref<2x1xf32, #tpu.memory_space<vmem>>, vector<2x1xf32>
    tpu.vector_store %arg9[%c0_292, %c0_293], %612 {strides = array<i32>} : memref<2x1xf32, #tpu.memory_space<vmem>>, vector<2x1xf32>,
    return
  }
}

</mosaic_0001>

<llo_original>
// kernel: tpu_custom_call.1
$region0: #{tpu_custom_call.1}
  #allocation0 [shape = 'u32[]', space=smem, size = 0x4, offset = 0x4, fixed_abs, tag = 'smem constant byte address 0x4 - core index']
  #allocation1 [shape = 'u32[144,128]{1,0:T(1,128)}', space=vmem, size = 0x12000, scoped, tag = 'internal scratch']
  #allocation2 [shape = 'f32[8,2,128]{2,1,0:T(2,128)}', space=vmem, size = 0x2000, scoped, tag = 'scratch operand']
  #allocation3 [shape = 'f32[8,2,128]{2,1,0:T(2,128)}', space=vmem, size = 0x2000, scoped, tag = 'scratch operand']
  #allocation4 [shape = 'f32[8,2,512]{2,1,0:T(2,128)}', space=vmem, size = 0x8000, scoped, tag = 'scratch operand']
  #allocation5 [shape = 'f32[2,128]{1,0:T(2,128)}', space=vmem, size = 0x400, scoped, tag = 'scratch operand']
  #allocation6 [shape = 'f32[2,128]{1,0:T(2,128)}', space=vmem, size = 0x400, scoped, tag = 'scratch operand']
  #allocation7 [shape = 'f32[1,1]{1,0:T(1,128)S(1)}', space=vmem, size = 0x200, scoped, tag = 'scoped memory for tpu_custom_call.1']
  %s0 = inlined_call_operand.vmem [shape: f32[8,2,4], index: 0, kind: input, shape index: {}]
  %s1 = inlined_call_operand.vmem [shape: f32[4,512], index: 1, kind: input, shape index: {}]
  %s2 = inlined_call_operand.hbm [shape: f32[128,512], index: 2, kind: input, shape index: {}]
  %s3 = inlined_call_operand.vmem [shape: f32[1,512], index: 3, kind: input, shape index: {}]
  %s4 = inlined_call_operand.hbm [shape: f32[128,512], index: 4, kind: input, shape index: {}]
  %s5 = inlined_call_operand.hbm [shape: f32[128,512], index: 5, kind: input, shape index: {}]
  %s6 = inlined_call_operand.vmem [shape: f32[1,512], index: 6, kind: input, shape index: {}]
  %s7 = inlined_call_operand.vmem [shape: f32[1,128], index: 7, kind: input, shape index: {}]
  %s8 = inlined_call_operand.<no memory space> [shape: f32[1,1], index: 8, kind: input, shape index: {}]
  %s9 = inlined_call_operand.vmem [shape: f32[2,1], index: 9, kind: output, shape index: {}]
  %s10 = sld [smem:[#allocation0]]
  $region58: #{tpu_custom_call.1} parent=0
    _
  %s12 = ssub.s32 1, %s10
  %s13 = scalar_select 0, %s12, %s10
  %v14 = vstv %s8
  %15 = vst [vmem:[#allocation7] sm:$0x1] %v14
  $region1: #{tpu_custom_call.1} parent=0
    #allocation8 [shape = 'u8[262144]{0}', space=vmem, size = 0x40000, scoped, tag = 'input window, operand 2, single buffered']
    #allocation9 [shape = 's32[1]{0}', space=sflag, size = 0x4, scoped, tag = 'scoped memory for tpu_custom_call.1']
    #allocation10 [shape = 'u8[262144]{0}', space=vmem, size = 0x40000, scoped, tag = 'input window, operand 4, single buffered']
    #allocation11 [shape = 's32[1]{0}', space=sflag, size = 0x4, scoped, tag = 'scoped memory for tpu_custom_call.1']
    #allocation12 [shape = 'u8[262144]{0}', space=vmem, size = 0x40000, scoped, tag = 'input window, operand 5, single buffered']
    %16 = vsyncpa [#allocation9], 0
    %17 = vsyncpa [#allocation11], 0
    // Predicated region
    $region2: #{tpu_custom_call.1} parent=1 // pred_check
      _
    $region3: #{tpu_custom_call.1} parent=1 // pred_check_branch
      %19 = sbr.rel (0) target = $region5
    $region4: #{tpu_custom_call.1} parent=1 // pred_region
      _
    $region5: #{tpu_custom_call.1} parent=1 // pred_fallthru
      _
    // Predicated region
    $region6: #{tpu_custom_call.1} parent=1 // pred_check
      _
    $region7: #{tpu_custom_call.1} parent=1 // pred_check_branch
      %21 = sbr.rel (0) target = $region9
    $region8: #{tpu_custom_call.1} parent=1 // pred_region
      _
    $region9: #{tpu_custom_call.1} parent=1 // pred_fallthru
      _
    // Predicated region
    $region10: #{tpu_custom_call.1} parent=1 // pred_check
      _
    $region11: #{tpu_custom_call.1} parent=1 // pred_check_branch
      %23 = sbr.rel (0) target = $region13
    $region12: #{tpu_custom_call.1} parent=1 // pred_region
      %s25 = ssub.s32 8192, 8192
      %26 = vsyncadd [#allocation9], %s25
      %s27 = sshll.u32 [#allocation8], 4
      %s28 = int_to_ptr.vmem [resolvable:$true] %s27
      %33 = dma.hbm_to_vmem [thread:$0]  %s2, 8192, %s28, [#allocation9], 512, 512, 32
    $region13: #{tpu_custom_call.1} parent=1 // pred_fallthru
      _
    // Predicated region
    $region14: #{tpu_custom_call.1} parent=1 // pred_check
      _
    $region15: #{tpu_custom_call.1} parent=1 // pred_check_branch
      %35 = sbr.rel (0) target = $region17
    $region16: #{tpu_custom_call.1} parent=1 // pred_region
      _
    $region17: #{tpu_custom_call.1} parent=1 // pred_fallthru
      _
    // Predicated region
    $region18: #{tpu_custom_call.1} parent=1 // pred_check
      _
    $region19: #{tpu_custom_call.1} parent=1 // pred_check_branch
      %37 = sbr.rel (0) target = $region21
    $region20: #{tpu_custom_call.1} parent=1 // pred_region
      %s39 = ssub.s32 8192, 8192
      %40 = vsyncadd [#allocation11], %s39
      %s41 = sshll.u32 [#allocation10], 4
      %s42 = int_to_ptr.vmem [resolvable:$true] %s41
      %47 = dma.hbm_to_vmem [thread:$0]  %s4, 8192, %s42, [#allocation11], 512, 512, 32
    $region21: #{tpu_custom_call.1} parent=1 // pred_fallthru
      _
    // Predicated region
    $region22: #{tpu_custom_call.1} parent=1 // pred_check
      _
    $region23: #{tpu_custom_call.1} parent=1 // pred_check_branch
      %49 = sbr.rel (0) target = $region25
    $region24: #{tpu_custom_call.1} parent=1 // pred_region
      %s51 = ssub.s32 8192, 8192
      %52 = vsyncadd [#allocation11], %s51
      %s53 = sshll.u32 [#allocation12], 4
      %s54 = int_to_ptr.vmem [resolvable:$true] %s53
      %59 = dma.hbm_to_vmem [thread:$0]  %s5, 8192, %s54, [#allocation11], 512, 512, 32
    $region25: #{tpu_custom_call.1} parent=1 // pred_fallthru
      _
    // Predicated region
    $region26: #{tpu_custom_call.1} parent=1 // pred_check
      _
    $region27: #{tpu_custom_call.1} parent=1 // pred_check_branch
      %61 = sbr.rel (0) target = $region29
    $region28: #{tpu_custom_call.1} parent=1 // pred_region
      _
    $region29: #{tpu_custom_call.1} parent=1 // pred_fallthru
      _
    // Predicated region
    $region30: #{tpu_custom_call.1} parent=1 // pred_check
      _
    $region31: #{tpu_custom_call.1} parent=1 // pred_check_branch
      %63 = sbr.rel (0) target = $region33
    $region32: #{tpu_custom_call.1} parent=1 // pred_region
      _
    $region33: #{tpu_custom_call.1} parent=1 // pred_fallthru
      _
    // Predicated region
    $region34: #{tpu_custom_call.1} parent=1 // pred_check
      _
    $region35: #{tpu_custom_call.1} parent=1 // pred_check_branch
      %65 = sbr.rel (0) target = $region37
    $region36: #{tpu_custom_call.1} parent=1 // pred_region
      _
    $region37: #{tpu_custom_call.1} parent=1 // pred_fallthru
      _
    // Predicated region
    $region38: #{tpu_custom_call.1} parent=1 // pred_check
      _
    $region39: #{tpu_custom_call.1} parent=1 // pred_check_branch
      %67 = sbr.rel (0) target = $region41
    $region40: #{tpu_custom_call.1} parent=1 // pred_region
      %68 = dma.done [#allocation9], 8192
    $region41: #{tpu_custom_call.1} parent=1 // pred_fallthru
      _
    // Predicated region
    $region42: #{tpu_custom_call.1} parent=1 // pred_check
      _
    $region43: #{tpu_custom_call.1} parent=1 // pred_check_branch
      %70 = sbr.rel (0) target = $region45
    $region44: #{tpu_custom_call.1} parent=1 // pred_region
      %71 = dma.done [#allocation11], 8192
    $region45: #{tpu_custom_call.1} parent=1 // pred_fallthru
      _
    // Predicated region
    $region46: #{tpu_custom_call.1} parent=1 // pred_check
      _
    $region47: #{tpu_custom_call.1} parent=1 // pred_check_branch
      %73 = sbr.rel (0) target = $region49
    $region48: #{tpu_custom_call.1} parent=1 // pred_region
      %74 = dma.done [#allocation11], 8192
    $region49: #{tpu_custom_call.1} parent=1 // pred_fallthru
      _
    %v75 = vld [vmem:[%s1] sm:$0xff]
    %v76 = vld [vmem:[%s1 + $0x8] sm:$0xff]
    %v77 = vld [vmem:[#allocation8] sm:$0xff]
    %v78 = vld [vmem:[#allocation8 + $0x8] sm:$0xff]
    %v79 = vld [vmem:[#allocation8 + $0x10] sm:$0xff]
    %v80 = vld [vmem:[#allocation8 + $0x18] sm:$0xff]
    %v81 = vld [vmem:[#allocation8 + $0x20] sm:$0xff]
    %v82 = vld [vmem:[#allocation8 + $0x28] sm:$0xff]
    %v83 = vld [vmem:[#allocation8 + $0x30] sm:$0xff]
    %v84 = vld [vmem:[#allocation8 + $0x38] sm:$0xff]
    %v85 = vld [vmem:[#allocation8 + $0x40] sm:$0xff]
    %v86 = vld [vmem:[#allocation8 + $0x48] sm:$0xff]
    %v87 = vld [vmem:[#allocation8 + $0x50] sm:$0xff]
    %v88 = vld [vmem:[#allocation8 + $0x58] sm:$0xff]
    %v89 = vld [vmem:[#allocation8 + $0x60] sm:$0xff]
    %v90 = vld [vmem:[#allocation8 + $0x68] sm:$0xff]
    %v91 = vld [vmem:[#allocation8 + $0x70] sm:$0xff]
    %v92 = vld [vmem:[#allocation8 + $0x78] sm:$0xff]
    %v93 = vld [vmem:[#allocation8 + $0x80] sm:$0xff]
    %v94 = vld [vmem:[#allocation8 + $0x88] sm:$0xff]
    %v95 = vld [vmem:[#allocation8 + $0x90] sm:$0xff]
    %v96 = vld [vmem:[#allocation8 + $0x98] sm:$0xff]
    %v97 = vld [vmem:[#allocation8 + $0xa0] sm:$0xff]
    %v98 = vld [vmem:[#allocation8 + $0xa8] sm:$0xff]
    %v99 = vld [vmem:[#allocation8 + $0xb0] sm:$0xff]
    %v100 = vld [vmem:[#allocation8 + $0xb8] sm:$0xff]
    %v101 = vld [vmem:[#allocation8 + $0xc0] sm:$0xff]
    %v102 = vld [vmem:[#allocation8 + $0xc8] sm:$0xff]
    %v103 = vld [vmem:[#allocation8 + $0xd0] sm:$0xff]
    %v104 = vld [vmem:[#allocation8 + $0xd8] sm:$0xff]
    %v105 = vld [vmem:[#allocation8 + $0xe0] sm:$0xff]
    %v106 = vld [vmem:[#allocation8 + $0xe8] sm:$0xff]
    %v107 = vld [vmem:[#allocation8 + $0xf0] sm:$0xff]
    %v108 = vld [vmem:[#allocation8 + $0xf8] sm:$0xff]
    %v109 = vld [vmem:[#allocation8 + $0x100] sm:$0xff]
    %v110 = vld [vmem:[#allocation8 + $0x108] sm:$0xff]
    %v111 = vld [vmem:[#allocation8 + $0x110] sm:$0xff]
    %v112 = vld [vmem:[#allocation8 + $0x118] sm:$0xff]
    %v113 = vld [vmem:[#allocation8 + $0x120] sm:$0xff]
    %v114 = vld [vmem:[#allocation8 + $0x128] sm:$0xff]
    %v115 = vld [vmem:[#allocation8 + $0x130] sm:$0xff]
    %v116 = vld [vmem:[#allocation8 + $0x138] sm:$0xff]
    %v117 = vld [vmem:[#allocation8 + $0x140] sm:$0xff]
    %v118 = vld [vmem:[#allocation8 + $0x148] sm:$0xff]
    %v119 = vld [vmem:[#allocation8 + $0x150] sm:$0xff]
    %v120 = vld [vmem:[#allocation8 + $0x158] sm:$0xff]
    %v121 = vld [vmem:[#allocation8 + $0x160] sm:$0xff]
    %v122 = vld [vmem:[#allocation8 + $0x168] sm:$0xff]
    %v123 = vld [vmem:[#allocation8 + $0x170] sm:$0xff]
    %v124 = vld [vmem:[#allocation8 + $0x178] sm:$0xff]
    %v125 = vld [vmem:[#allocation8 + $0x180] sm:$0xff]
    %v126 = vld [vmem:[#allocation8 + $0x188] sm:$0xff]
    %v127 = vld [vmem:[#allocation8 + $0x190] sm:$0xff]
    %v128 = vld [vmem:[#allocation8 + $0x198] sm:$0xff]
    %v129 = vld [vmem:[#allocation8 + $0x1a0] sm:$0xff]
    %v130 = vld [vmem:[#allocation8 + $0x1a8] sm:$0xff]
    %v131 = vld [vmem:[#allocation8 + $0x1b0] sm:$0xff]
    %v132 = vld [vmem:[#allocation8 + $0x1b8] sm:$0xff]
    %v133 = vld [vmem:[#allocation8 + $0x1c0] sm:$0xff]
    %v134 = vld [vmem:[#allocation8 + $0x1c8] sm:$0xff]
    %v135 = vld [vmem:[#allocation8 + $0x1d0] sm:$0xff]
    %v136 = vld [vmem:[#allocation8 + $0x1d8] sm:$0xff]
    %v137 = vld [vmem:[#allocation8 + $0x1e0] sm:$0xff]
    %v138 = vld [vmem:[#allocation8 + $0x1e8] sm:$0xff]
    %v139 = vld [vmem:[#allocation8 + $0x1f0] sm:$0xff]
    %v140 = vld [vmem:[#allocation8 + $0x1f8] sm:$0xff]
    %v141 = vld [vmem:[%s3] sm:$0xf]
    %v142 = vld [vmem:[%s0] sm:$0x3]
    %v143 = vld [vmem:[%s0 + $0x2] sm:$0x3]
    %v144 = vld [vmem:[%s0 + $0x4] sm:$0x3]
    %v145 = vld [vmem:[%s0 + $0x6] sm:$0x3]
    %v146 = vld [vmem:[%s0 + $0x8] sm:$0x3]
    %v147 = vld [vmem:[%s0 + $0xa] sm:$0x3]
    %v148 = vld [vmem:[%s0 + $0xc] sm:$0x3]
    %v149 = vld [vmem:[%s0 + $0xe] sm:$0x3]
    %v151 = vlaneseq
    %v152 = vshrl.u32 %v151, 7
    %v153 = vsub.s32 0, %v152
    %v154 = vrot.slane %v141, %v153
    %v155 = vlaneseq
    %v156 = vshrl.u32 %v155, 7
    %v157 = vsub.s32 1, %v156
    %v158 = vrot.slane %v141, %v157
    %v159 = vlaneseq
    %v160 = vshrl.u32 %v159, 7
    %v161 = vsub.s32 2, %v160
    %v162 = vrot.slane %v141, %v161
    %v163 = vlaneseq
    %v164 = vshrl.u32 %v163, 7
    %v165 = vsub.s32 3, %v164
    %v166 = vrot.slane %v141, %v165
    %v179 = vcombine.low %v142, %v143
    %v180 = vcombine.low %v144, %v145
    %v182 = vunpack.c.l.s4 1983009808
    %v183 = vunpack.c.0.s8 %v182
    %v184 = vlaneseq
    %v185 = vshrl.u32 %v184, 7
    %v186 = vsub.s32 %v183, %v185
    %v187 = vrot.slane %v179, %v186
    %v189 = vunpack.c.l.s4 1983009808
    %v190 = vunpack.c.0.s8 %v189
    %v191 = vlaneseq
    %v192 = vshrl.u32 %v191, 7
    %v193 = vsub.s32 %v190, %v192
    %v194 = vrot.slane %v180, %v193
    %v195 = vcombine.low %v187, %v194
    %v196 = vcombine.low %v146, %v147
    %v197 = vcombine.low %v148, %v149
    %v199 = vunpack.c.l.s4 1983009808
    %v200 = vunpack.c.0.s8 %v199
    %v201 = vlaneseq
    %v202 = vshrl.u32 %v201, 7
    %v203 = vsub.s32 %v200, %v202
    %v204 = vrot.slane %v196, %v203
    %v206 = vunpack.c.l.s4 1983009808
    %v207 = vunpack.c.0.s8 %v206
    %v208 = vlaneseq
    %v209 = vshrl.u32 %v208, 7
    %v210 = vsub.s32 %v207, %v209
    %v211 = vrot.slane %v197, %v210
    %v212 = vcombine.low %v204, %v211
    %v215 = vcombine.high %v75, %v75
    %v216 = vcombine.high %v76, %v76
    %vm217 = vcmask 31744
    %v218 = vsel %vm217, %v195, 0
    %v220 = vsel %vm217, %v212, 0
    %vm222 = vcmask 1043456
    %v223 = vsel %vm222, %v75, 0
    %v225 = vsel %vm222, %v215, 0
    %v227 = vsel %vm222, %v76, 0
    %v229 = vsel %vm222, %v216, 0
    %231 = vmatprep.subr.mxu0 %v225
    %232 = vmatpush1.msra.mxu0 %v223
    %233 = vmatprep.subr.mxu0 0.0
    %234 = vmatpush1.msra.mxu0 0.0
    %235 = vmatprep.subr.mxu0 0.0
    %236 = vmatpush1.msra.mxu0 0.0
    %237 = vmatprep.subr.mxu0 0.0
    %238 = vmatpush1.msra.mxu0 0.0
    %239 = vmatprep.subr.mxu0 0.0
    %240 = vmatpush1.msra.mxu0 0.0
    %241 = vmatprep.subr.mxu0 0.0
    %242 = vmatpush1.msra.mxu0 0.0
    %243 = vmatprep.subr.mxu0 0.0
    %244 = vmatpush1.msra.mxu0 0.0
    %245 = vmatprep.subr.mxu0 0.0
    %246 = vmatpush1.msra.mxu0 0.0
    %247 = vmatprep.subr.mxu0 0.0
    %248 = vmatpush1.msra.mxu0 0.0
    %249 = vmatprep.subr.mxu0 0.0
    %250 = vmatpush1.msra.mxu0 0.0
    %251 = vmatprep.subr.mxu0 0.0
    %252 = vmatpush1.msra.mxu0 0.0
    %253 = vmatprep.subr.mxu0 0.0
    %254 = vmatpush1.msra.mxu0 0.0
    %255 = vmatprep.subr.mxu0 0.0
    %256 = vmatpush1.msra.mxu0 0.0
    %257 = vmatprep.subr.mxu0 0.0
    %258 = vmatpush1.msra.mxu0 0.0
    %259 = vmatprep.subr.mxu0 0.0
    %260 = vmatpush1.msra.mxu0 0.0
    %261 = vmatprep.subr.mxu0 0.0
    %262 = vmatpush1.msra.mxu0 0.0
    %263 = vmatprep.subr.mxu0 0.0
    %264 = vmatpush1.msra.mxu0 0.0
    %265 = vmatprep.subr.mxu0 0.0
    %266 = vmatpush1.msra.mxu0 0.0
    %267 = vmatprep.subr.mxu0 0.0
    %268 = vmatpush1.msra.mxu0 0.0
    %269 = vmatprep.subr.mxu0 0.0
    %270 = vmatpush1.msra.mxu0 0.0
    %271 = vmatprep.subr.mxu0 0.0
    %272 = vmatpush1.msra.mxu0 0.0
    %273 = vmatprep.subr.mxu0 0.0
    %274 = vmatpush1.msra.mxu0 0.0
    %275 = vmatprep.subr.mxu0 0.0
    %276 = vmatpush1.msra.mxu0 0.0
    %277 = vmatprep.subr.mxu0 0.0
    %278 = vmatpush1.msra.mxu0 0.0
    %279 = vmatprep.subr.mxu0 0.0
    %280 = vmatpush1.msra.mxu0 0.0
    %281 = vmatprep.subr.mxu0 0.0
    %282 = vmatpush1.msra.mxu0 0.0
    %283 = vmatprep.subr.mxu0 0.0
    %284 = vmatpush1.msra.mxu0 0.0
    %285 = vmatprep.subr.mxu0 0.0
    %286 = vmatpush1.msra.mxu0 0.0
    %287 = vmatprep.subr.mxu0 0.0
    %288 = vmatpush1.msra.mxu0 0.0
    %289 = vmatprep.subr.mxu0 0.0
    %290 = vmatpush1.msra.mxu0 0.0
    %291 = vmatprep.subr.mxu0 0.0
    %292 = vmatpush1.msra.mxu0 0.0
    %293 = vmatprep.subr.mxu0 0.0
    %294 = vmatpush1.msra.mxu0 0.0
    %295 = vmatprep.mubr.f32.mxu0 0.0
    %296 = vmatmul.mubr.f32.gmra.mrb[0].mxu0 %v218
    %v297 = vpop.f32.mrb[0].mxu0
    %v298 = vadd.f32 %v154, %v297
    %v299 = vpop.f32.mrb[0].mxu0
    %v300 = vadd.f32 %v158, %v299
    %301 = vmatprep.mubr.f32.mxu0 0.0
    %302 = vmatmul.mubr.f32.gmra.mrb[0].mxu0 %v220
    %v303 = vpop.f32.mrb[0].mxu0
    %v304 = vadd.f32 %v154, %v303
    %v305 = vpop.f32.mrb[0].mxu0
    %v306 = vadd.f32 %v158, %v305
    %307 = vdwg.mxu0
    %308 = vmatprep.subr.mxu0 %v229
    %309 = vmatpush1.msra.mxu0 %v227
    %310 = vmatprep.subr.mxu0 0.0
    %311 = vmatpush1.msra.mxu0 0.0
    %312 = vmatprep.subr.mxu0 0.0
    %313 = vmatpush1.msra.mxu0 0.0
    %314 = vmatprep.subr.mxu0 0.0
    %315 = vmatpush1.msra.mxu0 0.0
    %316 = vmatprep.subr.mxu0 0.0
    %317 = vmatpush1.msra.mxu0 0.0
    %318 = vmatprep.subr.mxu0 0.0
    %319 = vmatpush1.msra.mxu0 0.0
    %320 = vmatprep.subr.mxu0 0.0
    %321 = vmatpush1.msra.mxu0 0.0
    %322 = vmatprep.subr.mxu0 0.0
    %323 = vmatpush1.msra.mxu0 0.0
    %324 = vmatprep.subr.mxu0 0.0
    %325 = vmatpush1.msra.mxu0 0.0
    %326 = vmatprep.subr.mxu0 0.0
    %327 = vmatpush1.msra.mxu0 0.0
    %328 = vmatprep.subr.mxu0 0.0
    %329 = vmatpush1.msra.mxu0 0.0
    %330 = vmatprep.subr.mxu0 0.0
    %331 = vmatpush1.msra.mxu0 0.0
    %332 = vmatprep.subr.mxu0 0.0
    %333 = vmatpush1.msra.mxu0 0.0
    %334 = vmatprep.subr.mxu0 0.0
    %335 = vmatpush1.msra.mxu0 0.0
    %336 = vmatprep.subr.mxu0 0.0
    %337 = vmatpush1.msra.mxu0 0.0
    %338 = vmatprep.subr.mxu0 0.0
    %339 = vmatpush1.msra.mxu0 0.0
    %340 = vmatprep.subr.mxu0 0.0
    %341 = vmatpush1.msra.mxu0 0.0
    %342 = vmatprep.subr.mxu0 0.0
    %343 = vmatpush1.msra.mxu0 0.0
    %344 = vmatprep.subr.mxu0 0.0
    %345 = vmatpush1.msra.mxu0 0.0
    %346 = vmatprep.subr.mxu0 0.0
    %347 = vmatpush1.msra.mxu0 0.0
    %348 = vmatprep.subr.mxu0 0.0
    %349 = vmatpush1.msra.mxu0 0.0
    %350 = vmatprep.subr.mxu0 0.0
    %351 = vmatpush1.msra.mxu0 0.0
    %352 = vmatprep.subr.mxu0 0.0
    %353 = vmatpush1.msra.mxu0 0.0
    %354 = vmatprep.subr.mxu0 0.0
    %355 = vmatpush1.msra.mxu0 0.0
    %356 = vmatprep.subr.mxu0 0.0
    %357 = vmatpush1.msra.mxu0 0.0
    %358 = vmatprep.subr.mxu0 0.0
    %359 = vmatpush1.msra.mxu0 0.0
    %360 = vmatprep.subr.mxu0 0.0
    %361 = vmatpush1.msra.mxu0 0.0
    %362 = vmatprep.subr.mxu0 0.0
    %363 = vmatpush1.msra.mxu0 0.0
    %364 = vmatprep.subr.mxu0 0.0
    %365 = vmatpush1.msra.mxu0 0.0
    %366 = vmatprep.subr.mxu0 0.0
    %367 = vmatpush1.msra.mxu0 0.0
    %368 = vmatprep.subr.mxu0 0.0
    %369 = vmatpush1.msra.mxu0 0.0
    %370 = vmatprep.subr.mxu0 0.0
    %371 = vmatpush1.msra.mxu0 0.0
    %372 = vmatprep.mubr.f32.mxu0 0.0
    %373 = vmatmul.mubr.f32.gmra.mrb[0].mxu0 %v218
    %v374 = vpop.f32.mrb[0].mxu0
    %v375 = vadd.f32 %v162, %v374
    %v376 = vpop.f32.mrb[0].mxu0
    %v377 = vadd.f32 %v166, %v376
    %378 = vmatprep.mubr.f32.mxu0 0.0
    %379 = vmatmul.mubr.f32.gmra.mrb[0].mxu0 %v220
    %v380 = vpop.f32.mrb[0].mxu0
    %v381 = vadd.f32 %v162, %v380
    %v382 = vpop.f32.mrb[0].mxu0
    %v383 = vadd.f32 %v166, %v382
    %384 = vdwg.mxu0
    %v393 = vcombine.low %v298, %v300
    %v394 = vcombine.high %v298, %v300
    %v395 = vcombine.low %v375, %v377
    %v396 = vcombine.high %v375, %v377
    %v398 = vunpack.c.l.s4 1983009808
    %v399 = vunpack.c.0.s8 %v398
    %v400 = vlaneseq
    %v401 = vshrl.u32 %v400, 7
    %v402 = vsub.s32 %v399, %v401
    %v403 = vrot.slane %v393, %v402
    %v405 = vunpack.c.l.s4 1983009808
    %v406 = vunpack.c.0.s8 %v405
    %v407 = vlaneseq
    %v408 = vshrl.u32 %v407, 7
    %v409 = vsub.s32 %v406, %v408
    %v410 = vrot.slane %v394, %v409
    %v412 = vunpack.c.l.s4 1983009808
    %v413 = vunpack.c.0.s8 %v412
    %v414 = vlaneseq
    %v415 = vshrl.u32 %v414, 7
    %v416 = vsub.s32 %v413, %v415
    %v417 = vrot.slane %v395, %v416
    %v419 = vunpack.c.l.s4 1983009808
    %v420 = vunpack.c.0.s8 %v419
    %v421 = vlaneseq
    %v422 = vshrl.u32 %v421, 7
    %v423 = vsub.s32 %v420, %v422
    %v424 = vrot.slane %v396, %v423
    %v425 = vcombine.low %v403, %v417
    %v426 = vcombine.high %v403, %v417
    %v427 = vcombine.low %v410, %v424
    %v428 = vcombine.high %v410, %v424
    %v429 = vcombine.low %v304, %v306
    %v430 = vcombine.high %v304, %v306
    %v431 = vcombine.low %v381, %v383
    %v432 = vcombine.high %v381, %v383
    %v434 = vunpack.c.l.s4 1983009808
    %v435 = vunpack.c.0.s8 %v434
    %v436 = vlaneseq
    %v437 = vshrl.u32 %v436, 7
    %v438 = vsub.s32 %v435, %v437
    %v439 = vrot.slane %v429, %v438
    %v441 = vunpack.c.l.s4 1983009808
    %v442 = vunpack.c.0.s8 %v441
    %v443 = vlaneseq
    %v444 = vshrl.u32 %v443, 7
    %v445 = vsub.s32 %v442, %v444
    %v446 = vrot.slane %v430, %v445
    %v448 = vunpack.c.l.s4 1983009808
    %v449 = vunpack.c.0.s8 %v448
    %v450 = vlaneseq
    %v451 = vshrl.u32 %v450, 7
    %v452 = vsub.s32 %v449, %v451
    %v453 = vrot.slane %v431, %v452
    %v455 = vunpack.c.l.s4 1983009808
    %v456 = vunpack.c.0.s8 %v455
    %v457 = vlaneseq
    %v458 = vshrl.u32 %v457, 7
    %v459 = vsub.s32 %v456, %v458
    %v460 = vrot.slane %v432, %v459
    %v461 = vcombine.low %v439, %v453
    %v462 = vcombine.high %v439, %v453
    %v463 = vcombine.low %v446, %v460
    %v464 = vcombine.high %v446, %v460
    %473 = vst [vmem:[#allocation4] sm:$0xff] %v425
    %474 = vst [vmem:[#allocation4 + $0x8] sm:$0xff] %v426
    %475 = vst [vmem:[#allocation4 + $0x10] sm:$0xff] %v427
    %476 = vst [vmem:[#allocation4 + $0x18] sm:$0xff] %v428
    %477 = vst [vmem:[#allocation4 + $0x20] sm:$0xff] %v461
    %478 = vst [vmem:[#allocation4 + $0x28] sm:$0xff] %v462
    %479 = vst [vmem:[#allocation4 + $0x30] sm:$0xff] %v463
    %480 = vst [vmem:[#allocation4 + $0x38] sm:$0xff] %v464
    %481 = vst [vmem:[#allocation5] sm:$0x3] 0.0
    %482 = vst [vmem:[#allocation6] sm:$0x3] 0.0
    %v483 = vld [vmem:[#allocation4] sm:$0xff]
    %v484 = vld [vmem:[#allocation5] sm:$0x3]
    %485 = vmatprep.subr.mxu0 %v78
    %486 = vmatpush1.msra.mxu0 %v77
    %487 = vmatprep.subr.mxu0 %v82
    %488 = vmatpush1.msra.mxu0 %v81
    %489 = vmatprep.subr.mxu0 %v86
    %490 = vmatpush1.msra.mxu0 %v85
    %491 = vmatprep.subr.mxu0 %v90
    %492 = vmatpush1.msra.mxu0 %v89
    %493 = vmatprep.subr.mxu0 %v94
    %494 = vmatpush1.msra.mxu0 %v93
    %495 = vmatprep.subr.mxu0 %v98
    %496 = vmatpush1.msra.mxu0 %v97
    %497 = vmatprep.subr.mxu0 %v102
    %498 = vmatpush1.msra.mxu0 %v101
    %499 = vmatprep.subr.mxu0 %v106
    %500 = vmatpush1.msra.mxu0 %v105
    %501 = vmatprep.subr.mxu0 %v110
    %502 = vmatpush1.msra.mxu0 %v109
    %503 = vmatprep.subr.mxu0 %v114
    %504 = vmatpush1.msra.mxu0 %v113
    %505 = vmatprep.subr.mxu0 %v118
    %506 = vmatpush1.msra.mxu0 %v117
    %507 = vmatprep.subr.mxu0 %v122
    %508 = vmatpush1.msra.mxu0 %v121
    %509 = vmatprep.subr.mxu0 %v126
    %510 = vmatpush1.msra.mxu0 %v125
    %511 = vmatprep.subr.mxu0 %v130
    %512 = vmatpush1.msra.mxu0 %v129
    %513 = vmatprep.subr.mxu0 %v134
    %514 = vmatpush1.msra.mxu0 %v133
    %515 = vmatprep.subr.mxu0 %v138
    %516 = vmatpush1.msra.mxu0 %v137
    %517 = vmatprep.subr.mxu0 0.0
    %518 = vmatpush1.msra.mxu0 0.0
    %519 = vmatprep.subr.mxu0 0.0
    %520 = vmatpush1.msra.mxu0 0.0
    %521 = vmatprep.subr.mxu0 0.0
    %522 = vmatpush1.msra.mxu0 0.0
    %523 = vmatprep.subr.mxu0 0.0
    %524 = vmatpush1.msra.mxu0 0.0
    %525 = vmatprep.subr.mxu0 0.0
    %526 = vmatpush1.msra.mxu0 0.0
    %527 = vmatprep.subr.mxu0 0.0
    %528 = vmatpush1.msra.mxu0 0.0
    %529 = vmatprep.subr.mxu0 0.0
    %530 = vmatpush1.msra.mxu0 0.0
    %531 = vmatprep.subr.mxu0 0.0
    %532 = vmatpush1.msra.mxu0 0.0
    %533 = vmatprep.subr.mxu0 0.0
    %534 = vmatpush1.msra.mxu0 0.0
    %535 = vmatprep.subr.mxu0 0.0
    %536 = vmatpush1.msra.mxu0 0.0
    %537 = vmatprep.subr.mxu0 0.0
    %538 = vmatpush1.msra.mxu0 0.0
    %539 = vmatprep.subr.mxu0 0.0
    %540 = vmatpush1.msra.mxu0 0.0
    %541 = vmatprep.subr.mxu0 0.0
    %542 = vmatpush1.msra.mxu0 0.0
    %543 = vmatprep.subr.mxu0 0.0
    %544 = vmatpush1.msra.mxu0 0.0
    %545 = vmatprep.subr.mxu0 0.0
    %546 = vmatpush1.msra.mxu0 0.0
    %547 = vmatprep.subr.mxu0 0.0
    %548 = vmatpush1.msra.mxu0 0.0
    %549 = vmatprep.mubr.f32.mxu0 0.0
    %550 = vmatmul.mubr.f32.gmra.mrb[0].mxu0 %v484
    %v551 = vpop.f32.mrb[0].mxu0
    %v552 = vadd.f32 0.0, %v551
    %v553 = vpop.f32.mrb[0].mxu0
    %v554 = vadd.f32 0.0, %v553
    %555 = vdwg.mxu0
    %556 = vmatprep.subr.mxu0 %v80
    %557 = vmatpush1.msra.mxu0 %v79
    %558 = vmatprep.subr.mxu0 %v84
    %559 = vmatpush1.msra.mxu0 %v83
    %560 = vmatprep.subr.mxu0 %v88
    %561 = vmatpush1.msra.mxu0 %v87
    %562 = vmatprep.subr.mxu0 %v92
    %563 = vmatpush1.msra.mxu0 %v91
    %564 = vmatprep.subr.mxu0 %v96
    %565 = vmatpush1.msra.mxu0 %v95
    %566 = vmatprep.subr.mxu0 %v100
    %567 = vmatpush1.msra.mxu0 %v99
    %568 = vmatprep.subr.mxu0 %v104
    %569 = vmatpush1.msra.mxu0 %v103
    %570 = vmatprep.subr.mxu0 %v108
    %571 = vmatpush1.msra.mxu0 %v107
    %572 = vmatprep.subr.mxu0 %v112
    %573 = vmatpush1.msra.mxu0 %v111
    %574 = vmatprep.subr.mxu0 %v116
    %575 = vmatpush1.msra.mxu0 %v115
    %576 = vmatprep.subr.mxu0 %v120
    %577 = vmatpush1.msra.mxu0 %v119
    %578 = vmatprep.subr.mxu0 %v124
    %579 = vmatpush1.msra.mxu0 %v123
    %580 = vmatprep.subr.mxu0 %v128
    %581 = vmatpush1.msra.mxu0 %v127
    %582 = vmatprep.subr.mxu0 %v132
    %583 = vmatpush1.msra.mxu0 %v131
    %584 = vmatprep.subr.mxu0 %v136
    %585 = vmatpush1.msra.mxu0 %v135
    %586 = vmatprep.subr.mxu0 %v140
    %587 = vmatpush1.msra.mxu0 %v139
    %588 = vmatprep.subr.mxu0 0.0
    %589 = vmatpush1.msra.mxu0 0.0
    %590 = vmatprep.subr.mxu0 0.0
    %591 = vmatpush1.msra.mxu0 0.0
    %592 = vmatprep.subr.mxu0 0.0
    %593 = vmatpush1.msra.mxu0 0.0
    %594 = vmatprep.subr.mxu0 0.0
    %595 = vmatpush1.msra.mxu0 0.0
    %596 = vmatprep.subr.mxu0 0.0
    %597 = vmatpush1.msra.mxu0 0.0
    %598 = vmatprep.subr.mxu0 0.0
    %599 = vmatpush1.msra.mxu0 0.0
    %600 = vmatprep.subr.mxu0 0.0
    %601 = vmatpush1.msra.mxu0 0.0
    %602 = vmatprep.subr.mxu0 0.0
    %603 = vmatpush1.msra.mxu0 0.0
    %604 = vmatprep.subr.mxu0 0.0
    %605 = vmatpush1.msra.mxu0 0.0
    %606 = vmatprep.subr.mxu0 0.0
    %607 = vmatpush1.msra.mxu0 0.0
    %608 = vmatprep.subr.mxu0 0.0
    %609 = vmatpush1.msra.mxu0 0.0
    %610 = vmatprep.subr.mxu0 0.0
    %611 = vmatpush1.msra.mxu0 0.0
    %612 = vmatprep.subr.mxu0 0.0
    %613 = vmatpush1.msra.mxu0 0.0
    %614 = vmatprep.subr.mxu0 0.0
    %615 = vmatpush1.msra.mxu0 0.0
    %616 = vmatprep.subr.mxu0 0.0
    %617 = vmatpush1.msra.mxu0 0.0
    %618 = vmatprep.subr.mxu0 0.0
    %619 = vmatpush1.msra.mxu0 0.0
    %620 = vmatprep.mubr.f32.mxu0 0.0
    %621 = vmatmul.mubr.f32.gmra.mrb[0].mxu0 %v484
    %v622 = vpop.f32.mrb[0].mxu0
    %v623 = vadd.f32 0.0, %v622
    %v624 = vpop.f32.mrb[0].mxu0
    %v625 = vadd.f32 0.0, %v624
    %626 = vdwg.mxu0
    %v631 = vcombine.low %v552, %v554
    %v632 = vcombine.low %v623, %v625
    %v634 = vunpack.c.l.s4 1983009808
    %v635 = vunpack.c.0.s8 %v634
    %v636 = vlaneseq
    %v637 = vshrl.u32 %v636, 7
    %v638 = vsub.s32 %v635, %v637
    %v639 = vrot.slane %v631, %v638
    %v641 = vunpack.c.l.s4 1983009808
    %v642 = vunpack.c.0.s8 %v641
    %v643 = vlaneseq
    %v644 = vshrl.u32 %v643, 7
    %v645 = vsub.s32 %v642, %v644
    %v646 = vrot.slane %v632, %v645
    %v647 = vcombine.low %v639, %v646
    %v649 = vadd.f32 %v483, %v647
    %v650 = vxor.u32 %v649, 2147483648
    %v651 = vmul.f32 %v650, 1.442695
    %v652 = vpow.pop %v651
    %v653 = vadd.f32 %v652, 1.0
    %v654 = vrcp.pop %v653
    %v655 = vmul.f32 1.0, %v654
    %v657 = vrot.slane %v649, 2
    %v659 = vxor.u32 %v657, 2147483648
    %v660 = vmul.f32 %v659, 1.442695
    %v661 = vpow.pop %v660
    %v662 = vadd.f32 %v661, 1.0
    %v663 = vrcp.pop %v662
    %v664 = vmul.f32 1.0, %v663
    %v665 = vrot.slane %v649, 4
    %v667 = vtanh.pop %v665
    %v668 = vrot.slane %v649, 6
    %v670 = vxor.u32 %v668, 2147483648
    %v671 = vmul.f32 %v670, 1.442695
    %v672 = vpow.pop %v671
    %v673 = vadd.f32 %v672, 1.0
    %v674 = vrcp.pop %v673
    %v675 = vmul.f32 1.0, %v674
    %v676 = vld [vmem:[#allocation6] sm:$0x3]
    %v677 = vmul.f32 %v664, %v676
    %v678 = vmul.f32 %v655, %v667
    %v679 = vadd.f32 %v677, %v678
    %v680 = vtanh.pop %v679
    %v681 = vmul.f32 %v675, %v680
    %682 = vst [vmem:[#allocation6] sm:$0x3] %v679
    %683 = vst [vmem:[#allocation5] sm:$0x3] %v681
    %684 = vst [vmem:[#allocation2] sm:$0x3] %v681
    %s685 = scalar_lea.vmem [#allocation4], 8
    %v686 = vld [vmem:[%s685] sm:$0xff]
    %v687 = vld [vmem:[#allocation5] sm:$0x3]
    %688 = vmatprep.subr.mxu0 %v78
    %689 = vmatpush1.msra.mxu0 %v77
    %690 = vmatprep.subr.mxu0 %v82
    %691 = vmatpush1.msra.mxu0 %v81
    %692 = vmatprep.subr.mxu0 %v86
    %693 = vmatpush1.msra.mxu0 %v85
    %694 = vmatprep.subr.mxu0 %v90
    %695 = vmatpush1.msra.mxu0 %v89
    %696 = vmatprep.subr.mxu0 %v94
    %697 = vmatpush1.msra.mxu0 %v93
    %698 = vmatprep.subr.mxu0 %v98
    %699 = vmatpush1.msra.mxu0 %v97
    %700 = vmatprep.subr.mxu0 %v102
    %701 = vmatpush1.msra.mxu0 %v101
    %702 = vmatprep.subr.mxu0 %v106
    %703 = vmatpush1.msra.mxu0 %v105
    %704 = vmatprep.subr.mxu0 %v110
    %705 = vmatpush1.msra.mxu0 %v109
    %706 = vmatprep.subr.mxu0 %v114
    %707 = vmatpush1.msra.mxu0 %v113
    %708 = vmatprep.subr.mxu0 %v118
    %709 = vmatpush1.msra.mxu0 %v117
    %710 = vmatprep.subr.mxu0 %v122
    %711 = vmatpush1.msra.mxu0 %v121
    %712 = vmatprep.subr.mxu0 %v126
    %713 = vmatpush1.msra.mxu0 %v125
    %714 = vmatprep.subr.mxu0 %v130
    %715 = vmatpush1.msra.mxu0 %v129
    %716 = vmatprep.subr.mxu0 %v134
    %717 = vmatpush1.msra.mxu0 %v133
    %718 = vmatprep.subr.mxu0 %v138
    %719 = vmatpush1.msra.mxu0 %v137
    %720 = vmatprep.subr.mxu0 0.0
    %721 = vmatpush1.msra.mxu0 0.0
    %722 = vmatprep.subr.mxu0 0.0
    %723 = vmatpush1.msra.mxu0 0.0
    %724 = vmatprep.subr.mxu0 0.0
    %725 = vmatpush1.msra.mxu0 0.0
    %726 = vmatprep.subr.mxu0 0.0
    %727 = vmatpush1.msra.mxu0 0.0
    %728 = vmatprep.subr.mxu0 0.0
    %729 = vmatpush1.msra.mxu0 0.0
    %730 = vmatprep.subr.mxu0 0.0
    %731 = vmatpush1.msra.mxu0 0.0
    %732 = vmatprep.subr.mxu0 0.0
    %733 = vmatpush1.msra.mxu0 0.0
    %734 = vmatprep.subr.mxu0 0.0
    %735 = vmatpush1.msra.mxu0 0.0
    %736 = vmatprep.subr.mxu0 0.0
    %737 = vmatpush1.msra.mxu0 0.0
    %738 = vmatprep.subr.mxu0 0.0
    %739 = vmatpush1.msra.mxu0 0.0
    %740 = vmatprep.subr.mxu0 0.0
    %741 = vmatpush1.msra.mxu0 0.0
    %742 = vmatprep.subr.mxu0 0.0
    %743 = vmatpush1.msra.mxu0 0.0
    %744 = vmatprep.subr.mxu0 0.0
    %745 = vmatpush1.msra.mxu0 0.0
    %746 = vmatprep.subr.mxu0 0.0
    %747 = vmatpush1.msra.mxu0 0.0
    %748 = vmatprep.subr.mxu0 0.0
    %749 = vmatpush1.msra.mxu0 0.0
    %750 = vmatprep.subr.mxu0 0.0
    %751 = vmatpush1.msra.mxu0 0.0
    %752 = vmatprep.mubr.f32.mxu0 0.0
    %753 = vmatmul.mubr.f32.gmra.mrb[0].mxu0 %v687
    %v754 = vpop.f32.mrb[0].mxu0
    %v755 = vadd.f32 0.0, %v754
    %v756 = vpop.f32.mrb[0].mxu0
    %v757 = vadd.f32 0.0, %v756
    %758 = vdwg.mxu0
    %759 = vmatprep.subr.mxu0 %v80
    %760 = vmatpush1.msra.mxu0 %v79
    %761 = vmatprep.subr.mxu0 %v84
    %762 = vmatpush1.msra.mxu0 %v83
    %763 = vmatprep.subr.mxu0 %v88
    %764 = vmatpush1.msra.mxu0 %v87
    %765 = vmatprep.subr.mxu0 %v92
    %766 = vmatpush1.msra.mxu0 %v91
    %767 = vmatprep.subr.mxu0 %v96
    %768 = vmatpush1.msra.mxu0 %v95
    %769 = vmatprep.subr.mxu0 %v100
    %770 = vmatpush1.msra.mxu0 %v99
    %771 = vmatprep.subr.mxu0 %v104
    %772 = vmatpush1.msra.mxu0 %v103
    %773 = vmatprep.subr.mxu0 %v108
    %774 = vmatpush1.msra.mxu0 %v107
    %775 = vmatprep.subr.mxu0 %v112
    %776 = vmatpush1.msra.mxu0 %v111
    %777 = vmatprep.subr.mxu0 %v116
    %778 = vmatpush1.msra.mxu0 %v115
    %779 = vmatprep.subr.mxu0 %v120
    %780 = vmatpush1.msra.mxu0 %v119
    %781 = vmatprep.subr.mxu0 %v124
    %782 = vmatpush1.msra.mxu0 %v123
    %783 = vmatprep.subr.mxu0 %v128
    %784 = vmatpush1.msra.mxu0 %v127
    %785 = vmatprep.subr.mxu0 %v132
    %786 = vmatpush1.msra.mxu0 %v131
    %787 = vmatprep.subr.mxu0 %v136
    %788 = vmatpush1.msra.mxu0 %v135
    %789 = vmatprep.subr.mxu0 %v140
    %790 = vmatpush1.msra.mxu0 %v139
    %791 = vmatprep.subr.mxu0 0.0
    %792 = vmatpush1.msra.mxu0 0.0
    %793 = vmatprep.subr.mxu0 0.0
    %794 = vmatpush1.msra.mxu0 0.0
    %795 = vmatprep.subr.mxu0 0.0
    %796 = vmatpush1.msra.mxu0 0.0
    %797 = vmatprep.subr.mxu0 0.0
    %798 = vmatpush1.msra.mxu0 0.0
    %799 = vmatprep.subr.mxu0 0.0
    %800 = vmatpush1.msra.mxu0 0.0
    %801 = vmatprep.subr.mxu0 0.0
    %802 = vmatpush1.msra.mxu0 0.0
    %803 = vmatprep.subr.mxu0 0.0
    %804 = vmatpush1.msra.mxu0 0.0
    %805 = vmatprep.subr.mxu0 0.0
    %806 = vmatpush1.msra.mxu0 0.0
    %807 = vmatprep.subr.mxu0 0.0
    %808 = vmatpush1.msra.mxu0 0.0
    %809 = vmatprep.subr.mxu0 0.0
    %810 = vmatpush1.msra.mxu0 0.0
    %811 = vmatprep.subr.mxu0 0.0
    %812 = vmatpush1.msra.mxu0 0.0
    %813 = vmatprep.subr.mxu0 0.0
    %814 = vmatpush1.msra.mxu0 0.0
    %815 = vmatprep.subr.mxu0 0.0
    %816 = vmatpush1.msra.mxu0 0.0
    %817 = vmatprep.subr.mxu0 0.0
    %818 = vmatpush1.msra.mxu0 0.0
    %819 = vmatprep.subr.mxu0 0.0
    %820 = vmatpush1.msra.mxu0 0.0
    %821 = vmatprep.subr.mxu0 0.0
    %822 = vmatpush1.msra.mxu0 0.0
    %823 = vmatprep.mubr.f32.mxu0 0.0
    %824 = vmatmul.mubr.f32.gmra.mrb[0].mxu0 %v687
    %v825 = vpop.f32.mrb[0].mxu0
    %v826 = vadd.f32 0.0, %v825
    %v827 = vpop.f32.mrb[0].mxu0
    %v828 = vadd.f32 0.0, %v827
    %829 = vdwg.mxu0
    %v834 = vcombine.low %v755, %v757
    %v835 = vcombine.low %v826, %v828
    %v837 = vunpack.c.l.s4 1983009808
    %v838 = vunpack.c.0.s8 %v837
    %v839 = vlaneseq
    %v840 = vshrl.u32 %v839, 7
    %v841 = vsub.s32 %v838, %v840
    %v842 = vrot.slane %v834, %v841
    %v844 = vunpack.c.l.s4 1983009808
    %v845 = vunpack.c.0.s8 %v844
    %v846 = vlaneseq
    %v847 = vshrl.u32 %v846, 7
    %v848 = vsub.s32 %v845, %v847
    %v849 = vrot.slane %v835, %v848
    %v850 = vcombine.low %v842, %v849
    %v852 = vadd.f32 %v686, %v850
    %v853 = vxor.u32 %v852, 2147483648
    %v854 = vmul.f32 %v853, 1.442695
    %v855 = vpow.pop %v854
    %v856 = vadd.f32 %v855, 1.0
    %v857 = vrcp.pop %v856
    %v858 = vmul.f32 1.0, %v857
    %v860 = vrot.slane %v852, 2
    %v862 = vxor.u32 %v860, 2147483648
    %v863 = vmul.f32 %v862, 1.442695
    %v864 = vpow.pop %v863
    %v865 = vadd.f32 %v864, 1.0
    %v866 = vrcp.pop %v865
    %v867 = vmul.f32 1.0, %v866
    %v868 = vrot.slane %v852, 4
    %v870 = vtanh.pop %v868
    %v871 = vrot.slane %v852, 6
    %v873 = vxor.u32 %v871, 2147483648
    %v874 = vmul.f32 %v873, 1.442695
    %v875 = vpow.pop %v874
    %v876 = vadd.f32 %v875, 1.0
    %v877 = vrcp.pop %v876
    %v878 = vmul.f32 1.0, %v877
    %v879 = vld [vmem:[#allocation6] sm:$0x3]
    %v880 = vmul.f32 %v867, %v879
    %v881 = vmul.f32 %v858, %v870
    %v882 = vadd.f32 %v880, %v881
    %v883 = vtanh.pop %v882
    %v884 = vmul.f32 %v878, %v883
    %885 = vst [vmem:[#allocation6] sm:$0x3] %v882
    %886 = vst [vmem:[#allocation5] sm:$0x3] %v884
    %s887 = scalar_lea.vmem [#allocation2], 2
    %888 = vst [vmem:[%s887] sm:$0x3] %v884
    %s889 = scalar_lea.vmem [#allocation4], 16
    %v890 = vld [vmem:[%s889] sm:$0xff]
    %v891 = vld [vmem:[#allocation5] sm:$0x3]
    %892 = vmatprep.subr.mxu0 %v78
    %893 = vmatpush1.msra.mxu0 %v77
    %894 = vmatprep.subr.mxu0 %v82
    %895 = vmatpush1.msra.mxu0 %v81
    %896 = vmatprep.subr.mxu0 %v86
    %897 = vmatpush1.msra.mxu0 %v85
    %898 = vmatprep.subr.mxu0 %v90
    %899 = vmatpush1.msra.mxu0 %v89
    %900 = vmatprep.subr.mxu0 %v94
    %901 = vmatpush1.msra.mxu0 %v93
    %902 = vmatprep.subr.mxu0 %v98
    %903 = vmatpush1.msra.mxu0 %v97
    %904 = vmatprep.subr.mxu0 %v102
    %905 = vmatpush1.msra.mxu0 %v101
    %906 = vmatprep.subr.mxu0 %v106
    %907 = vmatpush1.msra.mxu0 %v105
    %908 = vmatprep.subr.mxu0 %v110
    %909 = vmatpush1.msra.mxu0 %v109
    %910 = vmatprep.subr.mxu0 %v114
    %911 = vmatpush1.msra.mxu0 %v113
    %912 = vmatprep.subr.mxu0 %v118
    %913 = vmatpush1.msra.mxu0 %v117
    %914 = vmatprep.subr.mxu0 %v122
    %915 = vmatpush1.msra.mxu0 %v121
    %916 = vmatprep.subr.mxu0 %v126
    %917 = vmatpush1.msra.mxu0 %v125
    %918 = vmatprep.subr.mxu0 %v130
    %919 = vmatpush1.msra.mxu0 %v129
    %920 = vmatprep.subr.mxu0 %v134
    %921 = vmatpush1.msra.mxu0 %v133
    %922 = vmatprep.subr.mxu0 %v138
    %923 = vmatpush1.msra.mxu0 %v137
    %924 = vmatprep.subr.mxu0 0.0
    %925 = vmatpush1.msra.mxu0 0.0
    %926 = vmatprep.subr.mxu0 0.0
    %927 = vmatpush1.msra.mxu0 0.0
    %928 = vmatprep.subr.mxu0 0.0
    %929 = vmatpush1.msra.mxu0 0.0
    %930 = vmatprep.subr.mxu0 0.0
    %931 = vmatpush1.msra.mxu0 0.0
    %932 = vmatprep.subr.mxu0 0.0
    %933 = vmatpush1.msra.mxu0 0.0
    %934 = vmatprep.subr.mxu0 0.0
    %935 = vmatpush1.msra.mxu0 0.0
    %936 = vmatprep.subr.mxu0 0.0
    %937 = vmatpush1.msra.mxu0 0.0
    %938 = vmatprep.subr.mxu0 0.0
    %939 = vmatpush1.msra.mxu0 0.0
    %940 = vmatprep.subr.mxu0 0.0
    %941 = vmatpush1.msra.mxu0 0.0
    %942 = vmatprep.subr.mxu0 0.0
    %943 = vmatpush1.msra.mxu0 0.0
    %944 = vmatprep.subr.mxu0 0.0
    %945 = vmatpush1.msra.mxu0 0.0
    %946 = vmatprep.subr.mxu0 0.0
    %947 = vmatpush1.msra.mxu0 0.0
    %948 = vmatprep.subr.mxu0 0.0
    %949 = vmatpush1.msra.mxu0 0.0
    %950 = vmatprep.subr.mxu0 0.0
    %951 = vmatpush1.msra.mxu0 0.0
    %952 = vmatprep.subr.mxu0 0.0
    %953 = vmatpush1.msra.mxu0 0.0
    %954 = vmatprep.subr.mxu0 0.0
    %955 = vmatpush1.msra.mxu0 0.0
    %956 = vmatprep.mubr.f32.mxu0 0.0
    %957 = vmatmul.mubr.f32.gmra.mrb[0].mxu0 %v891
    %v958 = vpop.f32.mrb[0].mxu0
    %v959 = vadd.f32 0.0, %v958
    %v960 = vpop.f32.mrb[0].mxu0
    %v961 = vadd.f32 0.0, %v960
    %962 = vdwg.mxu0
    %963 = vmatprep.subr.mxu0 %v80
    %964 = vmatpush1.msra.mxu0 %v79
    %965 = vmatprep.subr.mxu0 %v84
    %966 = vmatpush1.msra.mxu0 %v83
    %967 = vmatprep.subr.mxu0 %v88
    %968 = vmatpush1.msra.mxu0 %v87
    %969 = vmatprep.subr.mxu0 %v92
    %970 = vmatpush1.msra.mxu0 %v91
    %971 = vmatprep.subr.mxu0 %v96
    %972 = vmatpush1.msra.mxu0 %v95
    %973 = vmatprep.subr.mxu0 %v100
    %974 = vmatpush1.msra.mxu0 %v99
    %975 = vmatprep.subr.mxu0 %v104
    %976 = vmatpush1.msra.mxu0 %v103
    %977 = vmatprep.subr.mxu0 %v108
    %978 = vmatpush1.msra.mxu0 %v107
    %979 = vmatprep.subr.mxu0 %v112
    %980 = vmatpush1.msra.mxu0 %v111
    %981 = vmatprep.subr.mxu0 %v116
    %982 = vmatpush1.msra.mxu0 %v115
    %983 = vmatprep.subr.mxu0 %v120
    %984 = vmatpush1.msra.mxu0 %v119
    %985 = vmatprep.subr.mxu0 %v124
    %986 = vmatpush1.msra.mxu0 %v123
    %987 = vmatprep.subr.mxu0 %v128
    %988 = vmatpush1.msra.mxu0 %v127
    %989 = vmatprep.subr.mxu0 %v132
    %990 = vmatpush1.msra.mxu0 %v131
    %991 = vmatprep.subr.mxu0 %v136
    %992 = vmatpush1.msra.mxu0 %v135
    %993 = vmatprep.subr.mxu0 %v140
    %994 = vmatpush1.msra.mxu0 %v139
    %995 = vmatprep.subr.mxu0 0.0
    %996 = vmatpush1.msra.mxu0 0.0
    %997 = vmatprep.subr.mxu0 0.0
    %998 = vmatpush1.msra.mxu0 0.0
    %999 = vmatprep.subr.mxu0 0.0
    %1000 = vmatpush1.msra.mxu0 0.0
    %1001 = vmatprep.subr.mxu0 0.0
    %1002 = vmatpush1.msra.mxu0 0.0
    %1003 = vmatprep.subr.mxu0 0.0
    %1004 = vmatpush1.msra.mxu0 0.0
    %1005 = vmatprep.subr.mxu0 0.0
    %1006 = vmatpush1.msra.mxu0 0.0
    %1007 = vmatprep.subr.mxu0 0.0
    %1008 = vmatpush1.msra.mxu0 0.0
    %1009 = vmatprep.subr.mxu0 0.0
    %1010 = vmatpush1.msra.mxu0 0.0
    %1011 = vmatprep.subr.mxu0 0.0
    %1012 = vmatpush1.msra.mxu0 0.0
    %1013 = vmatprep.subr.mxu0 0.0
    %1014 = vmatpush1.msra.mxu0 0.0
    %1015 = vmatprep.subr.mxu0 0.0
    %1016 = vmatpush1.msra.mxu0 0.0
    %1017 = vmatprep.subr.mxu0 0.0
    %1018 = vmatpush1.msra.mxu0 0.0
    %1019 = vmatprep.subr.mxu0 0.0
    %1020 = vmatpush1.msra.mxu0 0.0
    %1021 = vmatprep.subr.mxu0 0.0
    %1022 = vmatpush1.msra.mxu0 0.0
    %1023 = vmatprep.subr.mxu0 0.0
    %1024 = vmatpush1.msra.mxu0 0.0
    %1025 = vmatprep.subr.mxu0 0.0
    %1026 = vmatpush1.msra.mxu0 0.0
    %1027 = vmatprep.mubr.f32.mxu0 0.0
    %1028 = vmatmul.mubr.f32.gmra.mrb[0].mxu0 %v891
    %v1029 = vpop.f32.mrb[0].mxu0
    %v1030 = vadd.f32 0.0, %v1029
    %v1031 = vpop.f32.mrb[0].mxu0
    %v1032 = vadd.f32 0.0, %v1031
    %1033 = vdwg.mxu0
    %v1038 = vcombine.low %v959, %v961
    %v1039 = vcombine.low %v1030, %v1032
    %v1041 = vunpack.c.l.s4 1983009808
    %v1042 = vunpack.c.0.s8 %v1041
    %v1043 = vlaneseq
    %v1044 = vshrl.u32 %v1043, 7
    %v1045 = vsub.s32 %v1042, %v1044
    %v1046 = vrot.slane %v1038, %v1045
    %v1048 = vunpack.c.l.s4 1983009808
    %v1049 = vunpack.c.0.s8 %v1048
    %v1050 = vlaneseq
    %v1051 = vshrl.u32 %v1050, 7
    %v1052 = vsub.s32 %v1049, %v1051
    %v1053 = vrot.slane %v1039, %v1052
    %v1054 = vcombine.low %v1046, %v1053
    %v1056 = vadd.f32 %v890, %v1054
    %v1057 = vxor.u32 %v1056, 2147483648
    %v1058 = vmul.f32 %v1057, 1.442695
    %v1059 = vpow.pop %v1058
    %v1060 = vadd.f32 %v1059, 1.0
    %v1061 = vrcp.pop %v1060
    %v1062 = vmul.f32 1.0, %v1061
    %v1064 = vrot.slane %v1056, 2
    %v1066 = vxor.u32 %v1064, 2147483648
    %v1067 = vmul.f32 %v1066, 1.442695
    %v1068 = vpow.pop %v1067
    %v1069 = vadd.f32 %v1068, 1.0
    %v1070 = vrcp.pop %v1069
    %v1071 = vmul.f32 1.0, %v1070
    %v1072 = vrot.slane %v1056, 4
    %v1074 = vtanh.pop %v1072
    %v1075 = vrot.slane %v1056, 6
    %v1077 = vxor.u32 %v1075, 2147483648
    %v1078 = vmul.f32 %v1077, 1.442695
    %v1079 = vpow.pop %v1078
    %v1080 = vadd.f32 %v1079, 1.0
    %v1081 = vrcp.pop %v1080
    %v1082 = vmul.f32 1.0, %v1081
    %v1083 = vld [vmem:[#allocation6] sm:$0x3]
    %v1084 = vmul.f32 %v1071, %v1083
    %v1085 = vmul.f32 %v1062, %v1074
    %v1086 = vadd.f32 %v1084, %v1085
    %v1087 = vtanh.pop %v1086
    %v1088 = vmul.f32 %v1082, %v1087
    %1089 = vst [vmem:[#allocation6] sm:$0x3] %v1086
    %1090 = vst [vmem:[#allocation5] sm:$0x3] %v1088
    %s1091 = scalar_lea.vmem [#allocation2], 4
    %1092 = vst [vmem:[%s1091] sm:$0x3] %v1088
    %s1093 = scalar_lea.vmem [#allocation4], 24
    %v1094 = vld [vmem:[%s1093] sm:$0xff]
    %v1095 = vld [vmem:[#allocation5] sm:$0x3]
    %1096 = vmatprep.subr.mxu0 %v78
    %1097 = vmatpush1.msra.mxu0 %v77
    %1098 = vmatprep.subr.mxu0 %v82
    %1099 = vmatpush1.msra.mxu0 %v81
    %1100 = vmatprep.subr.mxu0 %v86
    %1101 = vmatpush1.msra.mxu0 %v85
    %1102 = vmatprep.subr.mxu0 %v90
    %1103 = vmatpush1.msra.mxu0 %v89
    %1104 = vmatprep.subr.mxu0 %v94
    %1105 = vmatpush1.msra.mxu0 %v93
    %1106 = vmatprep.subr.mxu0 %v98
    %1107 = vmatpush1.msra.mxu0 %v97
    %1108 = vmatprep.subr.mxu0 %v102
    %1109 = vmatpush1.msra.mxu0 %v101
    %1110 = vmatprep.subr.mxu0 %v106
    %1111 = vmatpush1.msra.mxu0 %v105
    %1112 = vmatprep.subr.mxu0 %v110
    %1113 = vmatpush1.msra.mxu0 %v109
    %1114 = vmatprep.subr.mxu0 %v114
    %1115 = vmatpush1.msra.mxu0 %v113
    %1116 = vmatprep.subr.mxu0 %v118
    %1117 = vmatpush1.msra.mxu0 %v117
    %1118 = vmatprep.subr.mxu0 %v122
    %1119 = vmatpush1.msra.mxu0 %v121
    %1120 = vmatprep.subr.mxu0 %v126
    %1121 = vmatpush1.msra.mxu0 %v125
    %1122 = vmatprep.subr.mxu0 %v130
    %1123 = vmatpush1.msra.mxu0 %v129
    %1124 = vmatprep.subr.mxu0 %v134
    %1125 = vmatpush1.msra.mxu0 %v133
    %1126 = vmatprep.subr.mxu0 %v138
    %1127 = vmatpush1.msra.mxu0 %v137
    %1128 = vmatprep.subr.mxu0 0.0
    %1129 = vmatpush1.msra.mxu0 0.0
    %1130 = vmatprep.subr.mxu0 0.0
    %1131 = vmatpush1.msra.mxu0 0.0
    %1132 = vmatprep.subr.mxu0 0.0
    %1133 = vmatpush1.msra.mxu0 0.0
    %1134 = vmatprep.subr.mxu0 0.0
    %1135 = vmatpush1.msra.mxu0 0.0
    %1136 = vmatprep.subr.mxu0 0.0
    %1137 = vmatpush1.msra.mxu0 0.0
    %1138 = vmatprep.subr.mxu0 0.0
    %1139 = vmatpush1.msra.mxu0 0.0
    %1140 = vmatprep.subr.mxu0 0.0
    %1141 = vmatpush1.msra.mxu0 0.0
    %1142 = vmatprep.subr.mxu0 0.0
    %1143 = vmatpush1.msra.mxu0 0.0
    %1144 = vmatprep.subr.mxu0 0.0
    %1145 = vmatpush1.msra.mxu0 0.0
    %1146 = vmatprep.subr.mxu0 0.0
    %1147 = vmatpush1.msra.mxu0 0.0
    %1148 = vmatprep.subr.mxu0 0.0
    %1149 = vmatpush1.msra.mxu0 0.0
    %1150 = vmatprep.subr.mxu0 0.0
    %1151 = vmatpush1.msra.mxu0 0.0
    %1152 = vmatprep.subr.mxu0 0.0
    %1153 = vmatpush1.msra.mxu0 0.0
    %1154 = vmatprep.subr.mxu0 0.0
    %1155 = vmatpush1.msra.mxu0 0.0
    %1156 = vmatprep.subr.mxu0 0.0
    %1157 = vmatpush1.msra.mxu0 0.0
    %1158 = vmatprep.subr.mxu0 0.0
    %1159 = vmatpush1.msra.mxu0 0.0
    %1160 = vmatprep.mubr.f32.mxu0 0.0
    %1161 = vmatmul.mubr.f32.gmra.mrb[0].mxu0 %v1095
    %v1162 = vpop.f32.mrb[0].mxu0
    %v1163 = vadd.f32 0.0, %v1162
    %v1164 = vpop.f32.mrb[0].mxu0
    %v1165 = vadd.f32 0.0, %v1164
    %1166 = vdwg.mxu0
    %1167 = vmatprep.subr.mxu0 %v80
    %1168 = vmatpush1.msra.mxu0 %v79
    %1169 = vmatprep.subr.mxu0 %v84
    %1170 = vmatpush1.msra.mxu0 %v83
    %1171 = vmatprep.subr.mxu0 %v88
    %1172 = vmatpush1.msra.mxu0 %v87
    %1173 = vmatprep.subr.mxu0 %v92
    %1174 = vmatpush1.msra.mxu0 %v91
    %1175 = vmatprep.subr.mxu0 %v96
    %1176 = vmatpush1.msra.mxu0 %v95
    %1177 = vmatprep.subr.mxu0 %v100
    %1178 = vmatpush1.msra.mxu0 %v99
    %1179 = vmatprep.subr.mxu0 %v104
    %1180 = vmatpush1.msra.mxu0 %v103
    %1181 = vmatprep.subr.mxu0 %v108
    %1182 = vmatpush1.msra.mxu0 %v107
    %1183 = vmatprep.subr.mxu0 %v112
    %1184 = vmatpush1.msra.mxu0 %v111
    %1185 = vmatprep.subr.mxu0 %v116
    %1186 = vmatpush1.msra.mxu0 %v115
    %1187 = vmatprep.subr.mxu0 %v120
    %1188 = vmatpush1.msra.mxu0 %v119
    %1189 = vmatprep.subr.mxu0 %v124
    %1190 = vmatpush1.msra.mxu0 %v123
    %1191 = vmatprep.subr.mxu0 %v128
    %1192 = vmatpush1.msra.mxu0 %v127
    %1193 = vmatprep.subr.mxu0 %v132
    %1194 = vmatpush1.msra.mxu0 %v131
    %1195 = vmatprep.subr.mxu0 %v136
    %1196 = vmatpush1.msra.mxu0 %v135
    %1197 = vmatprep.subr.mxu0 %v140
    %1198 = vmatpush1.msra.mxu0 %v139
    %1199 = vmatprep.subr.mxu0 0.0
    %1200 = vmatpush1.msra.mxu0 0.0
    %1201 = vmatprep.subr.mxu0 0.0
    %1202 = vmatpush1.msra.mxu0 0.0
    %1203 = vmatprep.subr.mxu0 0.0
    %1204 = vmatpush1.msra.mxu0 0.0
    %1205 = vmatprep.subr.mxu0 0.0
    %1206 = vmatpush1.msra.mxu0 0.0
    %1207 = vmatprep.subr.mxu0 0.0
    %1208 = vmatpush1.msra.mxu0 0.0
    %1209 = vmatprep.subr.mxu0 0.0
    %1210 = vmatpush1.msra.mxu0 0.0
    %1211 = vmatprep.subr.mxu0 0.0
    %1212 = vmatpush1.msra.mxu0 0.0
    %1213 = vmatprep.subr.mxu0 0.0
    %1214 = vmatpush1.msra.mxu0 0.0
    %1215 = vmatprep.subr.mxu0 0.0
    %1216 = vmatpush1.msra.mxu0 0.0
    %1217 = vmatprep.subr.mxu0 0.0
    %1218 = vmatpush1.msra.mxu0 0.0
    %1219 = vmatprep.subr.mxu0 0.0
    %1220 = vmatpush1.msra.mxu0 0.0
    %1221 = vmatprep.subr.mxu0 0.0
    %1222 = vmatpush1.msra.mxu0 0.0
    %1223 = vmatprep.subr.mxu0 0.0
    %1224 = vmatpush1.msra.mxu0 0.0
    %1225 = vmatprep.subr.mxu0 0.0
    %1226 = vmatpush1.msra.mxu0 0.0
    %1227 = vmatprep.subr.mxu0 0.0
    %1228 = vmatpush1.msra.mxu0 0.0
    %1229 = vmatprep.subr.mxu0 0.0
    %1230 = vmatpush1.msra.mxu0 0.0
    %1231 = vmatprep.mubr.f32.mxu0 0.0
    %1232 = vmatmul.mubr.f32.gmra.mrb[0].mxu0 %v1095
    %v1233 = vpop.f32.mrb[0].mxu0
    %v1234 = vadd.f32 0.0, %v1233
    %v1235 = vpop.f32.mrb[0].mxu0
    %v1236 = vadd.f32 0.0, %v1235
    %1237 = vdwg.mxu0
    %v1242 = vcombine.low %v1163, %v1165
    %v1243 = vcombine.low %v1234, %v1236
    %v1245 = vunpack.c.l.s4 1983009808
    %v1246 = vunpack.c.0.s8 %v1245
    %v1247 = vlaneseq
    %v1248 = vshrl.u32 %v1247, 7
    %v1249 = vsub.s32 %v1246, %v1248
    %v1250 = vrot.slane %v1242, %v1249
    %v1252 = vunpack.c.l.s4 1983009808
    %v1253 = vunpack.c.0.s8 %v1252
    %v1254 = vlaneseq
    %v1255 = vshrl.u32 %v1254, 7
    %v1256 = vsub.s32 %v1253, %v1255
    %v1257 = vrot.slane %v1243, %v1256
    %v1258 = vcombine.low %v1250, %v1257
    %v1260 = vadd.f32 %v1094, %v1258
    %v1261 = vxor.u32 %v1260, 2147483648
    %v1262 = vmul.f32 %v1261, 1.442695
    %v1263 = vpow.pop %v1262
    %v1264 = vadd.f32 %v1263, 1.0
    %v1265 = vrcp.pop %v1264
    %v1266 = vmul.f32 1.0, %v1265
    %v1268 = vrot.slane %v1260, 2
    %v1270 = vxor.u32 %v1268, 2147483648
    %v1271 = vmul.f32 %v1270, 1.442695
    %v1272 = vpow.pop %v1271
    %v1273 = vadd.f32 %v1272, 1.0
    %v1274 = vrcp.pop %v1273
    %v1275 = vmul.f32 1.0, %v1274
    %v1276 = vrot.slane %v1260, 4
    %v1278 = vtanh.pop %v1276
    %v1279 = vrot.slane %v1260, 6
    %v1281 = vxor.u32 %v1279, 2147483648
    %v1282 = vmul.f32 %v1281, 1.442695
    %v1283 = vpow.pop %v1282
    %v1284 = vadd.f32 %v1283, 1.0
    %v1285 = vrcp.pop %v1284
    %v1286 = vmul.f32 1.0, %v1285
    %v1287 = vld [vmem:[#allocation6] sm:$0x3]
    %v1288 = vmul.f32 %v1275, %v1287
    %v1289 = vmul.f32 %v1266, %v1278
    %v1290 = vadd.f32 %v1288, %v1289
    %v1291 = vtanh.pop %v1290
    %v1292 = vmul.f32 %v1286, %v1291
    %1293 = vst [vmem:[#allocation6] sm:$0x3] %v1290
    %1294 = vst [vmem:[#allocation5] sm:$0x3] %v1292
    %s1295 = scalar_lea.vmem [#allocation2], 6
    %1296 = vst [vmem:[%s1295] sm:$0x3] %v1292
    %s1297 = scalar_lea.vmem [#allocation4], 32
    %v1298 = vld [vmem:[%s1297] sm:$0xff]
    %v1299 = vld [vmem:[#allocation5] sm:$0x3]
    %1300 = vmatprep.subr.mxu0 %v78
    %1301 = vmatpush1.msra.mxu0 %v77
    %1302 = vmatprep.subr.mxu0 %v82
    %1303 = vmatpush1.msra.mxu0 %v81
    %1304 = vmatprep.subr.mxu0 %v86
    %1305 = vmatpush1.msra.mxu0 %v85
    %1306 = vmatprep.subr.mxu0 %v90
    %1307 = vmatpush1.msra.mxu0 %v89
    %1308 = vmatprep.subr.mxu0 %v94
    %1309 = vmatpush1.msra.mxu0 %v93
    %1310 = vmatprep.subr.mxu0 %v98
    %1311 = vmatpush1.msra.mxu0 %v97
    %1312 = vmatprep.subr.mxu0 %v102
    %1313 = vmatpush1.msra.mxu0 %v101
    %1314 = vmatprep.subr.mxu0 %v106
    %1315 = vmatpush1.msra.mxu0 %v105
    %1316 = vmatprep.subr.mxu0 %v110
    %1317 = vmatpush1.msra.mxu0 %v109
    %1318 = vmatprep.subr.mxu0 %v114
    %1319 = vmatpush1.msra.mxu0 %v113
    %1320 = vmatprep.subr.mxu0 %v118
    %1321 = vmatpush1.msra.mxu0 %v117
    %1322 = vmatprep.subr.mxu0 %v122
    %1323 = vmatpush1.msra.mxu0 %v121
    %1324 = vmatprep.subr.mxu0 %v126
    %1325 = vmatpush1.msra.mxu0 %v125
    %1326 = vmatprep.subr.mxu0 %v130
    %1327 = vmatpush1.msra.mxu0 %v129
    %1328 = vmatprep.subr.mxu0 %v134
    %1329 = vmatpush1.msra.mxu0 %v133
    %1330 = vmatprep.subr.mxu0 %v138
    %1331 = vmatpush1.msra.mxu0 %v137
    %1332 = vmatprep.subr.mxu0 0.0
    %1333 = vmatpush1.msra.mxu0 0.0
    %1334 = vmatprep.subr.mxu0 0.0
    %1335 = vmatpush1.msra.mxu0 0.0
    %1336 = vmatprep.subr.mxu0 0.0
    %1337 = vmatpush1.msra.mxu0 0.0
    %1338 = vmatprep.subr.mxu0 0.0
    %1339 = vmatpush1.msra.mxu0 0.0
    %1340 = vmatprep.subr.mxu0 0.0
    %1341 = vmatpush1.msra.mxu0 0.0
    %1342 = vmatprep.subr.mxu0 0.0
    %1343 = vmatpush1.msra.mxu0 0.0
    %1344 = vmatprep.subr.mxu0 0.0
    %1345 = vmatpush1.msra.mxu0 0.0
    %1346 = vmatprep.subr.mxu0 0.0
    %1347 = vmatpush1.msra.mxu0 0.0
    %1348 = vmatprep.subr.mxu0 0.0
    %1349 = vmatpush1.msra.mxu0 0.0
    %1350 = vmatprep.subr.mxu0 0.0
    %1351 = vmatpush1.msra.mxu0 0.0
    %1352 = vmatprep.subr.mxu0 0.0
    %1353 = vmatpush1.msra.mxu0 0.0
    %1354 = vmatprep.subr.mxu0 0.0
    %1355 = vmatpush1.msra.mxu0 0.0
    %1356 = vmatprep.subr.mxu0 0.0
    %1357 = vmatpush1.msra.mxu0 0.0
    %1358 = vmatprep.subr.mxu0 0.0
    %1359 = vmatpush1.msra.mxu0 0.0
    %1360 = vmatprep.subr.mxu0 0.0
    %1361 = vmatpush1.msra.mxu0 0.0
    %1362 = vmatprep.subr.mxu0 0.0
    %1363 = vmatpush1.msra.mxu0 0.0
    %1364 = vmatprep.mubr.f32.mxu0 0.0
    %1365 = vmatmul.mubr.f32.gmra.mrb[0].mxu0 %v1299
    %v1366 = vpop.f32.mrb[0].mxu0
    %v1367 = vadd.f32 0.0, %v1366
    %v1368 = vpop.f32.mrb[0].mxu0
    %v1369 = vadd.f32 0.0, %v1368
    %1370 = vdwg.mxu0
    %1371 = vmatprep.subr.mxu0 %v80
    %1372 = vmatpush1.msra.mxu0 %v79
    %1373 = vmatprep.subr.mxu0 %v84
    %1374 = vmatpush1.msra.mxu0 %v83
    %1375 = vmatprep.subr.mxu0 %v88
    %1376 = vmatpush1.msra.mxu0 %v87
    %1377 = vmatprep.subr.mxu0 %v92
    %1378 = vmatpush1.msra.mxu0 %v91
    %1379 = vmatprep.subr.mxu0 %v96
    %1380 = vmatpush1.msra.mxu0 %v95
    %1381 = vmatprep.subr.mxu0 %v100
    %1382 = vmatpush1.msra.mxu0 %v99
    %1383 = vmatprep.subr.mxu0 %v104
    %1384 = vmatpush1.msra.mxu0 %v103
    %1385 = vmatprep.subr.mxu0 %v108
    %1386 = vmatpush1.msra.mxu0 %v107
    %1387 = vmatprep.subr.mxu0 %v112
    %1388 = vmatpush1.msra.mxu0 %v111
    %1389 = vmatprep.subr.mxu0 %v116
    %1390 = vmatpush1.msra.mxu0 %v115
    %1391 = vmatprep.subr.mxu0 %v120
    %1392 = vmatpush1.msra.mxu0 %v119
    %1393 = vmatprep.subr.mxu0 %v124
    %1394 = vmatpush1.msra.mxu0 %v123
    %1395 = vmatprep.subr.mxu0 %v128
    %1396 = vmatpush1.msra.mxu0 %v127
    %1397 = vmatprep.subr.mxu0 %v132
    %1398 = vmatpush1.msra.mxu0 %v131
    %1399 = vmatprep.subr.mxu0 %v136
    %1400 = vmatpush1.msra.mxu0 %v135
    %1401 = vmatprep.subr.mxu0 %v140
    %1402 = vmatpush1.msra.mxu0 %v139
    %1403 = vmatprep.subr.mxu0 0.0
    %1404 = vmatpush1.msra.mxu0 0.0
    %1405 = vmatprep.subr.mxu0 0.0
    %1406 = vmatpush1.msra.mxu0 0.0
    %1407 = vmatprep.subr.mxu0 0.0
    %1408 = vmatpush1.msra.mxu0 0.0
    %1409 = vmatprep.subr.mxu0 0.0
    %1410 = vmatpush1.msra.mxu0 0.0
    %1411 = vmatprep.subr.mxu0 0.0
    %1412 = vmatpush1.msra.mxu0 0.0
    %1413 = vmatprep.subr.mxu0 0.0
    %1414 = vmatpush1.msra.mxu0 0.0
    %1415 = vmatprep.subr.mxu0 0.0
    %1416 = vmatpush1.msra.mxu0 0.0
    %1417 = vmatprep.subr.mxu0 0.0
    %1418 = vmatpush1.msra.mxu0 0.0
    %1419 = vmatprep.subr.mxu0 0.0
    %1420 = vmatpush1.msra.mxu0 0.0
    %1421 = vmatprep.subr.mxu0 0.0
    %1422 = vmatpush1.msra.mxu0 0.0
    %1423 = vmatprep.subr.mxu0 0.0
    %1424 = vmatpush1.msra.mxu0 0.0
    %1425 = vmatprep.subr.mxu0 0.0
    %1426 = vmatpush1.msra.mxu0 0.0
    %1427 = vmatprep.subr.mxu0 0.0
    %1428 = vmatpush1.msra.mxu0 0.0
    %1429 = vmatprep.subr.mxu0 0.0
    %1430 = vmatpush1.msra.mxu0 0.0
    %1431 = vmatprep.subr.mxu0 0.0
    %1432 = vmatpush1.msra.mxu0 0.0
    %1433 = vmatprep.subr.mxu0 0.0
    %1434 = vmatpush1.msra.mxu0 0.0
    %1435 = vmatprep.mubr.f32.mxu0 0.0
    %1436 = vmatmul.mubr.f32.gmra.mrb[0].mxu0 %v1299
    %v1437 = vpop.f32.mrb[0].mxu0
    %v1438 = vadd.f32 0.0, %v1437
    %v1439 = vpop.f32.mrb[0].mxu0
    %v1440 = vadd.f32 0.0, %v1439
    %1441 = vdwg.mxu0
    %v1446 = vcombine.low %v1367, %v1369
    %v1447 = vcombine.low %v1438, %v1440
    %v1449 = vunpack.c.l.s4 1983009808
    %v1450 = vunpack.c.0.s8 %v1449
    %v1451 = vlaneseq
    %v1452 = vshrl.u32 %v1451, 7
    %v1453 = vsub.s32 %v1450, %v1452
    %v1454 = vrot.slane %v1446, %v1453
    %v1456 = vunpack.c.l.s4 1983009808
    %v1457 = vunpack.c.0.s8 %v1456
    %v1458 = vlaneseq
    %v1459 = vshrl.u32 %v1458, 7
    %v1460 = vsub.s32 %v1457, %v1459
    %v1461 = vrot.slane %v1447, %v1460
    %v1462 = vcombine.low %v1454, %v1461
    %v1464 = vadd.f32 %v1298, %v1462
    %v1465 = vxor.u32 %v1464, 2147483648
    %v1466 = vmul.f32 %v1465, 1.442695
    %v1467 = vpow.pop %v1466
    %v1468 = vadd.f32 %v1467, 1.0
    %v1469 = vrcp.pop %v1468
    %v1470 = vmul.f32 1.0, %v1469
    %v1472 = vrot.slane %v1464, 2
    %v1474 = vxor.u32 %v1472, 2147483648
    %v1475 = vmul.f32 %v1474, 1.442695
    %v1476 = vpow.pop %v1475
    %v1477 = vadd.f32 %v1476, 1.0
    %v1478 = vrcp.pop %v1477
    %v1479 = vmul.f32 1.0, %v1478
    %v1480 = vrot.slane %v1464, 4
    %v1482 = vtanh.pop %v1480
    %v1483 = vrot.slane %v1464, 6
    %v1485 = vxor.u32 %v1483, 2147483648
    %v1486 = vmul.f32 %v1485, 1.442695
    %v1487 = vpow.pop %v1486
    %v1488 = vadd.f32 %v1487, 1.0
    %v1489 = vrcp.pop %v1488
    %v1490 = vmul.f32 1.0, %v1489
    %v1491 = vld [vmem:[#allocation6] sm:$0x3]
    %v1492 = vmul.f32 %v1479, %v1491
    %v1493 = vmul.f32 %v1470, %v1482
    %v1494 = vadd.f32 %v1492, %v1493
    %v1495 = vtanh.pop %v1494
    %v1496 = vmul.f32 %v1490, %v1495
    %1497 = vst [vmem:[#allocation6] sm:$0x3] %v1494
    %1498 = vst [vmem:[#allocation5] sm:$0x3] %v1496
    %s1499 = scalar_lea.vmem [#allocation2], 8
    %1500 = vst [vmem:[%s1499] sm:$0x3] %v1496
    %s1501 = scalar_lea.vmem [#allocation4], 40
    %v1502 = vld [vmem:[%s1501] sm:$0xff]
    %v1503 = vld [vmem:[#allocation5] sm:$0x3]
    %1504 = vmatprep.subr.mxu0 %v78
    %1505 = vmatpush1.msra.mxu0 %v77
    %1506 = vmatprep.subr.mxu0 %v82
    %1507 = vmatpush1.msra.mxu0 %v81
    %1508 = vmatprep.subr.mxu0 %v86
    %1509 = vmatpush1.msra.mxu0 %v85
    %1510 = vmatprep.subr.mxu0 %v90
    %1511 = vmatpush1.msra.mxu0 %v89
    %1512 = vmatprep.subr.mxu0 %v94
    %1513 = vmatpush1.msra.mxu0 %v93
    %1514 = vmatprep.subr.mxu0 %v98
    %1515 = vmatpush1.msra.mxu0 %v97
    %1516 = vmatprep.subr.mxu0 %v102
    %1517 = vmatpush1.msra.mxu0 %v101
    %1518 = vmatprep.subr.mxu0 %v106
    %1519 = vmatpush1.msra.mxu0 %v105
    %1520 = vmatprep.subr.mxu0 %v110
    %1521 = vmatpush1.msra.mxu0 %v109
    %1522 = vmatprep.subr.mxu0 %v114
    %1523 = vmatpush1.msra.mxu0 %v113
    %1524 = vmatprep.subr.mxu0 %v118
    %1525 = vmatpush1.msra.mxu0 %v117
    %1526 = vmatprep.subr.mxu0 %v122
    %1527 = vmatpush1.msra.mxu0 %v121
    %1528 = vmatprep.subr.mxu0 %v126
    %1529 = vmatpush1.msra.mxu0 %v125
    %1530 = vmatprep.subr.mxu0 %v130
    %1531 = vmatpush1.msra.mxu0 %v129
    %1532 = vmatprep.subr.mxu0 %v134
    %1533 = vmatpush1.msra.mxu0 %v133
    %1534 = vmatprep.subr.mxu0 %v138
    %1535 = vmatpush1.msra.mxu0 %v137
    %1536 = vmatprep.subr.mxu0 0.0
    %1537 = vmatpush1.msra.mxu0 0.0
    %1538 = vmatprep.subr.mxu0 0.0
    %1539 = vmatpush1.msra.mxu0 0.0
    %1540 = vmatprep.subr.mxu0 0.0
    %1541 = vmatpush1.msra.mxu0 0.0
    %1542 = vmatprep.subr.mxu0 0.0
    %1543 = vmatpush1.msra.mxu0 0.0
    %1544 = vmatprep.subr.mxu0 0.0
    %1545 = vmatpush1.msra.mxu0 0.0
    %1546 = vmatprep.subr.mxu0 0.0
    %1547 = vmatpush1.msra.mxu0 0.0
    %1548 = vmatprep.subr.mxu0 0.0
    %1549 = vmatpush1.msra.mxu0 0.0
    %1550 = vmatprep.subr.mxu0 0.0
    %1551 = vmatpush1.msra.mxu0 0.0
    %1552 = vmatprep.subr.mxu0 0.0
    %1553 = vmatpush1.msra.mxu0 0.0
    %1554 = vmatprep.subr.mxu0 0.0
    %1555 = vmatpush1.msra.mxu0 0.0
    %1556 = vmatprep.subr.mxu0 0.0
    %1557 = vmatpush1.msra.mxu0 0.0
    %1558 = vmatprep.subr.mxu0 0.0
    %1559 = vmatpush1.msra.mxu0 0.0
    %1560 = vmatprep.subr.mxu0 0.0
    %1561 = vmatpush1.msra.mxu0 0.0
    %1562 = vmatprep.subr.mxu0 0.0
    %1563 = vmatpush1.msra.mxu0 0.0
    %1564 = vmatprep.subr.mxu0 0.0
    %1565 = vmatpush1.msra.mxu0 0.0
    %1566 = vmatprep.subr.mxu0 0.0
    %1567 = vmatpush1.msra.mxu0 0.0
    %1568 = vmatprep.mubr.f32.mxu0 0.0
    %1569 = vmatmul.mubr.f32.gmra.mrb[0].mxu0 %v1503
    %v1570 = vpop.f32.mrb[0].mxu0
    %v1571 = vadd.f32 0.0, %v1570
    %v1572 = vpop.f32.mrb[0].mxu0
    %v1573 = vadd.f32 0.0, %v1572
    %1574 = vdwg.mxu0
    %1575 = vmatprep.subr.mxu0 %v80
    %1576 = vmatpush1.msra.mxu0 %v79
    %1577 = vmatprep.subr.mxu0 %v84
    %1578 = vmatpush1.msra.mxu0 %v83
    %1579 = vmatprep.subr.mxu0 %v88
    %1580 = vmatpush1.msra.mxu0 %v87
    %1581 = vmatprep.subr.mxu0 %v92
    %1582 = vmatpush1.msra.mxu0 %v91
    %1583 = vmatprep.subr.mxu0 %v96
    %1584 = vmatpush1.msra.mxu0 %v95
    %1585 = vmatprep.subr.mxu0 %v100
    %1586 = vmatpush1.msra.mxu0 %v99
    %1587 = vmatprep.subr.mxu0 %v104
    %1588 = vmatpush1.msra.mxu0 %v103
    %1589 = vmatprep.subr.mxu0 %v108
    %1590 = vmatpush1.msra.mxu0 %v107
    %1591 = vmatprep.subr.mxu0 %v112
    %1592 = vmatpush1.msra.mxu0 %v111
    %1593 = vmatprep.subr.mxu0 %v116
    %1594 = vmatpush1.msra.mxu0 %v115
    %1595 = vmatprep.subr.mxu0 %v120
    %1596 = vmatpush1.msra.mxu0 %v119
    %1597 = vmatprep.subr.mxu0 %v124
    %1598 = vmatpush1.msra.mxu0 %v123
    %1599 = vmatprep.subr.mxu0 %v128
    %1600 = vmatpush1.msra.mxu0 %v127
    %1601 = vmatprep.subr.mxu0 %v132
    %1602 = vmatpush1.msra.mxu0 %v131
    %1603 = vmatprep.subr.mxu0 %v136
    %1604 = vmatpush1.msra.mxu0 %v135
    %1605 = vmatprep.subr.mxu0 %v140
    %1606 = vmatpush1.msra.mxu0 %v139
    %1607 = vmatprep.subr.mxu0 0.0
    %1608 = vmatpush1.msra.mxu0 0.0
    %1609 = vmatprep.subr.mxu0 0.0
    %1610 = vmatpush1.msra.mxu0 0.0
    %1611 = vmatprep.subr.mxu0 0.0
    %1612 = vmatpush1.msra.mxu0 0.0
    %1613 = vmatprep.subr.mxu0 0.0
    %1614 = vmatpush1.msra.mxu0 0.0
    %1615 = vmatprep.subr.mxu0 0.0
    %1616 = vmatpush1.msra.mxu0 0.0
    %1617 = vmatprep.subr.mxu0 0.0
    %1618 = vmatpush1.msra.mxu0 0.0
    %1619 = vmatprep.subr.mxu0 0.0
    %1620 = vmatpush1.msra.mxu0 0.0
    %1621 = vmatprep.subr.mxu0 0.0
    %1622 = vmatpush1.msra.mxu0 0.0
    %1623 = vmatprep.subr.mxu0 0.0
    %1624 = vmatpush1.msra.mxu0 0.0
    %1625 = vmatprep.subr.mxu0 0.0
    %1626 = vmatpush1.msra.mxu0 0.0
    %1627 = vmatprep.subr.mxu0 0.0
    %1628 = vmatpush1.msra.mxu0 0.0
    %1629 = vmatprep.subr.mxu0 0.0
    %1630 = vmatpush1.msra.mxu0 0.0
    %1631 = vmatprep.subr.mxu0 0.0
    %1632 = vmatpush1.msra.mxu0 0.0
    %1633 = vmatprep.subr.mxu0 0.0
    %1634 = vmatpush1.msra.mxu0 0.0
    %1635 = vmatprep.subr.mxu0 0.0
    %1636 = vmatpush1.msra.mxu0 0.0
    %1637 = vmatprep.subr.mxu0 0.0
    %1638 = vmatpush1.msra.mxu0 0.0
    %1639 = vmatprep.mubr.f32.mxu0 0.0
    %1640 = vmatmul.mubr.f32.gmra.mrb[0].mxu0 %v1503
    %v1641 = vpop.f32.mrb[0].mxu0
    %v1642 = vadd.f32 0.0, %v1641
    %v1643 = vpop.f32.mrb[0].mxu0
    %v1644 = vadd.f32 0.0, %v1643
    %1645 = vdwg.mxu0
    %v1650 = vcombine.low %v1571, %v1573
    %v1651 = vcombine.low %v1642, %v1644
    %v1653 = vunpack.c.l.s4 1983009808
    %v1654 = vunpack.c.0.s8 %v1653
    %v1655 = vlaneseq
    %v1656 = vshrl.u32 %v1655, 7
    %v1657 = vsub.s32 %v1654, %v1656
    %v1658 = vrot.slane %v1650, %v1657
    %v1660 = vunpack.c.l.s4 1983009808
    %v1661 = vunpack.c.0.s8 %v1660
    %v1662 = vlaneseq
    %v1663 = vshrl.u32 %v1662, 7
    %v1664 = vsub.s32 %v1661, %v1663
    %v1665 = vrot.slane %v1651, %v1664
    %v1666 = vcombine.low %v1658, %v1665
    %v1668 = vadd.f32 %v1502, %v1666
    %v1669 = vxor.u32 %v1668, 2147483648
    %v1670 = vmul.f32 %v1669, 1.442695
    %v1671 = vpow.pop %v1670
    %v1672 = vadd.f32 %v1671, 1.0
    %v1673 = vrcp.pop %v1672
    %v1674 = vmul.f32 1.0, %v1673
    %v1676 = vrot.slane %v1668, 2
    %v1678 = vxor.u32 %v1676, 2147483648
    %v1679 = vmul.f32 %v1678, 1.442695
    %v1680 = vpow.pop %v1679
    %v1681 = vadd.f32 %v1680, 1.0
    %v1682 = vrcp.pop %v1681
    %v1683 = vmul.f32 1.0, %v1682
    %v1684 = vrot.slane %v1668, 4
    %v1686 = vtanh.pop %v1684
    %v1687 = vrot.slane %v1668, 6
    %v1689 = vxor.u32 %v1687, 2147483648
    %v1690 = vmul.f32 %v1689, 1.442695
    %v1691 = vpow.pop %v1690
    %v1692 = vadd.f32 %v1691, 1.0
    %v1693 = vrcp.pop %v1692
    %v1694 = vmul.f32 1.0, %v1693
    %v1695 = vld [vmem:[#allocation6] sm:$0x3]
    %v1696 = vmul.f32 %v1683, %v1695
    %v1697 = vmul.f32 %v1674, %v1686
    %v1698 = vadd.f32 %v1696, %v1697
    %v1699 = vtanh.pop %v1698
    %v1700 = vmul.f32 %v1694, %v1699
    %1701 = vst [vmem:[#allocation6] sm:$0x3] %v1698
    %1702 = vst [vmem:[#allocation5] sm:$0x3] %v1700
    %s1703 = scalar_lea.vmem [#allocation2], 10
    %1704 = vst [vmem:[%s1703] sm:$0x3] %v1700
    %s1705 = scalar_lea.vmem [#allocation4], 48
    %v1706 = vld [vmem:[%s1705] sm:$0xff]
    %v1707 = vld [vmem:[#allocation5] sm:$0x3]
    %1708 = vmatprep.subr.mxu0 %v78
    %1709 = vmatpush1.msra.mxu0 %v77
    %1710 = vmatprep.subr.mxu0 %v82
    %1711 = vmatpush1.msra.mxu0 %v81
    %1712 = vmatprep.subr.mxu0 %v86
    %1713 = vmatpush1.msra.mxu0 %v85
    %1714 = vmatprep.subr.mxu0 %v90
    %1715 = vmatpush1.msra.mxu0 %v89
    %1716 = vmatprep.subr.mxu0 %v94
    %1717 = vmatpush1.msra.mxu0 %v93
    %1718 = vmatprep.subr.mxu0 %v98
    %1719 = vmatpush1.msra.mxu0 %v97
    %1720 = vmatprep.subr.mxu0 %v102
    %1721 = vmatpush1.msra.mxu0 %v101
    %1722 = vmatprep.subr.mxu0 %v106
    %1723 = vmatpush1.msra.mxu0 %v105
    %1724 = vmatprep.subr.mxu0 %v110
    %1725 = vmatpush1.msra.mxu0 %v109
    %1726 = vmatprep.subr.mxu0 %v114
    %1727 = vmatpush1.msra.mxu0 %v113
    %1728 = vmatprep.subr.mxu0 %v118
    %1729 = vmatpush1.msra.mxu0 %v117
    %1730 = vmatprep.subr.mxu0 %v122
    %1731 = vmatpush1.msra.mxu0 %v121
    %1732 = vmatprep.subr.mxu0 %v126
    %1733 = vmatpush1.msra.mxu0 %v125
    %1734 = vmatprep.subr.mxu0 %v130
    %1735 = vmatpush1.msra.mxu0 %v129
    %1736 = vmatprep.subr.mxu0 %v134
    %1737 = vmatpush1.msra.mxu0 %v133
    %1738 = vmatprep.subr.mxu0 %v138
    %1739 = vmatpush1.msra.mxu0 %v137
    %1740 = vmatprep.subr.mxu0 0.0
    %1741 = vmatpush1.msra.mxu0 0.0
    %1742 = vmatprep.subr.mxu0 0.0
    %1743 = vmatpush1.msra.mxu0 0.0
    %1744 = vmatprep.subr.mxu0 0.0
    %1745 = vmatpush1.msra.mxu0 0.0
    %1746 = vmatprep.subr.mxu0 0.0
    %1747 = vmatpush1.msra.mxu0 0.0
    %1748 = vmatprep.subr.mxu0 0.0
    %1749 = vmatpush1.msra.mxu0 0.0
    %1750 = vmatprep.subr.mxu0 0.0
    %1751 = vmatpush1.msra.mxu0 0.0
    %1752 = vmatprep.subr.mxu0 0.0
    %1753 = vmatpush1.msra.mxu0 0.0
    %1754 = vmatprep.subr.mxu0 0.0
    %1755 = vmatpush1.msra.mxu0 0.0
    %1756 = vmatprep.subr.mxu0 0.0
    %1757 = vmatpush1.msra.mxu0 0.0
    %1758 = vmatprep.subr.mxu0 0.0
    %1759 = vmatpush1.msra.mxu0 0.0
    %1760 = vmatprep.subr.mxu0 0.0
    %1761 = vmatpush1.msra.mxu0 0.0
    %1762 = vmatprep.subr.mxu0 0.0
    %1763 = vmatpush1.msra.mxu0 0.0
    %1764 = vmatprep.subr.mxu0 0.0
    %1765 = vmatpush1.msra.mxu0 0.0
    %1766 = vmatprep.subr.mxu0 0.0
    %1767 = vmatpush1.msra.mxu0 0.0
    %1768 = vmatprep.subr.mxu0 0.0
    %1769 = vmatpush1.msra.mxu0 0.0
    %1770 = vmatprep.subr.mxu0 0.0
    %1771 = vmatpush1.msra.mxu0 0.0
    %1772 = vmatprep.mubr.f32.mxu0 0.0
    %1773 = vmatmul.mubr.f32.gmra.mrb[0].mxu0 %v1707
    %v1774 = vpop.f32.mrb[0].mxu0
    %v1775 = vadd.f32 0.0, %v1774
    %v1776 = vpop.f32.mrb[0].mxu0
    %v1777 = vadd.f32 0.0, %v1776
    %1778 = vdwg.mxu0
    %1779 = vmatprep.subr.mxu0 %v80
    %1780 = vmatpush1.msra.mxu0 %v79
    %1781 = vmatprep.subr.mxu0 %v84
    %1782 = vmatpush1.msra.mxu0 %v83
    %1783 = vmatprep.subr.mxu0 %v88
    %1784 = vmatpush1.msra.mxu0 %v87
    %1785 = vmatprep.subr.mxu0 %v92
    %1786 = vmatpush1.msra.mxu0 %v91
    %1787 = vmatprep.subr.mxu0 %v96
    %1788 = vmatpush1.msra.mxu0 %v95
    %1789 = vmatprep.subr.mxu0 %v100
    %1790 = vmatpush1.msra.mxu0 %v99
    %1791 = vmatprep.subr.mxu0 %v104
    %1792 = vmatpush1.msra.mxu0 %v103
    %1793 = vmatprep.subr.mxu0 %v108
    %1794 = vmatpush1.msra.mxu0 %v107
    %1795 = vmatprep.subr.mxu0 %v112
    %1796 = vmatpush1.msra.mxu0 %v111
    %1797 = vmatprep.subr.mxu0 %v116
    %1798 = vmatpush1.msra.mxu0 %v115
    %1799 = vmatprep.subr.mxu0 %v120
    %1800 = vmatpush1.msra.mxu0 %v119
    %1801 = vmatprep.subr.mxu0 %v124
    %1802 = vmatpush1.msra.mxu0 %v123
    %1803 = vmatprep.subr.mxu0 %v128
    %1804 = vmatpush1.msra.mxu0 %v127
    %1805 = vmatprep.subr.mxu0 %v132
    %1806 = vmatpush1.msra.mxu0 %v131
    %1807 = vmatprep.subr.mxu0 %v136
    %1808 = vmatpush1.msra.mxu0 %v135
    %1809 = vmatprep.subr.mxu0 %v140
    %1810 = vmatpush1.msra.mxu0 %v139
    %1811 = vmatprep.subr.mxu0 0.0
    %1812 = vmatpush1.msra.mxu0 0.0
    %1813 = vmatprep.subr.mxu0 0.0
    %1814 = vmatpush1.msra.mxu0 0.0
    %1815 = vmatprep.subr.mxu0 0.0
    %1816 = vmatpush1.msra.mxu0 0.0
    %1817 = vmatprep.subr.mxu0 0.0
    %1818 = vmatpush1.msra.mxu0 0.0
    %1819 = vmatprep.subr.mxu0 0.0
    %1820 = vmatpush1.msra.mxu0 0.0
    %1821 = vmatprep.subr.mxu0 0.0
    %1822 = vmatpush1.msra.mxu0 0.0
    %1823 = vmatprep.subr.mxu0 0.0
    %1824 = vmatpush1.msra.mxu0 0.0
    %1825 = vmatprep.subr.mxu0 0.0
    %1826 = vmatpush1.msra.mxu0 0.0
    %1827 = vmatprep.subr.mxu0 0.0
    %1828 = vmatpush1.msra.mxu0 0.0
    %1829 = vmatprep.subr.mxu0 0.0
    %1830 = vmatpush1.msra.mxu0 0.0
    %1831 = vmatprep.subr.mxu0 0.0
    %1832 = vmatpush1.msra.mxu0 0.0
    %1833 = vmatprep.subr.mxu0 0.0
    %1834 = vmatpush1.msra.mxu0 0.0
    %1835 = vmatprep.subr.mxu0 0.0
    %1836 = vmatpush1.msra.mxu0 0.0
    %1837 = vmatprep.subr.mxu0 0.0
    %1838 = vmatpush1.msra.mxu0 0.0
    %1839 = vmatprep.subr.mxu0 0.0
    %1840 = vmatpush1.msra.mxu0 0.0
    %1841 = vmatprep.subr.mxu0 0.0
    %1842 = vmatpush1.msra.mxu0 0.0
    %1843 = vmatprep.mubr.f32.mxu0 0.0
    %1844 = vmatmul.mubr.f32.gmra.mrb[0].mxu0 %v1707
    %v1845 = vpop.f32.mrb[0].mxu0
    %v1846 = vadd.f32 0.0, %v1845
    %v1847 = vpop.f32.mrb[0].mxu0
    %v1848 = vadd.f32 0.0, %v1847
    %1849 = vdwg.mxu0
    %v1854 = vcombine.low %v1775, %v1777
    %v1855 = vcombine.low %v1846, %v1848
    %v1857 = vunpack.c.l.s4 1983009808
    %v1858 = vunpack.c.0.s8 %v1857
    %v1859 = vlaneseq
    %v1860 = vshrl.u32 %v1859, 7
    %v1861 = vsub.s32 %v1858, %v1860
    %v1862 = vrot.slane %v1854, %v1861
    %v1864 = vunpack.c.l.s4 1983009808
    %v1865 = vunpack.c.0.s8 %v1864
    %v1866 = vlaneseq
    %v1867 = vshrl.u32 %v1866, 7
    %v1868 = vsub.s32 %v1865, %v1867
    %v1869 = vrot.slane %v1855, %v1868
    %v1870 = vcombine.low %v1862, %v1869
    %v1872 = vadd.f32 %v1706, %v1870
    %v1873 = vxor.u32 %v1872, 2147483648
    %v1874 = vmul.f32 %v1873, 1.442695
    %v1875 = vpow.pop %v1874
    %v1876 = vadd.f32 %v1875, 1.0
    %v1877 = vrcp.pop %v1876
    %v1878 = vmul.f32 1.0, %v1877
    %v1880 = vrot.slane %v1872, 2
    %v1882 = vxor.u32 %v1880, 2147483648
    %v1883 = vmul.f32 %v1882, 1.442695
    %v1884 = vpow.pop %v1883
    %v1885 = vadd.f32 %v1884, 1.0
    %v1886 = vrcp.pop %v1885
    %v1887 = vmul.f32 1.0, %v1886
    %v1888 = vrot.slane %v1872, 4
    %v1890 = vtanh.pop %v1888
    %v1891 = vrot.slane %v1872, 6
    %v1893 = vxor.u32 %v1891, 2147483648
    %v1894 = vmul.f32 %v1893, 1.442695
    %v1895 = vpow.pop %v1894
    %v1896 = vadd.f32 %v1895, 1.0
    %v1897 = vrcp.pop %v1896
    %v1898 = vmul.f32 1.0, %v1897
    %v1899 = vld [vmem:[#allocation6] sm:$0x3]
    %v1900 = vmul.f32 %v1887, %v1899
    %v1901 = vmul.f32 %v1878, %v1890
    %v1902 = vadd.f32 %v1900, %v1901
    %v1903 = vtanh.pop %v1902
    %v1904 = vmul.f32 %v1898, %v1903
    %1905 = vst [vmem:[#allocation6] sm:$0x3] %v1902
    %1906 = vst [vmem:[#allocation5] sm:$0x3] %v1904
    %s1907 = scalar_lea.vmem [#allocation2], 12
    %1908 = vst [vmem:[%s1907] sm:$0x3] %v1904
    %s1909 = scalar_lea.vmem [#allocation4], 56
    %v1910 = vld [vmem:[%s1909] sm:$0xff]
    %v1911 = vld [vmem:[#allocation5] sm:$0x3]
    %1912 = vmatprep.subr.mxu0 %v78
    %1913 = vmatpush1.msra.mxu0 %v77
    %1914 = vmatprep.subr.mxu0 %v82
    %1915 = vmatpush1.msra.mxu0 %v81
    %1916 = vmatprep.subr.mxu0 %v86
    %1917 = vmatpush1.msra.mxu0 %v85
    %1918 = vmatprep.subr.mxu0 %v90
    %1919 = vmatpush1.msra.mxu0 %v89
    %1920 = vmatprep.subr.mxu0 %v94
    %1921 = vmatpush1.msra.mxu0 %v93
    %1922 = vmatprep.subr.mxu0 %v98
    %1923 = vmatpush1.msra.mxu0 %v97
    %1924 = vmatprep.subr.mxu0 %v102
    %1925 = vmatpush1.msra.mxu0 %v101
    %1926 = vmatprep.subr.mxu0 %v106
    %1927 = vmatpush1.msra.mxu0 %v105
    %1928 = vmatprep.subr.mxu0 %v110
    %1929 = vmatpush1.msra.mxu0 %v109
    %1930 = vmatprep.subr.mxu0 %v114
    %1931 = vmatpush1.msra.mxu0 %v113
    %1932 = vmatprep.subr.mxu0 %v118
    %1933 = vmatpush1.msra.mxu0 %v117
    %1934 = vmatprep.subr.mxu0 %v122
    %1935 = vmatpush1.msra.mxu0 %v121
    %1936 = vmatprep.subr.mxu0 %v126
    %1937 = vmatpush1.msra.mxu0 %v125
    %1938 = vmatprep.subr.mxu0 %v130
    %1939 = vmatpush1.msra.mxu0 %v129
    %1940 = vmatprep.subr.mxu0 %v134
    %1941 = vmatpush1.msra.mxu0 %v133
    %1942 = vmatprep.subr.mxu0 %v138
    %1943 = vmatpush1.msra.mxu0 %v137
    %1944 = vmatprep.subr.mxu0 0.0
    %1945 = vmatpush1.msra.mxu0 0.0
    %1946 = vmatprep.subr.mxu0 0.0
    %1947 = vmatpush1.msra.mxu0 0.0
    %1948 = vmatprep.subr.mxu0 0.0
    %1949 = vmatpush1.msra.mxu0 0.0
    %1950 = vmatprep.subr.mxu0 0.0
    %1951 = vmatpush1.msra.mxu0 0.0
    %1952 = vmatprep.subr.mxu0 0.0
    %1953 = vmatpush1.msra.mxu0 0.0
    %1954 = vmatprep.subr.mxu0 0.0
    %1955 = vmatpush1.msra.mxu0 0.0
    %1956 = vmatprep.subr.mxu0 0.0
    %1957 = vmatpush1.msra.mxu0 0.0
    %1958 = vmatprep.subr.mxu0 0.0
    %1959 = vmatpush1.msra.mxu0 0.0
    %1960 = vmatprep.subr.mxu0 0.0
    %1961 = vmatpush1.msra.mxu0 0.0
    %1962 = vmatprep.subr.mxu0 0.0
    %1963 = vmatpush1.msra.mxu0 0.0
    %1964 = vmatprep.subr.mxu0 0.0
    %1965 = vmatpush1.msra.mxu0 0.0
    %1966 = vmatprep.subr.mxu0 0.0
    %1967 = vmatpush1.msra.mxu0 0.0
    %1968 = vmatprep.subr.mxu0 0.0
    %1969 = vmatpush1.msra.mxu0 0.0
    %1970 = vmatprep.subr.mxu0 0.0
    %1971 = vmatpush1.msra.mxu0 0.0
    %1972 = vmatprep.subr.mxu0 0.0
    %1973 = vmatpush1.msra.mxu0 0.0
    %1974 = vmatprep.subr.mxu0 0.0
    %1975 = vmatpush1.msra.mxu0 0.0
    %1976 = vmatprep.mubr.f32.mxu0 0.0
    %1977 = vmatmul.mubr.f32.gmra.mrb[0].mxu0 %v1911
    %v1978 = vpop.f32.mrb[0].mxu0
    %v1979 = vadd.f32 0.0, %v1978
    %v1980 = vpop.f32.mrb[0].mxu0
    %v1981 = vadd.f32 0.0, %v1980
    %1982 = vdwg.mxu0
    %1983 = vmatprep.subr.mxu0 %v80
    %1984 = vmatpush1.msra.mxu0 %v79
    %1985 = vmatprep.subr.mxu0 %v84
    %1986 = vmatpush1.msra.mxu0 %v83
    %1987 = vmatprep.subr.mxu0 %v88
    %1988 = vmatpush1.msra.mxu0 %v87
    %1989 = vmatprep.subr.mxu0 %v92
    %1990 = vmatpush1.msra.mxu0 %v91
    %1991 = vmatprep.subr.mxu0 %v96
    %1992 = vmatpush1.msra.mxu0 %v95
    %1993 = vmatprep.subr.mxu0 %v100
    %1994 = vmatpush1.msra.mxu0 %v99
    %1995 = vmatprep.subr.mxu0 %v104
    %1996 = vmatpush1.msra.mxu0 %v103
    %1997 = vmatprep.subr.mxu0 %v108
    %1998 = vmatpush1.msra.mxu0 %v107
    %1999 = vmatprep.subr.mxu0 %v112
    %2000 = vmatpush1.msra.mxu0 %v111
    %2001 = vmatprep.subr.mxu0 %v116
    %2002 = vmatpush1.msra.mxu0 %v115
    %2003 = vmatprep.subr.mxu0 %v120
    %2004 = vmatpush1.msra.mxu0 %v119
    %2005 = vmatprep.subr.mxu0 %v124
    %2006 = vmatpush1.msra.mxu0 %v123
    %2007 = vmatprep.subr.mxu0 %v128
    %2008 = vmatpush1.msra.mxu0 %v127
    %2009 = vmatprep.subr.mxu0 %v132
    %2010 = vmatpush1.msra.mxu0 %v131
    %2011 = vmatprep.subr.mxu0 %v136
    %2012 = vmatpush1.msra.mxu0 %v135
    %2013 = vmatprep.subr.mxu0 %v140
    %2014 = vmatpush1.msra.mxu0 %v139
    %2015 = vmatprep.subr.mxu0 0.0
    %2016 = vmatpush1.msra.mxu0 0.0
    %2017 = vmatprep.subr.mxu0 0.0
    %2018 = vmatpush1.msra.mxu0 0.0
    %2019 = vmatprep.subr.mxu0 0.0
    %2020 = vmatpush1.msra.mxu0 0.0
    %2021 = vmatprep.subr.mxu0 0.0
    %2022 = vmatpush1.msra.mxu0 0.0
    %2023 = vmatprep.subr.mxu0 0.0
    %2024 = vmatpush1.msra.mxu0 0.0
    %2025 = vmatprep.subr.mxu0 0.0
    %2026 = vmatpush1.msra.mxu0 0.0
    %2027 = vmatprep.subr.mxu0 0.0
    %2028 = vmatpush1.msra.mxu0 0.0
    %2029 = vmatprep.subr.mxu0 0.0
    %2030 = vmatpush1.msra.mxu0 0.0
    %2031 = vmatprep.subr.mxu0 0.0
    %2032 = vmatpush1.msra.mxu0 0.0
    %2033 = vmatprep.subr.mxu0 0.0
    %2034 = vmatpush1.msra.mxu0 0.0
    %2035 = vmatprep.subr.mxu0 0.0
    %2036 = vmatpush1.msra.mxu0 0.0
    %2037 = vmatprep.subr.mxu0 0.0
    %2038 = vmatpush1.msra.mxu0 0.0
    %2039 = vmatprep.subr.mxu0 0.0
    %2040 = vmatpush1.msra.mxu0 0.0
    %2041 = vmatprep.subr.mxu0 0.0
    %2042 = vmatpush1.msra.mxu0 0.0
    %2043 = vmatprep.subr.mxu0 0.0
    %2044 = vmatpush1.msra.mxu0 0.0
    %2045 = vmatprep.subr.mxu0 0.0
    %2046 = vmatpush1.msra.mxu0 0.0
    %2047 = vmatprep.mubr.f32.mxu0 0.0
    %2048 = vmatmul.mubr.f32.gmra.mrb[0].mxu0 %v1911
    %v2049 = vpop.f32.mrb[0].mxu0
    %v2050 = vadd.f32 0.0, %v2049
    %v2051 = vpop.f32.mrb[0].mxu0
    %v2052 = vadd.f32 0.0, %v2051
    %2053 = vdwg.mxu0
    %v2058 = vcombine.low %v1979, %v1981
    %v2059 = vcombine.low %v2050, %v2052
    %v2061 = vunpack.c.l.s4 1983009808
    %v2062 = vunpack.c.0.s8 %v2061
    %v2063 = vlaneseq
    %v2064 = vshrl.u32 %v2063, 7
    %v2065 = vsub.s32 %v2062, %v2064
    %v2066 = vrot.slane %v2058, %v2065
    %v2068 = vunpack.c.l.s4 1983009808
    %v2069 = vunpack.c.0.s8 %v2068
    %v2070 = vlaneseq
    %v2071 = vshrl.u32 %v2070, 7
    %v2072 = vsub.s32 %v2069, %v2071
    %v2073 = vrot.slane %v2059, %v2072
    %v2074 = vcombine.low %v2066, %v2073
    %v2076 = vadd.f32 %v1910, %v2074
    %v2077 = vxor.u32 %v2076, 2147483648
    %v2078 = vmul.f32 %v2077, 1.442695
    %v2079 = vpow.pop %v2078
    %v2080 = vadd.f32 %v2079, 1.0
    %v2081 = vrcp.pop %v2080
    %v2082 = vmul.f32 1.0, %v2081
    %v2084 = vrot.slane %v2076, 2
    %v2086 = vxor.u32 %v2084, 2147483648
    %v2087 = vmul.f32 %v2086, 1.442695
    %v2088 = vpow.pop %v2087
    %v2089 = vadd.f32 %v2088, 1.0
    %v2090 = vrcp.pop %v2089
    %v2091 = vmul.f32 1.0, %v2090
    %v2092 = vrot.slane %v2076, 4
    %v2094 = vtanh.pop %v2092
    %v2095 = vrot.slane %v2076, 6
    %v2097 = vxor.u32 %v2095, 2147483648
    %v2098 = vmul.f32 %v2097, 1.442695
    %v2099 = vpow.pop %v2098
    %v2100 = vadd.f32 %v2099, 1.0
    %v2101 = vrcp.pop %v2100
    %v2102 = vmul.f32 1.0, %v2101
    %v2103 = vld [vmem:[#allocation6] sm:$0x3]
    %v2104 = vmul.f32 %v2091, %v2103
    %v2105 = vmul.f32 %v2082, %v2094
    %v2106 = vadd.f32 %v2104, %v2105
    %v2107 = vtanh.pop %v2106
    %v2108 = vmul.f32 %v2102, %v2107
    %2109 = vst [vmem:[#allocation6] sm:$0x3] %v2106
    %2110 = vst [vmem:[#allocation5] sm:$0x3] %v2108
    %s2111 = scalar_lea.vmem [#allocation2], 14
    %2112 = vst [vmem:[%s2111] sm:$0x3] %v2108
    %v2113 = vld [vmem:[#allocation10] sm:$0xff]
    %v2114 = vld [vmem:[#allocation10 + $0x8] sm:$0xff]
    %v2115 = vld [vmem:[#allocation10 + $0x10] sm:$0xff]
    %v2116 = vld [vmem:[#allocation10 + $0x18] sm:$0xff]
    %v2117 = vld [vmem:[#allocation10 + $0x20] sm:$0xff]
    %v2118 = vld [vmem:[#allocation10 + $0x28] sm:$0xff]
    %v2119 = vld [vmem:[#allocation10 + $0x30] sm:$0xff]
    %v2120 = vld [vmem:[#allocation10 + $0x38] sm:$0xff]
    %v2121 = vld [vmem:[#allocation10 + $0x40] sm:$0xff]
    %v2122 = vld [vmem:[#allocation10 + $0x48] sm:$0xff]
    %v2123 = vld [vmem:[#allocation10 + $0x50] sm:$0xff]
    %v2124 = vld [vmem:[#allocation10 + $0x58] sm:$0xff]
    %v2125 = vld [vmem:[#allocation10 + $0x60] sm:$0xff]
    %v2126 = vld [vmem:[#allocation10 + $0x68] sm:$0xff]
    %v2127 = vld [vmem:[#allocation10 + $0x70] sm:$0xff]
    %v2128 = vld [vmem:[#allocation10 + $0x78] sm:$0xff]
    %v2129 = vld [vmem:[#allocation10 + $0x80] sm:$0xff]
    %v2130 = vld [vmem:[#allocation10 + $0x88] sm:$0xff]
    %v2131 = vld [vmem:[#allocation10 + $0x90] sm:$0xff]
    %v2132 = vld [vmem:[#allocation10 + $0x98] sm:$0xff]
    %v2133 = vld [vmem:[#allocation10 + $0xa0] sm:$0xff]
    %v2134 = vld [vmem:[#allocation10 + $0xa8] sm:$0xff]
    %v2135 = vld [vmem:[#allocation10 + $0xb0] sm:$0xff]
    %v2136 = vld [vmem:[#allocation10 + $0xb8] sm:$0xff]
    %v2137 = vld [vmem:[#allocation10 + $0xc0] sm:$0xff]
    %v2138 = vld [vmem:[#allocation10 + $0xc8] sm:$0xff]
    %v2139 = vld [vmem:[#allocation10 + $0xd0] sm:$0xff]
    %v2140 = vld [vmem:[#allocation10 + $0xd8] sm:$0xff]
    %v2141 = vld [vmem:[#allocation10 + $0xe0] sm:$0xff]
    %v2142 = vld [vmem:[#allocation10 + $0xe8] sm:$0xff]
    %v2143 = vld [vmem:[#allocation10 + $0xf0] sm:$0xff]
    %v2144 = vld [vmem:[#allocation10 + $0xf8] sm:$0xff]
    %v2145 = vld [vmem:[#allocation10 + $0x100] sm:$0xff]
    %v2146 = vld [vmem:[#allocation10 + $0x108] sm:$0xff]
    %v2147 = vld [vmem:[#allocation10 + $0x110] sm:$0xff]
    %v2148 = vld [vmem:[#allocation10 + $0x118] sm:$0xff]
    %v2149 = vld [vmem:[#allocation10 + $0x120] sm:$0xff]
    %v2150 = vld [vmem:[#allocation10 + $0x128] sm:$0xff]
    %v2151 = vld [vmem:[#allocation10 + $0x130] sm:$0xff]
    %v2152 = vld [vmem:[#allocation10 + $0x138] sm:$0xff]
    %v2153 = vld [vmem:[#allocation10 + $0x140] sm:$0xff]
    %v2154 = vld [vmem:[#allocation10 + $0x148] sm:$0xff]
    %v2155 = vld [vmem:[#allocation10 + $0x150] sm:$0xff]
    %v2156 = vld [vmem:[#allocation10 + $0x158] sm:$0xff]
    %v2157 = vld [vmem:[#allocation10 + $0x160] sm:$0xff]
    %v2158 = vld [vmem:[#allocation10 + $0x168] sm:$0xff]
    %v2159 = vld [vmem:[#allocation10 + $0x170] sm:$0xff]
    %v2160 = vld [vmem:[#allocation10 + $0x178] sm:$0xff]
    %v2161 = vld [vmem:[#allocation10 + $0x180] sm:$0xff]
    %v2162 = vld [vmem:[#allocation10 + $0x188] sm:$0xff]
    %v2163 = vld [vmem:[#allocation10 + $0x190] sm:$0xff]
    %v2164 = vld [vmem:[#allocation10 + $0x198] sm:$0xff]
    %v2165 = vld [vmem:[#allocation10 + $0x1a0] sm:$0xff]
    %v2166 = vld [vmem:[#allocation10 + $0x1a8] sm:$0xff]
    %v2167 = vld [vmem:[#allocation10 + $0x1b0] sm:$0xff]
    %v2168 = vld [vmem:[#allocation10 + $0x1b8] sm:$0xff]
    %v2169 = vld [vmem:[#allocation10 + $0x1c0] sm:$0xff]
    %v2170 = vld [vmem:[#allocation10 + $0x1c8] sm:$0xff]
    %v2171 = vld [vmem:[#allocation10 + $0x1d0] sm:$0xff]
    %v2172 = vld [vmem:[#allocation10 + $0x1d8] sm:$0xff]
    %v2173 = vld [vmem:[#allocation10 + $0x1e0] sm:$0xff]
    %v2174 = vld [vmem:[#allocation10 + $0x1e8] sm:$0xff]
    %v2175 = vld [vmem:[#allocation10 + $0x1f0] sm:$0xff]
    %v2176 = vld [vmem:[#allocation10 + $0x1f8] sm:$0xff]
    %v2177 = vld [vmem:[#allocation12] sm:$0xff]
    %v2178 = vld [vmem:[#allocation12 + $0x8] sm:$0xff]
    %v2179 = vld [vmem:[#allocation12 + $0x10] sm:$0xff]
    %v2180 = vld [vmem:[#allocation12 + $0x18] sm:$0xff]
    %v2181 = vld [vmem:[#allocation12 + $0x20] sm:$0xff]
    %v2182 = vld [vmem:[#allocation12 + $0x28] sm:$0xff]
    %v2183 = vld [vmem:[#allocation12 + $0x30] sm:$0xff]
    %v2184 = vld [vmem:[#allocation12 + $0x38] sm:$0xff]
    %v2185 = vld [vmem:[#allocation12 + $0x40] sm:$0xff]
    %v2186 = vld [vmem:[#allocation12 + $0x48] sm:$0xff]
    %v2187 = vld [vmem:[#allocation12 + $0x50] sm:$0xff]
    %v2188 = vld [vmem:[#allocation12 + $0x58] sm:$0xff]
    %v2189 = vld [vmem:[#allocation12 + $0x60] sm:$0xff]
    %v2190 = vld [vmem:[#allocation12 + $0x68] sm:$0xff]
    %v2191 = vld [vmem:[#allocation12 + $0x70] sm:$0xff]
    %v2192 = vld [vmem:[#allocation12 + $0x78] sm:$0xff]
    %v2193 = vld [vmem:[#allocation12 + $0x80] sm:$0xff]
    %v2194 = vld [vmem:[#allocation12 + $0x88] sm:$0xff]
    %v2195 = vld [vmem:[#allocation12 + $0x90] sm:$0xff]
    %v2196 = vld [vmem:[#allocation12 + $0x98] sm:$0xff]
    %v2197 = vld [vmem:[#allocation12 + $0xa0] sm:$0xff]
    %v2198 = vld [vmem:[#allocation12 + $0xa8] sm:$0xff]
    %v2199 = vld [vmem:[#allocation12 + $0xb0] sm:$0xff]
    %v2200 = vld [vmem:[#allocation12 + $0xb8] sm:$0xff]
    %v2201 = vld [vmem:[#allocation12 + $0xc0] sm:$0xff]
    %v2202 = vld [vmem:[#allocation12 + $0xc8] sm:$0xff]
    %v2203 = vld [vmem:[#allocation12 + $0xd0] sm:$0xff]
    %v2204 = vld [vmem:[#allocation12 + $0xd8] sm:$0xff]
    %v2205 = vld [vmem:[#allocation12 + $0xe0] sm:$0xff]
    %v2206 = vld [vmem:[#allocation12 + $0xe8] sm:$0xff]
    %v2207 = vld [vmem:[#allocation12 + $0xf0] sm:$0xff]
    %v2208 = vld [vmem:[#allocation12 + $0xf8] sm:$0xff]
    %v2209 = vld [vmem:[#allocation12 + $0x100] sm:$0xff]
    %v2210 = vld [vmem:[#allocation12 + $0x108] sm:$0xff]
    %v2211 = vld [vmem:[#allocation12 + $0x110] sm:$0xff]
    %v2212 = vld [vmem:[#allocation12 + $0x118] sm:$0xff]
    %v2213 = vld [vmem:[#allocation12 + $0x120] sm:$0xff]
    %v2214 = vld [vmem:[#allocation12 + $0x128] sm:$0xff]
    %v2215 = vld [vmem:[#allocation12 + $0x130] sm:$0xff]
    %v2216 = vld [vmem:[#allocation12 + $0x138] sm:$0xff]
    %v2217 = vld [vmem:[#allocation12 + $0x140] sm:$0xff]
    %v2218 = vld [vmem:[#allocation12 + $0x148] sm:$0xff]
    %v2219 = vld [vmem:[#allocation12 + $0x150] sm:$0xff]
    %v2220 = vld [vmem:[#allocation12 + $0x158] sm:$0xff]
    %v2221 = vld [vmem:[#allocation12 + $0x160] sm:$0xff]
    %v2222 = vld [vmem:[#allocation12 + $0x168] sm:$0xff]
    %v2223 = vld [vmem:[#allocation12 + $0x170] sm:$0xff]
    %v2224 = vld [vmem:[#allocation12 + $0x178] sm:$0xff]
    %v2225 = vld [vmem:[#allocation12 + $0x180] sm:$0xff]
    %v2226 = vld [vmem:[#allocation12 + $0x188] sm:$0xff]
    %v2227 = vld [vmem:[#allocation12 + $0x190] sm:$0xff]
    %v2228 = vld [vmem:[#allocation12 + $0x198] sm:$0xff]
    %v2229 = vld [vmem:[#allocation12 + $0x1a0] sm:$0xff]
    %v2230 = vld [vmem:[#allocation12 + $0x1a8] sm:$0xff]
    %v2231 = vld [vmem:[#allocation12 + $0x1b0] sm:$0xff]
    %v2232 = vld [vmem:[#allocation12 + $0x1b8] sm:$0xff]
    %v2233 = vld [vmem:[#allocation12 + $0x1c0] sm:$0xff]
    %v2234 = vld [vmem:[#allocation12 + $0x1c8] sm:$0xff]
    %v2235 = vld [vmem:[#allocation12 + $0x1d0] sm:$0xff]
    %v2236 = vld [vmem:[#allocation12 + $0x1d8] sm:$0xff]
    %v2237 = vld [vmem:[#allocation12 + $0x1e0] sm:$0xff]
    %v2238 = vld [vmem:[#allocation12 + $0x1e8] sm:$0xff]
    %v2239 = vld [vmem:[#allocation12 + $0x1f0] sm:$0xff]
    %v2240 = vld [vmem:[#allocation12 + $0x1f8] sm:$0xff]
    %v2241 = vld [vmem:[%s6] sm:$0xf]
    %v2242 = vld [vmem:[#allocation2] sm:$0x3]
    %v2243 = vld [vmem:[#allocation2 + $0x2] sm:$0x3]
    %v2244 = vld [vmem:[#allocation2 + $0x4] sm:$0x3]
    %v2245 = vld [vmem:[#allocation2 + $0x6] sm:$0x3]
    %v2246 = vld [vmem:[#allocation2 + $0x8] sm:$0x3]
    %v2247 = vld [vmem:[#allocation2 + $0xa] sm:$0x3]
    %v2248 = vld [vmem:[#allocation2 + $0xc] sm:$0x3]
    %v2249 = vld [vmem:[#allocation2 + $0xe] sm:$0x3]
    %v2251 = vlaneseq
    %v2252 = vshrl.u32 %v2251, 7
    %v2253 = vsub.s32 0, %v2252
    %v2254 = vrot.slane %v2241, %v2253
    %v2255 = vlaneseq
    %v2256 = vshrl.u32 %v2255, 7
    %v2257 = vsub.s32 1, %v2256
    %v2258 = vrot.slane %v2241, %v2257
    %v2259 = vlaneseq
    %v2260 = vshrl.u32 %v2259, 7
    %v2261 = vsub.s32 2, %v2260
    %v2262 = vrot.slane %v2241, %v2261
    %v2263 = vlaneseq
    %v2264 = vshrl.u32 %v2263, 7
    %v2265 = vsub.s32 3, %v2264
    %v2266 = vrot.slane %v2241, %v2265
    %v2279 = vcombine.low %v2242, %v2243
    %v2280 = vcombine.low %v2244, %v2245
    %v2282 = vunpack.c.l.s4 1983009808
    %v2283 = vunpack.c.0.s8 %v2282
    %v2284 = vlaneseq
    %v2285 = vshrl.u32 %v2284, 7
    %v2286 = vsub.s32 %v2283, %v2285
    %v2287 = vrot.slane %v2279, %v2286
    %v2289 = vunpack.c.l.s4 1983009808
    %v2290 = vunpack.c.0.s8 %v2289
    %v2291 = vlaneseq
    %v2292 = vshrl.u32 %v2291, 7
    %v2293 = vsub.s32 %v2290, %v2292
    %v2294 = vrot.slane %v2280, %v2293
    %v2295 = vcombine.low %v2287, %v2294
    %v2296 = vcombine.low %v2246, %v2247
    %v2297 = vcombine.low %v2248, %v2249
    %v2299 = vunpack.c.l.s4 1983009808
    %v2300 = vunpack.c.0.s8 %v2299
    %v2301 = vlaneseq
    %v2302 = vshrl.u32 %v2301, 7
    %v2303 = vsub.s32 %v2300, %v2302
    %v2304 = vrot.slane %v2296, %v2303
    %v2306 = vunpack.c.l.s4 1983009808
    %v2307 = vunpack.c.0.s8 %v2306
    %v2308 = vlaneseq
    %v2309 = vshrl.u32 %v2308, 7
    %v2310 = vsub.s32 %v2307, %v2309
    %v2311 = vrot.slane %v2297, %v2310
    %v2312 = vcombine.low %v2304, %v2311
    %2315 = vmatprep.subr.mxu0 %v2114
    %2316 = vmatpush1.msra.mxu0 %v2113
    %2317 = vmatprep.subr.mxu0 %v2118
    %2318 = vmatpush1.msra.mxu0 %v2117
    %2319 = vmatprep.subr.mxu0 %v2122
    %2320 = vmatpush1.msra.mxu0 %v2121
    %2321 = vmatprep.subr.mxu0 %v2126
    %2322 = vmatpush1.msra.mxu0 %v2125
    %2323 = vmatprep.subr.mxu0 %v2130
    %2324 = vmatpush1.msra.mxu0 %v2129
    %2325 = vmatprep.subr.mxu0 %v2134
    %2326 = vmatpush1.msra.mxu0 %v2133
    %2327 = vmatprep.subr.mxu0 %v2138
    %2328 = vmatpush1.msra.mxu0 %v2137
    %2329 = vmatprep.subr.mxu0 %v2142
    %2330 = vmatpush1.msra.mxu0 %v2141
    %2331 = vmatprep.subr.mxu0 %v2146
    %2332 = vmatpush1.msra.mxu0 %v2145
    %2333 = vmatprep.subr.mxu0 %v2150
    %2334 = vmatpush1.msra.mxu0 %v2149
    %2335 = vmatprep.subr.mxu0 %v2154
    %2336 = vmatpush1.msra.mxu0 %v2153
    %2337 = vmatprep.subr.mxu0 %v2158
    %2338 = vmatpush1.msra.mxu0 %v2157
    %2339 = vmatprep.subr.mxu0 %v2162
    %2340 = vmatpush1.msra.mxu0 %v2161
    %2341 = vmatprep.subr.mxu0 %v2166
    %2342 = vmatpush1.msra.mxu0 %v2165
    %2343 = vmatprep.subr.mxu0 %v2170
    %2344 = vmatpush1.msra.mxu0 %v2169
    %2345 = vmatprep.subr.mxu0 %v2174
    %2346 = vmatpush1.msra.mxu0 %v2173
    %2347 = vmatprep.subr.mxu0 0.0
    %2348 = vmatpush1.msra.mxu0 0.0
    %2349 = vmatprep.subr.mxu0 0.0
    %2350 = vmatpush1.msra.mxu0 0.0
    %2351 = vmatprep.subr.mxu0 0.0
    %2352 = vmatpush1.msra.mxu0 0.0
    %2353 = vmatprep.subr.mxu0 0.0
    %2354 = vmatpush1.msra.mxu0 0.0
    %2355 = vmatprep.subr.mxu0 0.0
    %2356 = vmatpush1.msra.mxu0 0.0
    %2357 = vmatprep.subr.mxu0 0.0
    %2358 = vmatpush1.msra.mxu0 0.0
    %2359 = vmatprep.subr.mxu0 0.0
    %2360 = vmatpush1.msra.mxu0 0.0
    %2361 = vmatprep.subr.mxu0 0.0
    %2362 = vmatpush1.msra.mxu0 0.0
    %2363 = vmatprep.subr.mxu0 0.0
    %2364 = vmatpush1.msra.mxu0 0.0
    %2365 = vmatprep.subr.mxu0 0.0
    %2366 = vmatpush1.msra.mxu0 0.0
    %2367 = vmatprep.subr.mxu0 0.0
    %2368 = vmatpush1.msra.mxu0 0.0
    %2369 = vmatprep.subr.mxu0 0.0
    %2370 = vmatpush1.msra.mxu0 0.0
    %2371 = vmatprep.subr.mxu0 0.0
    %2372 = vmatpush1.msra.mxu0 0.0
    %2373 = vmatprep.subr.mxu0 0.0
    %2374 = vmatpush1.msra.mxu0 0.0
    %2375 = vmatprep.subr.mxu0 0.0
    %2376 = vmatpush1.msra.mxu0 0.0
    %2377 = vmatprep.subr.mxu0 0.0
    %2378 = vmatpush1.msra.mxu0 0.0
    %2379 = vmatprep.mubr.f32.mxu0 0.0
    %2380 = vmatmul.mubr.f32.gmra.mrb[0].mxu0 %v2295
    %v2381 = vpop.f32.mrb[0].mxu0
    %v2382 = vadd.f32 %v2254, %v2381
    %v2383 = vpop.f32.mrb[0].mxu0
    %v2384 = vadd.f32 %v2258, %v2383
    %2385 = vmatprep.mubr.f32.mxu0 0.0
    %2386 = vmatmul.mubr.f32.gmra.mrb[0].mxu0 %v2312
    %v2387 = vpop.f32.mrb[0].mxu0
    %v2388 = vadd.f32 %v2254, %v2387
    %v2389 = vpop.f32.mrb[0].mxu0
    %v2390 = vadd.f32 %v2258, %v2389
    %2391 = vdwg.mxu0
    %2392 = vmatprep.subr.mxu0 %v2116
    %2393 = vmatpush1.msra.mxu0 %v2115
    %2394 = vmatprep.subr.mxu0 %v2120
    %2395 = vmatpush1.msra.mxu0 %v2119
    %2396 = vmatprep.subr.mxu0 %v2124
    %2397 = vmatpush1.msra.mxu0 %v2123
    %2398 = vmatprep.subr.mxu0 %v2128
    %2399 = vmatpush1.msra.mxu0 %v2127
    %2400 = vmatprep.subr.mxu0 %v2132
    %2401 = vmatpush1.msra.mxu0 %v2131
    %2402 = vmatprep.subr.mxu0 %v2136
    %2403 = vmatpush1.msra.mxu0 %v2135
    %2404 = vmatprep.subr.mxu0 %v2140
    %2405 = vmatpush1.msra.mxu0 %v2139
    %2406 = vmatprep.subr.mxu0 %v2144
    %2407 = vmatpush1.msra.mxu0 %v2143
    %2408 = vmatprep.subr.mxu0 %v2148
    %2409 = vmatpush1.msra.mxu0 %v2147
    %2410 = vmatprep.subr.mxu0 %v2152
    %2411 = vmatpush1.msra.mxu0 %v2151
    %2412 = vmatprep.subr.mxu0 %v2156
    %2413 = vmatpush1.msra.mxu0 %v2155
    %2414 = vmatprep.subr.mxu0 %v2160
    %2415 = vmatpush1.msra.mxu0 %v2159
    %2416 = vmatprep.subr.mxu0 %v2164
    %2417 = vmatpush1.msra.mxu0 %v2163
    %2418 = vmatprep.subr.mxu0 %v2168
    %2419 = vmatpush1.msra.mxu0 %v2167
    %2420 = vmatprep.subr.mxu0 %v2172
    %2421 = vmatpush1.msra.mxu0 %v2171
    %2422 = vmatprep.subr.mxu0 %v2176
    %2423 = vmatpush1.msra.mxu0 %v2175
    %2424 = vmatprep.subr.mxu0 0.0
    %2425 = vmatpush1.msra.mxu0 0.0
    %2426 = vmatprep.subr.mxu0 0.0
    %2427 = vmatpush1.msra.mxu0 0.0
    %2428 = vmatprep.subr.mxu0 0.0
    %2429 = vmatpush1.msra.mxu0 0.0
    %2430 = vmatprep.subr.mxu0 0.0
    %2431 = vmatpush1.msra.mxu0 0.0
    %2432 = vmatprep.subr.mxu0 0.0
    %2433 = vmatpush1.msra.mxu0 0.0
    %2434 = vmatprep.subr.mxu0 0.0
    %2435 = vmatpush1.msra.mxu0 0.0
    %2436 = vmatprep.subr.mxu0 0.0
    %2437 = vmatpush1.msra.mxu0 0.0
    %2438 = vmatprep.subr.mxu0 0.0
    %2439 = vmatpush1.msra.mxu0 0.0
    %2440 = vmatprep.subr.mxu0 0.0
    %2441 = vmatpush1.msra.mxu0 0.0
    %2442 = vmatprep.subr.mxu0 0.0
    %2443 = vmatpush1.msra.mxu0 0.0
    %2444 = vmatprep.subr.mxu0 0.0
    %2445 = vmatpush1.msra.mxu0 0.0
    %2446 = vmatprep.subr.mxu0 0.0
    %2447 = vmatpush1.msra.mxu0 0.0
    %2448 = vmatprep.subr.mxu0 0.0
    %2449 = vmatpush1.msra.mxu0 0.0
    %2450 = vmatprep.subr.mxu0 0.0
    %2451 = vmatpush1.msra.mxu0 0.0
    %2452 = vmatprep.subr.mxu0 0.0
    %2453 = vmatpush1.msra.mxu0 0.0
    %2454 = vmatprep.subr.mxu0 0.0
    %2455 = vmatpush1.msra.mxu0 0.0
    %2456 = vmatprep.mubr.f32.mxu0 0.0
    %2457 = vmatmul.mubr.f32.gmra.mrb[0].mxu0 %v2295
    %v2458 = vpop.f32.mrb[0].mxu0
    %v2459 = vadd.f32 %v2262, %v2458
    %v2460 = vpop.f32.mrb[0].mxu0
    %v2461 = vadd.f32 %v2266, %v2460
    %2462 = vmatprep.mubr.f32.mxu0 0.0
    %2463 = vmatmul.mubr.f32.gmra.mrb[0].mxu0 %v2312
    %v2464 = vpop.f32.mrb[0].mxu0
    %v2465 = vadd.f32 %v2262, %v2464
    %v2466 = vpop.f32.mrb[0].mxu0
    %v2467 = vadd.f32 %v2266, %v2466
    %2468 = vdwg.mxu0
    %v2477 = vcombine.low %v2382, %v2384
    %v2478 = vcombine.high %v2382, %v2384
    %v2479 = vcombine.low %v2459, %v2461
    %v2480 = vcombine.high %v2459, %v2461
    %v2482 = vunpack.c.l.s4 1983009808
    %v2483 = vunpack.c.0.s8 %v2482
    %v2484 = vlaneseq
    %v2485 = vshrl.u32 %v2484, 7
    %v2486 = vsub.s32 %v2483, %v2485
    %v2487 = vrot.slane %v2477, %v2486
    %v2489 = vunpack.c.l.s4 1983009808
    %v2490 = vunpack.c.0.s8 %v2489
    %v2491 = vlaneseq
    %v2492 = vshrl.u32 %v2491, 7
    %v2493 = vsub.s32 %v2490, %v2492
    %v2494 = vrot.slane %v2478, %v2493
    %v2496 = vunpack.c.l.s4 1983009808
    %v2497 = vunpack.c.0.s8 %v2496
    %v2498 = vlaneseq
    %v2499 = vshrl.u32 %v2498, 7
    %v2500 = vsub.s32 %v2497, %v2499
    %v2501 = vrot.slane %v2479, %v2500
    %v2503 = vunpack.c.l.s4 1983009808
    %v2504 = vunpack.c.0.s8 %v2503
    %v2505 = vlaneseq
    %v2506 = vshrl.u32 %v2505, 7
    %v2507 = vsub.s32 %v2504, %v2506
    %v2508 = vrot.slane %v2480, %v2507
    %v2509 = vcombine.low %v2487, %v2501
    %v2510 = vcombine.high %v2487, %v2501
    %v2511 = vcombine.low %v2494, %v2508
    %v2512 = vcombine.high %v2494, %v2508
    %v2513 = vcombine.low %v2388, %v2390
    %v2514 = vcombine.high %v2388, %v2390
    %v2515 = vcombine.low %v2465, %v2467
    %v2516 = vcombine.high %v2465, %v2467
    %v2518 = vunpack.c.l.s4 1983009808
    %v2519 = vunpack.c.0.s8 %v2518
    %v2520 = vlaneseq
    %v2521 = vshrl.u32 %v2520, 7
    %v2522 = vsub.s32 %v2519, %v2521
    %v2523 = vrot.slane %v2513, %v2522
    %v2525 = vunpack.c.l.s4 1983009808
    %v2526 = vunpack.c.0.s8 %v2525
    %v2527 = vlaneseq
    %v2528 = vshrl.u32 %v2527, 7
    %v2529 = vsub.s32 %v2526, %v2528
    %v2530 = vrot.slane %v2514, %v2529
    %v2532 = vunpack.c.l.s4 1983009808
    %v2533 = vunpack.c.0.s8 %v2532
    %v2534 = vlaneseq
    %v2535 = vshrl.u32 %v2534, 7
    %v2536 = vsub.s32 %v2533, %v2535
    %v2537 = vrot.slane %v2515, %v2536
    %v2539 = vunpack.c.l.s4 1983009808
    %v2540 = vunpack.c.0.s8 %v2539
    %v2541 = vlaneseq
    %v2542 = vshrl.u32 %v2541, 7
    %v2543 = vsub.s32 %v2540, %v2542
    %v2544 = vrot.slane %v2516, %v2543
    %v2545 = vcombine.low %v2523, %v2537
    %v2546 = vcombine.high %v2523, %v2537
    %v2547 = vcombine.low %v2530, %v2544
    %v2548 = vcombine.high %v2530, %v2544
    %2557 = vst [vmem:[#allocation4] sm:$0xff] %v2509
    %2558 = vst [vmem:[#allocation4 + $0x8] sm:$0xff] %v2510
    %2559 = vst [vmem:[#allocation4 + $0x10] sm:$0xff] %v2511
    %2560 = vst [vmem:[#allocation4 + $0x18] sm:$0xff] %v2512
    %2561 = vst [vmem:[#allocation4 + $0x20] sm:$0xff] %v2545
    %2562 = vst [vmem:[#allocation4 + $0x28] sm:$0xff] %v2546
    %2563 = vst [vmem:[#allocation4 + $0x30] sm:$0xff] %v2547
    %2564 = vst [vmem:[#allocation4 + $0x38] sm:$0xff] %v2548
    %2565 = vst [vmem:[#allocation5] sm:$0x3] 0.0
    %2566 = vst [vmem:[#allocation6] sm:$0x3] 0.0
    %v2567 = vld [vmem:[#allocation4] sm:$0xff]
    %v2568 = vld [vmem:[#allocation5] sm:$0x3]
    %2569 = vmatprep.subr.mxu0 %v2178
    %2570 = vmatpush1.msra.mxu0 %v2177
    %2571 = vmatprep.subr.mxu0 %v2182
    %2572 = vmatpush1.msra.mxu0 %v2181
    %2573 = vmatprep.subr.mxu0 %v2186
    %2574 = vmatpush1.msra.mxu0 %v2185
    %2575 = vmatprep.subr.mxu0 %v2190
    %2576 = vmatpush1.msra.mxu0 %v2189
    %2577 = vmatprep.subr.mxu0 %v2194
    %2578 = vmatpush1.msra.mxu0 %v2193
    %2579 = vmatprep.subr.mxu0 %v2198
    %2580 = vmatpush1.msra.mxu0 %v2197
    %2581 = vmatprep.subr.mxu0 %v2202
    %2582 = vmatpush1.msra.mxu0 %v2201
    %2583 = vmatprep.subr.mxu0 %v2206
    %2584 = vmatpush1.msra.mxu0 %v2205
    %2585 = vmatprep.subr.mxu0 %v2210
    %2586 = vmatpush1.msra.mxu0 %v2209
    %2587 = vmatprep.subr.mxu0 %v2214
    %2588 = vmatpush1.msra.mxu0 %v2213
    %2589 = vmatprep.subr.mxu0 %v2218
    %2590 = vmatpush1.msra.mxu0 %v2217
    %2591 = vmatprep.subr.mxu0 %v2222
    %2592 = vmatpush1.msra.mxu0 %v2221
    %2593 = vmatprep.subr.mxu0 %v2226
    %2594 = vmatpush1.msra.mxu0 %v2225
    %2595 = vmatprep.subr.mxu0 %v2230
    %2596 = vmatpush1.msra.mxu0 %v2229
    %2597 = vmatprep.subr.mxu0 %v2234
    %2598 = vmatpush1.msra.mxu0 %v2233
    %2599 = vmatprep.subr.mxu0 %v2238
    %2600 = vmatpush1.msra.mxu0 %v2237
    %2601 = vmatprep.subr.mxu0 0.0
    %2602 = vmatpush1.msra.mxu0 0.0
    %2603 = vmatprep.subr.mxu0 0.0
    %2604 = vmatpush1.msra.mxu0 0.0
    %2605 = vmatprep.subr.mxu0 0.0
    %2606 = vmatpush1.msra.mxu0 0.0
    %2607 = vmatprep.subr.mxu0 0.0
    %2608 = vmatpush1.msra.mxu0 0.0
    %2609 = vmatprep.subr.mxu0 0.0
    %2610 = vmatpush1.msra.mxu0 0.0
    %2611 = vmatprep.subr.mxu0 0.0
    %2612 = vmatpush1.msra.mxu0 0.0
    %2613 = vmatprep.subr.mxu0 0.0
    %2614 = vmatpush1.msra.mxu0 0.0
    %2615 = vmatprep.subr.mxu0 0.0
    %2616 = vmatpush1.msra.mxu0 0.0
    %2617 = vmatprep.subr.mxu0 0.0
    %2618 = vmatpush1.msra.mxu0 0.0
    %2619 = vmatprep.subr.mxu0 0.0
    %2620 = vmatpush1.msra.mxu0 0.0
    %2621 = vmatprep.subr.mxu0 0.0
    %2622 = vmatpush1.msra.mxu0 0.0
    %2623 = vmatprep.subr.mxu0 0.0
    %2624 = vmatpush1.msra.mxu0 0.0
    %2625 = vmatprep.subr.mxu0 0.0
    %2626 = vmatpush1.msra.mxu0 0.0
    %2627 = vmatprep.subr.mxu0 0.0
    %2628 = vmatpush1.msra.mxu0 0.0
    %2629 = vmatprep.subr.mxu0 0.0
    %2630 = vmatpush1.msra.mxu0 0.0
    %2631 = vmatprep.subr.mxu0 0.0
    %2632 = vmatpush1.msra.mxu0 0.0
    %2633 = vmatprep.mubr.f32.mxu0 0.0
    %2634 = vmatmul.mubr.f32.gmra.mrb[0].mxu0 %v2568
    %v2635 = vpop.f32.mrb[0].mxu0
    %v2636 = vadd.f32 0.0, %v2635
    %v2637 = vpop.f32.mrb[0].mxu0
    %v2638 = vadd.f32 0.0, %v2637
    %2639 = vdwg.mxu0
    %2640 = vmatprep.subr.mxu0 %v2180
    %2641 = vmatpush1.msra.mxu0 %v2179
    %2642 = vmatprep.subr.mxu0 %v2184
    %2643 = vmatpush1.msra.mxu0 %v2183
    %2644 = vmatprep.subr.mxu0 %v2188
    %2645 = vmatpush1.msra.mxu0 %v2187
    %2646 = vmatprep.subr.mxu0 %v2192
    %2647 = vmatpush1.msra.mxu0 %v2191
    %2648 = vmatprep.subr.mxu0 %v2196
    %2649 = vmatpush1.msra.mxu0 %v2195
    %2650 = vmatprep.subr.mxu0 %v2200
    %2651 = vmatpush1.msra.mxu0 %v2199
    %2652 = vmatprep.subr.mxu0 %v2204
    %2653 = vmatpush1.msra.mxu0 %v2203
    %2654 = vmatprep.subr.mxu0 %v2208
    %2655 = vmatpush1.msra.mxu0 %v2207
    %2656 = vmatprep.subr.mxu0 %v2212
    %2657 = vmatpush1.msra.mxu0 %v2211
    %2658 = vmatprep.subr.mxu0 %v2216
    %2659 = vmatpush1.msra.mxu0 %v2215
    %2660 = vmatprep.subr.mxu0 %v2220
    %2661 = vmatpush1.msra.mxu0 %v2219
    %2662 = vmatprep.subr.mxu0 %v2224
    %2663 = vmatpush1.msra.mxu0 %v2223
    %2664 = vmatprep.subr.mxu0 %v2228
    %2665 = vmatpush1.msra.mxu0 %v2227
    %2666 = vmatprep.subr.mxu0 %v2232
    %2667 = vmatpush1.msra.mxu0 %v2231
    %2668 = vmatprep.subr.mxu0 %v2236
    %2669 = vmatpush1.msra.mxu0 %v2235
    %2670 = vmatprep.subr.mxu0 %v2240
    %2671 = vmatpush1.msra.mxu0 %v2239
    %2672 = vmatprep.subr.mxu0 0.0
    %2673 = vmatpush1.msra.mxu0 0.0
    %2674 = vmatprep.subr.mxu0 0.0
    %2675 = vmatpush1.msra.mxu0 0.0
    %2676 = vmatprep.subr.mxu0 0.0
    %2677 = vmatpush1.msra.mxu0 0.0
    %2678 = vmatprep.subr.mxu0 0.0
    %2679 = vmatpush1.msra.mxu0 0.0
    %2680 = vmatprep.subr.mxu0 0.0
    %2681 = vmatpush1.msra.mxu0 0.0
    %2682 = vmatprep.subr.mxu0 0.0
    %2683 = vmatpush1.msra.mxu0 0.0
    %2684 = vmatprep.subr.mxu0 0.0
    %2685 = vmatpush1.msra.mxu0 0.0
    %2686 = vmatprep.subr.mxu0 0.0
    %2687 = vmatpush1.msra.mxu0 0.0
    %2688 = vmatprep.subr.mxu0 0.0
    %2689 = vmatpush1.msra.mxu0 0.0
    %2690 = vmatprep.subr.mxu0 0.0
    %2691 = vmatpush1.msra.mxu0 0.0
    %2692 = vmatprep.subr.mxu0 0.0
    %2693 = vmatpush1.msra.mxu0 0.0
    %2694 = vmatprep.subr.mxu0 0.0
    %2695 = vmatpush1.msra.mxu0 0.0
    %2696 = vmatprep.subr.mxu0 0.0
    %2697 = vmatpush1.msra.mxu0 0.0
    %2698 = vmatprep.subr.mxu0 0.0
    %2699 = vmatpush1.msra.mxu0 0.0
    %2700 = vmatprep.subr.mxu0 0.0
    %2701 = vmatpush1.msra.mxu0 0.0
    %2702 = vmatprep.subr.mxu0 0.0
    %2703 = vmatpush1.msra.mxu0 0.0
    %2704 = vmatprep.mubr.f32.mxu0 0.0
    %2705 = vmatmul.mubr.f32.gmra.mrb[0].mxu0 %v2568
    %v2706 = vpop.f32.mrb[0].mxu0
    %v2707 = vadd.f32 0.0, %v2706
    %v2708 = vpop.f32.mrb[0].mxu0
    %v2709 = vadd.f32 0.0, %v2708
    %2710 = vdwg.mxu0
    %v2715 = vcombine.low %v2636, %v2638
    %v2716 = vcombine.low %v2707, %v2709
    %v2718 = vunpack.c.l.s4 1983009808
    %v2719 = vunpack.c.0.s8 %v2718
    %v2720 = vlaneseq
    %v2721 = vshrl.u32 %v2720, 7
    %v2722 = vsub.s32 %v2719, %v2721
    %v2723 = vrot.slane %v2715, %v2722
    %v2725 = vunpack.c.l.s4 1983009808
    %v2726 = vunpack.c.0.s8 %v2725
    %v2727 = vlaneseq
    %v2728 = vshrl.u32 %v2727, 7
    %v2729 = vsub.s32 %v2726, %v2728
    %v2730 = vrot.slane %v2716, %v2729
    %v2731 = vcombine.low %v2723, %v2730
    %v2733 = vadd.f32 %v2567, %v2731
    %v2734 = vxor.u32 %v2733, 2147483648
    %v2735 = vmul.f32 %v2734, 1.442695
    %v2736 = vpow.pop %v2735
    %v2737 = vadd.f32 %v2736, 1.0
    %v2738 = vrcp.pop %v2737
    %v2739 = vmul.f32 1.0, %v2738
    %v2741 = vrot.slane %v2733, 2
    %v2743 = vxor.u32 %v2741, 2147483648
    %v2744 = vmul.f32 %v2743, 1.442695
    %v2745 = vpow.pop %v2744
    %v2746 = vadd.f32 %v2745, 1.0
    %v2747 = vrcp.pop %v2746
    %v2748 = vmul.f32 1.0, %v2747
    %v2749 = vrot.slane %v2733, 4
    %v2751 = vtanh.pop %v2749
    %v2752 = vrot.slane %v2733, 6
    %v2754 = vxor.u32 %v2752, 2147483648
    %v2755 = vmul.f32 %v2754, 1.442695
    %v2756 = vpow.pop %v2755
    %v2757 = vadd.f32 %v2756, 1.0
    %v2758 = vrcp.pop %v2757
    %v2759 = vmul.f32 1.0, %v2758
    %v2760 = vld [vmem:[#allocation6] sm:$0x3]
    %v2761 = vmul.f32 %v2748, %v2760
    %v2762 = vmul.f32 %v2739, %v2751
    %v2763 = vadd.f32 %v2761, %v2762
    %v2764 = vtanh.pop %v2763
    %v2765 = vmul.f32 %v2759, %v2764
    %2766 = vst [vmem:[#allocation6] sm:$0x3] %v2763
    %2767 = vst [vmem:[#allocation5] sm:$0x3] %v2765
    %v2768 = vld [vmem:[%s685] sm:$0xff]
    %v2769 = vld [vmem:[#allocation5] sm:$0x3]
    %2770 = vmatprep.subr.mxu0 %v2178
    %2771 = vmatpush1.msra.mxu0 %v2177
    %2772 = vmatprep.subr.mxu0 %v2182
    %2773 = vmatpush1.msra.mxu0 %v2181
    %2774 = vmatprep.subr.mxu0 %v2186
    %2775 = vmatpush1.msra.mxu0 %v2185
    %2776 = vmatprep.subr.mxu0 %v2190
    %2777 = vmatpush1.msra.mxu0 %v2189
    %2778 = vmatprep.subr.mxu0 %v2194
    %2779 = vmatpush1.msra.mxu0 %v2193
    %2780 = vmatprep.subr.mxu0 %v2198
    %2781 = vmatpush1.msra.mxu0 %v2197
    %2782 = vmatprep.subr.mxu0 %v2202
    %2783 = vmatpush1.msra.mxu0 %v2201
    %2784 = vmatprep.subr.mxu0 %v2206
    %2785 = vmatpush1.msra.mxu0 %v2205
    %2786 = vmatprep.subr.mxu0 %v2210
    %2787 = vmatpush1.msra.mxu0 %v2209
    %2788 = vmatprep.subr.mxu0 %v2214
    %2789 = vmatpush1.msra.mxu0 %v2213
    %2790 = vmatprep.subr.mxu0 %v2218
    %2791 = vmatpush1.msra.mxu0 %v2217
    %2792 = vmatprep.subr.mxu0 %v2222
    %2793 = vmatpush1.msra.mxu0 %v2221
    %2794 = vmatprep.subr.mxu0 %v2226
    %2795 = vmatpush1.msra.mxu0 %v2225
    %2796 = vmatprep.subr.mxu0 %v2230
    %2797 = vmatpush1.msra.mxu0 %v2229
    %2798 = vmatprep.subr.mxu0 %v2234
    %2799 = vmatpush1.msra.mxu0 %v2233
    %2800 = vmatprep.subr.mxu0 %v2238
    %2801 = vmatpush1.msra.mxu0 %v2237
    %2802 = vmatprep.subr.mxu0 0.0
    %2803 = vmatpush1.msra.mxu0 0.0
    %2804 = vmatprep.subr.mxu0 0.0
    %2805 = vmatpush1.msra.mxu0 0.0
    %2806 = vmatprep.subr.mxu0 0.0
    %2807 = vmatpush1.msra.mxu0 0.0
    %2808 = vmatprep.subr.mxu0 0.0
    %2809 = vmatpush1.msra.mxu0 0.0
    %2810 = vmatprep.subr.mxu0 0.0
    %2811 = vmatpush1.msra.mxu0 0.0
    %2812 = vmatprep.subr.mxu0 0.0
    %2813 = vmatpush1.msra.mxu0 0.0
    %2814 = vmatprep.subr.mxu0 0.0
    %2815 = vmatpush1.msra.mxu0 0.0
    %2816 = vmatprep.subr.mxu0 0.0
    %2817 = vmatpush1.msra.mxu0 0.0
    %2818 = vmatprep.subr.mxu0 0.0
    %2819 = vmatpush1.msra.mxu0 0.0
    %2820 = vmatprep.subr.mxu0 0.0
    %2821 = vmatpush1.msra.mxu0 0.0
    %2822 = vmatprep.subr.mxu0 0.0
    %2823 = vmatpush1.msra.mxu0 0.0
    %2824 = vmatprep.subr.mxu0 0.0
    %2825 = vmatpush1.msra.mxu0 0.0
    %2826 = vmatprep.subr.mxu0 0.0
    %2827 = vmatpush1.msra.mxu0 0.0
    %2828 = vmatprep.subr.mxu0 0.0
    %2829 = vmatpush1.msra.mxu0 0.0
    %2830 = vmatprep.subr.mxu0 0.0
    %2831 = vmatpush1.msra.mxu0 0.0
    %2832 = vmatprep.subr.mxu0 0.0
    %2833 = vmatpush1.msra.mxu0 0.0
    %2834 = vmatprep.mubr.f32.mxu0 0.0
    %2835 = vmatmul.mubr.f32.gmra.mrb[0].mxu0 %v2769
    %v2836 = vpop.f32.mrb[0].mxu0
    %v2837 = vadd.f32 0.0, %v2836
    %v2838 = vpop.f32.mrb[0].mxu0
    %v2839 = vadd.f32 0.0, %v2838
    %2840 = vdwg.mxu0
    %2841 = vmatprep.subr.mxu0 %v2180
    %2842 = vmatpush1.msra.mxu0 %v2179
    %2843 = vmatprep.subr.mxu0 %v2184
    %2844 = vmatpush1.msra.mxu0 %v2183
    %2845 = vmatprep.subr.mxu0 %v2188
    %2846 = vmatpush1.msra.mxu0 %v2187
    %2847 = vmatprep.subr.mxu0 %v2192
    %2848 = vmatpush1.msra.mxu0 %v2191
    %2849 = vmatprep.subr.mxu0 %v2196
    %2850 = vmatpush1.msra.mxu0 %v2195
    %2851 = vmatprep.subr.mxu0 %v2200
    %2852 = vmatpush1.msra.mxu0 %v2199
    %2853 = vmatprep.subr.mxu0 %v2204
    %2854 = vmatpush1.msra.mxu0 %v2203
    %2855 = vmatprep.subr.mxu0 %v2208
    %2856 = vmatpush1.msra.mxu0 %v2207
    %2857 = vmatprep.subr.mxu0 %v2212
    %2858 = vmatpush1.msra.mxu0 %v2211
    %2859 = vmatprep.subr.mxu0 %v2216
    %2860 = vmatpush1.msra.mxu0 %v2215
    %2861 = vmatprep.subr.mxu0 %v2220
    %2862 = vmatpush1.msra.mxu0 %v2219
    %2863 = vmatprep.subr.mxu0 %v2224
    %2864 = vmatpush1.msra.mxu0 %v2223
    %2865 = vmatprep.subr.mxu0 %v2228
    %2866 = vmatpush1.msra.mxu0 %v2227
    %2867 = vmatprep.subr.mxu0 %v2232
    %2868 = vmatpush1.msra.mxu0 %v2231
    %2869 = vmatprep.subr.mxu0 %v2236
    %2870 = vmatpush1.msra.mxu0 %v2235
    %2871 = vmatprep.subr.mxu0 %v2240
    %2872 = vmatpush1.msra.mxu0 %v2239
    %2873 = vmatprep.subr.mxu0 0.0
    %2874 = vmatpush1.msra.mxu0 0.0
    %2875 = vmatprep.subr.mxu0 0.0
    %2876 = vmatpush1.msra.mxu0 0.0
    %2877 = vmatprep.subr.mxu0 0.0
    %2878 = vmatpush1.msra.mxu0 0.0
    %2879 = vmatprep.subr.mxu0 0.0
    %2880 = vmatpush1.msra.mxu0 0.0
    %2881 = vmatprep.subr.mxu0 0.0
    %2882 = vmatpush1.msra.mxu0 0.0
    %2883 = vmatprep.subr.mxu0 0.0
    %2884 = vmatpush1.msra.mxu0 0.0
    %2885 = vmatprep.subr.mxu0 0.0
    %2886 = vmatpush1.msra.mxu0 0.0
    %2887 = vmatprep.subr.mxu0 0.0
    %2888 = vmatpush1.msra.mxu0 0.0
    %2889 = vmatprep.subr.mxu0 0.0
    %2890 = vmatpush1.msra.mxu0 0.0
    %2891 = vmatprep.subr.mxu0 0.0
    %2892 = vmatpush1.msra.mxu0 0.0
    %2893 = vmatprep.subr.mxu0 0.0
    %2894 = vmatpush1.msra.mxu0 0.0
    %2895 = vmatprep.subr.mxu0 0.0
    %2896 = vmatpush1.msra.mxu0 0.0
    %2897 = vmatprep.subr.mxu0 0.0
    %2898 = vmatpush1.msra.mxu0 0.0
    %2899 = vmatprep.subr.mxu0 0.0
    %2900 = vmatpush1.msra.mxu0 0.0
    %2901 = vmatprep.subr.mxu0 0.0
    %2902 = vmatpush1.msra.mxu0 0.0
    %2903 = vmatprep.subr.mxu0 0.0
    %2904 = vmatpush1.msra.mxu0 0.0
    %2905 = vmatprep.mubr.f32.mxu0 0.0
    %2906 = vmatmul.mubr.f32.gmra.mrb[0].mxu0 %v2769
    %v2907 = vpop.f32.mrb[0].mxu0
    %v2908 = vadd.f32 0.0, %v2907
    %v2909 = vpop.f32.mrb[0].mxu0
    %v2910 = vadd.f32 0.0, %v2909
    %2911 = vdwg.mxu0
    %v2916 = vcombine.low %v2837, %v2839
    %v2917 = vcombine.low %v2908, %v2910
    %v2919 = vunpack.c.l.s4 1983009808
    %v2920 = vunpack.c.0.s8 %v2919
    %v2921 = vlaneseq
    %v2922 = vshrl.u32 %v2921, 7
    %v2923 = vsub.s32 %v2920, %v2922
    %v2924 = vrot.slane %v2916, %v2923
    %v2926 = vunpack.c.l.s4 1983009808
    %v2927 = vunpack.c.0.s8 %v2926
    %v2928 = vlaneseq
    %v2929 = vshrl.u32 %v2928, 7
    %v2930 = vsub.s32 %v2927, %v2929
    %v2931 = vrot.slane %v2917, %v2930
    %v2932 = vcombine.low %v2924, %v2931
    %v2934 = vadd.f32 %v2768, %v2932
    %v2935 = vxor.u32 %v2934, 2147483648
    %v2936 = vmul.f32 %v2935, 1.442695
    %v2937 = vpow.pop %v2936
    %v2938 = vadd.f32 %v2937, 1.0
    %v2939 = vrcp.pop %v2938
    %v2940 = vmul.f32 1.0, %v2939
    %v2942 = vrot.slane %v2934, 2
    %v2944 = vxor.u32 %v2942, 2147483648
    %v2945 = vmul.f32 %v2944, 1.442695
    %v2946 = vpow.pop %v2945
    %v2947 = vadd.f32 %v2946, 1.0
    %v2948 = vrcp.pop %v2947
    %v2949 = vmul.f32 1.0, %v2948
    %v2950 = vrot.slane %v2934, 4
    %v2952 = vtanh.pop %v2950
    %v2953 = vrot.slane %v2934, 6
    %v2955 = vxor.u32 %v2953, 2147483648
    %v2956 = vmul.f32 %v2955, 1.442695
    %v2957 = vpow.pop %v2956
    %v2958 = vadd.f32 %v2957, 1.0
    %v2959 = vrcp.pop %v2958
    %v2960 = vmul.f32 1.0, %v2959
    %v2961 = vld [vmem:[#allocation6] sm:$0x3]
    %v2962 = vmul.f32 %v2949, %v2961
    %v2963 = vmul.f32 %v2940, %v2952
    %v2964 = vadd.f32 %v2962, %v2963
    %v2965 = vtanh.pop %v2964
    %v2966 = vmul.f32 %v2960, %v2965
    %2967 = vst [vmem:[#allocation6] sm:$0x3] %v2964
    %2968 = vst [vmem:[#allocation5] sm:$0x3] %v2966
    %v2969 = vld [vmem:[%s889] sm:$0xff]
    %v2970 = vld [vmem:[#allocation5] sm:$0x3]
    %2971 = vmatprep.subr.mxu0 %v2178
    %2972 = vmatpush1.msra.mxu0 %v2177
    %2973 = vmatprep.subr.mxu0 %v2182
    %2974 = vmatpush1.msra.mxu0 %v2181
    %2975 = vmatprep.subr.mxu0 %v2186
    %2976 = vmatpush1.msra.mxu0 %v2185
    %2977 = vmatprep.subr.mxu0 %v2190
    %2978 = vmatpush1.msra.mxu0 %v2189
    %2979 = vmatprep.subr.mxu0 %v2194
    %2980 = vmatpush1.msra.mxu0 %v2193
    %2981 = vmatprep.subr.mxu0 %v2198
    %2982 = vmatpush1.msra.mxu0 %v2197
    %2983 = vmatprep.subr.mxu0 %v2202
    %2984 = vmatpush1.msra.mxu0 %v2201
    %2985 = vmatprep.subr.mxu0 %v2206
    %2986 = vmatpush1.msra.mxu0 %v2205
    %2987 = vmatprep.subr.mxu0 %v2210
    %2988 = vmatpush1.msra.mxu0 %v2209
    %2989 = vmatprep.subr.mxu0 %v2214
    %2990 = vmatpush1.msra.mxu0 %v2213
    %2991 = vmatprep.subr.mxu0 %v2218
    %2992 = vmatpush1.msra.mxu0 %v2217
    %2993 = vmatprep.subr.mxu0 %v2222
    %2994 = vmatpush1.msra.mxu0 %v2221
    %2995 = vmatprep.subr.mxu0 %v2226
    %2996 = vmatpush1.msra.mxu0 %v2225
    %2997 = vmatprep.subr.mxu0 %v2230
    %2998 = vmatpush1.msra.mxu0 %v2229
    %2999 = vmatprep.subr.mxu0 %v2234
    %3000 = vmatpush1.msra.mxu0 %v2233
    %3001 = vmatprep.subr.mxu0 %v2238
    %3002 = vmatpush1.msra.mxu0 %v2237
    %3003 = vmatprep.subr.mxu0 0.0
    %3004 = vmatpush1.msra.mxu0 0.0
    %3005 = vmatprep.subr.mxu0 0.0
    %3006 = vmatpush1.msra.mxu0 0.0
    %3007 = vmatprep.subr.mxu0 0.0
    %3008 = vmatpush1.msra.mxu0 0.0
    %3009 = vmatprep.subr.mxu0 0.0
    %3010 = vmatpush1.msra.mxu0 0.0
    %3011 = vmatprep.subr.mxu0 0.0
    %3012 = vmatpush1.msra.mxu0 0.0
    %3013 = vmatprep.subr.mxu0 0.0
    %3014 = vmatpush1.msra.mxu0 0.0
    %3015 = vmatprep.subr.mxu0 0.0
    %3016 = vmatpush1.msra.mxu0 0.0
    %3017 = vmatprep.subr.mxu0 0.0
    %3018 = vmatpush1.msra.mxu0 0.0
    %3019 = vmatprep.subr.mxu0 0.0
    %3020 = vmatpush1.msra.mxu0 0.0
    %3021 = vmatprep.subr.mxu0 0.0
    %3022 = vmatpush1.msra.mxu0 0.0
    %3023 = vmatprep.subr.mxu0 0.0
    %3024 = vmatpush1.msra.mxu0 0.0
    %3025 = vmatprep.subr.mxu0 0.0
    %3026 = vmatpush1.msra.mxu0 0.0
    %3027 = vmatprep.subr.mxu0 0.0
    %3028 = vmatpush1.msra.mxu0 0.0
    %3029 = vmatprep.subr.mxu0 0.0
    %3030 = vmatpush1.msra.mxu0 0.0
    %3031 = vmatprep.subr.mxu0 0.0
    %3032 = vmatpush1.msra.mxu0 0.0
    %3033 = vmatprep.subr.mxu0 0.0
    %3034 = vmatpush1.msra.mxu0 0.0
    %3035 = vmatprep.mubr.f32.mxu0 0.0
    %3036 = vmatmul.mubr.f32.gmra.mrb[0].mxu0 %v2970
    %v3037 = vpop.f32.mrb[0].mxu0
    %v3038 = vadd.f32 0.0, %v3037
    %v3039 = vpop.f32.mrb[0].mxu0
    %v3040 = vadd.f32 0.0, %v3039
    %3041 = vdwg.mxu0
    %3042 = vmatprep.subr.mxu0 %v2180
    %3043 = vmatpush1.msra.mxu0 %v2179
    %3044 = vmatprep.subr.mxu0 %v2184
    %3045 = vmatpush1.msra.mxu0 %v2183
    %3046 = vmatprep.subr.mxu0 %v2188
    %3047 = vmatpush1.msra.mxu0 %v2187
    %3048 = vmatprep.subr.mxu0 %v2192
    %3049 = vmatpush1.msra.mxu0 %v2191
    %3050 = vmatprep.subr.mxu0 %v2196
    %3051 = vmatpush1.msra.mxu0 %v2195
    %3052 = vmatprep.subr.mxu0 %v2200
    %3053 = vmatpush1.msra.mxu0 %v2199
    %3054 = vmatprep.subr.mxu0 %v2204
    %3055 = vmatpush1.msra.mxu0 %v2203
    %3056 = vmatprep.subr.mxu0 %v2208
    %3057 = vmatpush1.msra.mxu0 %v2207
    %3058 = vmatprep.subr.mxu0 %v2212
    %3059 = vmatpush1.msra.mxu0 %v2211
    %3060 = vmatprep.subr.mxu0 %v2216
    %3061 = vmatpush1.msra.mxu0 %v2215
    %3062 = vmatprep.subr.mxu0 %v2220
    %3063 = vmatpush1.msra.mxu0 %v2219
    %3064 = vmatprep.subr.mxu0 %v2224
    %3065 = vmatpush1.msra.mxu0 %v2223
    %3066 = vmatprep.subr.mxu0 %v2228
    %3067 = vmatpush1.msra.mxu0 %v2227
    %3068 = vmatprep.subr.mxu0 %v2232
    %3069 = vmatpush1.msra.mxu0 %v2231
    %3070 = vmatprep.subr.mxu0 %v2236
    %3071 = vmatpush1.msra.mxu0 %v2235
    %3072 = vmatprep.subr.mxu0 %v2240
    %3073 = vmatpush1.msra.mxu0 %v2239
    %3074 = vmatprep.subr.mxu0 0.0
    %3075 = vmatpush1.msra.mxu0 0.0
    %3076 = vmatprep.subr.mxu0 0.0
    %3077 = vmatpush1.msra.mxu0 0.0
    %3078 = vmatprep.subr.mxu0 0.0
    %3079 = vmatpush1.msra.mxu0 0.0
    %3080 = vmatprep.subr.mxu0 0.0
    %3081 = vmatpush1.msra.mxu0 0.0
    %3082 = vmatprep.subr.mxu0 0.0
    %3083 = vmatpush1.msra.mxu0 0.0
    %3084 = vmatprep.subr.mxu0 0.0
    %3085 = vmatpush1.msra.mxu0 0.0
    %3086 = vmatprep.subr.mxu0 0.0
    %3087 = vmatpush1.msra.mxu0 0.0
    %3088 = vmatprep.subr.mxu0 0.0
    %3089 = vmatpush1.msra.mxu0 0.0
    %3090 = vmatprep.subr.mxu0 0.0
    %3091 = vmatpush1.msra.mxu0 0.0
    %3092 = vmatprep.subr.mxu0 0.0
    %3093 = vmatpush1.msra.mxu0 0.0
    %3094 = vmatprep.subr.mxu0 0.0
    %3095 = vmatpush1.msra.mxu0 0.0
    %3096 = vmatprep.subr.mxu0 0.0
    %3097 = vmatpush1.msra.mxu0 0.0
    %3098 = vmatprep.subr.mxu0 0.0
    %3099 = vmatpush1.msra.mxu0 0.0
    %3100 = vmatprep.subr.mxu0 0.0
    %3101 = vmatpush1.msra.mxu0 0.0
    %3102 = vmatprep.subr.mxu0 0.0
    %3103 = vmatpush1.msra.mxu0 0.0
    %3104 = vmatprep.subr.mxu0 0.0
    %3105 = vmatpush1.msra.mxu0 0.0
    %3106 = vmatprep.mubr.f32.mxu0 0.0
    %3107 = vmatmul.mubr.f32.gmra.mrb[0].mxu0 %v2970
    %v3108 = vpop.f32.mrb[0].mxu0
    %v3109 = vadd.f32 0.0, %v3108
    %v3110 = vpop.f32.mrb[0].mxu0
    %v3111 = vadd.f32 0.0, %v3110
    %3112 = vdwg.mxu0
    %v3117 = vcombine.low %v3038, %v3040
    %v3118 = vcombine.low %v3109, %v3111
    %v3120 = vunpack.c.l.s4 1983009808
    %v3121 = vunpack.c.0.s8 %v3120
    %v3122 = vlaneseq
    %v3123 = vshrl.u32 %v3122, 7
    %v3124 = vsub.s32 %v3121, %v3123
    %v3125 = vrot.slane %v3117, %v3124
    %v3127 = vunpack.c.l.s4 1983009808
    %v3128 = vunpack.c.0.s8 %v3127
    %v3129 = vlaneseq
    %v3130 = vshrl.u32 %v3129, 7
    %v3131 = vsub.s32 %v3128, %v3130
    %v3132 = vrot.slane %v3118, %v3131
    %v3133 = vcombine.low %v3125, %v3132
    %v3135 = vadd.f32 %v2969, %v3133
    %v3136 = vxor.u32 %v3135, 2147483648
    %v3137 = vmul.f32 %v3136, 1.442695
    %v3138 = vpow.pop %v3137
    %v3139 = vadd.f32 %v3138, 1.0
    %v3140 = vrcp.pop %v3139
    %v3141 = vmul.f32 1.0, %v3140
    %v3143 = vrot.slane %v3135, 2
    %v3145 = vxor.u32 %v3143, 2147483648
    %v3146 = vmul.f32 %v3145, 1.442695
    %v3147 = vpow.pop %v3146
    %v3148 = vadd.f32 %v3147, 1.0
    %v3149 = vrcp.pop %v3148
    %v3150 = vmul.f32 1.0, %v3149
    %v3151 = vrot.slane %v3135, 4
    %v3153 = vtanh.pop %v3151
    %v3154 = vrot.slane %v3135, 6
    %v3156 = vxor.u32 %v3154, 2147483648
    %v3157 = vmul.f32 %v3156, 1.442695
    %v3158 = vpow.pop %v3157
    %v3159 = vadd.f32 %v3158, 1.0
    %v3160 = vrcp.pop %v3159
    %v3161 = vmul.f32 1.0, %v3160
    %v3162 = vld [vmem:[#allocation6] sm:$0x3]
    %v3163 = vmul.f32 %v3150, %v3162
    %v3164 = vmul.f32 %v3141, %v3153
    %v3165 = vadd.f32 %v3163, %v3164
    %v3166 = vtanh.pop %v3165
    %v3167 = vmul.f32 %v3161, %v3166
    %3168 = vst [vmem:[#allocation6] sm:$0x3] %v3165
    %3169 = vst [vmem:[#allocation5] sm:$0x3] %v3167
    %v3170 = vld [vmem:[%s1093] sm:$0xff]
    %v3171 = vld [vmem:[#allocation5] sm:$0x3]
    %3172 = vmatprep.subr.mxu0 %v2178
    %3173 = vmatpush1.msra.mxu0 %v2177
    %3174 = vmatprep.subr.mxu0 %v2182
    %3175 = vmatpush1.msra.mxu0 %v2181
    %3176 = vmatprep.subr.mxu0 %v2186
    %3177 = vmatpush1.msra.mxu0 %v2185
    %3178 = vmatprep.subr.mxu0 %v2190
    %3179 = vmatpush1.msra.mxu0 %v2189
    %3180 = vmatprep.subr.mxu0 %v2194
    %3181 = vmatpush1.msra.mxu0 %v2193
    %3182 = vmatprep.subr.mxu0 %v2198
    %3183 = vmatpush1.msra.mxu0 %v2197
    %3184 = vmatprep.subr.mxu0 %v2202
    %3185 = vmatpush1.msra.mxu0 %v2201
    %3186 = vmatprep.subr.mxu0 %v2206
    %3187 = vmatpush1.msra.mxu0 %v2205
    %3188 = vmatprep.subr.mxu0 %v2210
    %3189 = vmatpush1.msra.mxu0 %v2209
    %3190 = vmatprep.subr.mxu0 %v2214
    %3191 = vmatpush1.msra.mxu0 %v2213
    %3192 = vmatprep.subr.mxu0 %v2218
    %3193 = vmatpush1.msra.mxu0 %v2217
    %3194 = vmatprep.subr.mxu0 %v2222
    %3195 = vmatpush1.msra.mxu0 %v2221
    %3196 = vmatprep.subr.mxu0 %v2226
    %3197 = vmatpush1.msra.mxu0 %v2225
    %3198 = vmatprep.subr.mxu0 %v2230
    %3199 = vmatpush1.msra.mxu0 %v2229
    %3200 = vmatprep.subr.mxu0 %v2234
    %3201 = vmatpush1.msra.mxu0 %v2233
    %3202 = vmatprep.subr.mxu0 %v2238
    %3203 = vmatpush1.msra.mxu0 %v2237
    %3204 = vmatprep.subr.mxu0 0.0
    %3205 = vmatpush1.msra.mxu0 0.0
    %3206 = vmatprep.subr.mxu0 0.0
    %3207 = vmatpush1.msra.mxu0 0.0
    %3208 = vmatprep.subr.mxu0 0.0
    %3209 = vmatpush1.msra.mxu0 0.0
    %3210 = vmatprep.subr.mxu0 0.0
    %3211 = vmatpush1.msra.mxu0 0.0
    %3212 = vmatprep.subr.mxu0 0.0
    %3213 = vmatpush1.msra.mxu0 0.0
    %3214 = vmatprep.subr.mxu0 0.0
    %3215 = vmatpush1.msra.mxu0 0.0
    %3216 = vmatprep.subr.mxu0 0.0
    %3217 = vmatpush1.msra.mxu0 0.0
    %3218 = vmatprep.subr.mxu0 0.0
    %3219 = vmatpush1.msra.mxu0 0.0
    %3220 = vmatprep.subr.mxu0 0.0
    %3221 = vmatpush1.msra.mxu0 0.0
    %3222 = vmatprep.subr.mxu0 0.0
    %3223 = vmatpush1.msra.mxu0 0.0
    %3224 = vmatprep.subr.mxu0 0.0
    %3225 = vmatpush1.msra.mxu0 0.0
    %3226 = vmatprep.subr.mxu0 0.0
    %3227 = vmatpush1.msra.mxu0 0.0
    %3228 = vmatprep.subr.mxu0 0.0
    %3229 = vmatpush1.msra.mxu0 0.0
    %3230 = vmatprep.subr.mxu0 0.0
    %3231 = vmatpush1.msra.mxu0 0.0
    %3232 = vmatprep.subr.mxu0 0.0
    %3233 = vmatpush1.msra.mxu0 0.0
    %3234 = vmatprep.subr.mxu0 0.0
    %3235 = vmatpush1.msra.mxu0 0.0
    %3236 = vmatprep.mubr.f32.mxu0 0.0
    %3237 = vmatmul.mubr.f32.gmra.mrb[0].mxu0 %v3171
    %v3238 = vpop.f32.mrb[0].mxu0
    %v3239 = vadd.f32 0.0, %v3238
    %v3240 = vpop.f32.mrb[0].mxu0
    %v3241 = vadd.f32 0.0, %v3240
    %3242 = vdwg.mxu0
    %3243 = vmatprep.subr.mxu0 %v2180
    %3244 = vmatpush1.msra.mxu0 %v2179
    %3245 = vmatprep.subr.mxu0 %v2184
    %3246 = vmatpush1.msra.mxu0 %v2183
    %3247 = vmatprep.subr.mxu0 %v2188
    %3248 = vmatpush1.msra.mxu0 %v2187
    %3249 = vmatprep.subr.mxu0 %v2192
    %3250 = vmatpush1.msra.mxu0 %v2191
    %3251 = vmatprep.subr.mxu0 %v2196
    %3252 = vmatpush1.msra.mxu0 %v2195
    %3253 = vmatprep.subr.mxu0 %v2200
    %3254 = vmatpush1.msra.mxu0 %v2199
    %3255 = vmatprep.subr.mxu0 %v2204
    %3256 = vmatpush1.msra.mxu0 %v2203
    %3257 = vmatprep.subr.mxu0 %v2208
    %3258 = vmatpush1.msra.mxu0 %v2207
    %3259 = vmatprep.subr.mxu0 %v2212
    %3260 = vmatpush1.msra.mxu0 %v2211
    %3261 = vmatprep.subr.mxu0 %v2216
    %3262 = vmatpush1.msra.mxu0 %v2215
    %3263 = vmatprep.subr.mxu0 %v2220
    %3264 = vmatpush1.msra.mxu0 %v2219
    %3265 = vmatprep.subr.mxu0 %v2224
    %3266 = vmatpush1.msra.mxu0 %v2223
    %3267 = vmatprep.subr.mxu0 %v2228
    %3268 = vmatpush1.msra.mxu0 %v2227
    %3269 = vmatprep.subr.mxu0 %v2232
    %3270 = vmatpush1.msra.mxu0 %v2231
    %3271 = vmatprep.subr.mxu0 %v2236
    %3272 = vmatpush1.msra.mxu0 %v2235
    %3273 = vmatprep.subr.mxu0 %v2240
    %3274 = vmatpush1.msra.mxu0 %v2239
    %3275 = vmatprep.subr.mxu0 0.0
    %3276 = vmatpush1.msra.mxu0 0.0
    %3277 = vmatprep.subr.mxu0 0.0
    %3278 = vmatpush1.msra.mxu0 0.0
    %3279 = vmatprep.subr.mxu0 0.0
    %3280 = vmatpush1.msra.mxu0 0.0
    %3281 = vmatprep.subr.mxu0 0.0
    %3282 = vmatpush1.msra.mxu0 0.0
    %3283 = vmatprep.subr.mxu0 0.0
    %3284 = vmatpush1.msra.mxu0 0.0
    %3285 = vmatprep.subr.mxu0 0.0
    %3286 = vmatpush1.msra.mxu0 0.0
    %3287 = vmatprep.subr.mxu0 0.0
    %3288 = vmatpush1.msra.mxu0 0.0
    %3289 = vmatprep.subr.mxu0 0.0
    %3290 = vmatpush1.msra.mxu0 0.0
    %3291 = vmatprep.subr.mxu0 0.0
    %3292 = vmatpush1.msra.mxu0 0.0
    %3293 = vmatprep.subr.mxu0 0.0
    %3294 = vmatpush1.msra.mxu0 0.0
    %3295 = vmatprep.subr.mxu0 0.0
    %3296 = vmatpush1.msra.mxu0 0.0
    %3297 = vmatprep.subr.mxu0 0.0
    %3298 = vmatpush1.msra.mxu0 0.0
    %3299 = vmatprep.subr.mxu0 0.0
    %3300 = vmatpush1.msra.mxu0 0.0
    %3301 = vmatprep.subr.mxu0 0.0
    %3302 = vmatpush1.msra.mxu0 0.0
    %3303 = vmatprep.subr.mxu0 0.0
    %3304 = vmatpush1.msra.mxu0 0.0
    %3305 = vmatprep.subr.mxu0 0.0
    %3306 = vmatpush1.msra.mxu0 0.0
    %3307 = vmatprep.mubr.f32.mxu0 0.0
    %3308 = vmatmul.mubr.f32.gmra.mrb[0].mxu0 %v3171
    %v3309 = vpop.f32.mrb[0].mxu0
    %v3310 = vadd.f32 0.0, %v3309
    %v3311 = vpop.f32.mrb[0].mxu0
    %v3312 = vadd.f32 0.0, %v3311
    %3313 = vdwg.mxu0
    %v3318 = vcombine.low %v3239, %v3241
    %v3319 = vcombine.low %v3310, %v3312
    %v3321 = vunpack.c.l.s4 1983009808
    %v3322 = vunpack.c.0.s8 %v3321
    %v3323 = vlaneseq
    %v3324 = vshrl.u32 %v3323, 7
    %v3325 = vsub.s32 %v3322, %v3324
    %v3326 = vrot.slane %v3318, %v3325
    %v3328 = vunpack.c.l.s4 1983009808
    %v3329 = vunpack.c.0.s8 %v3328
    %v3330 = vlaneseq
    %v3331 = vshrl.u32 %v3330, 7
    %v3332 = vsub.s32 %v3329, %v3331
    %v3333 = vrot.slane %v3319, %v3332
    %v3334 = vcombine.low %v3326, %v3333
    %v3336 = vadd.f32 %v3170, %v3334
    %v3337 = vxor.u32 %v3336, 2147483648
    %v3338 = vmul.f32 %v3337, 1.442695
    %v3339 = vpow.pop %v3338
    %v3340 = vadd.f32 %v3339, 1.0
    %v3341 = vrcp.pop %v3340
    %v3342 = vmul.f32 1.0, %v3341
    %v3344 = vrot.slane %v3336, 2
    %v3346 = vxor.u32 %v3344, 2147483648
    %v3347 = vmul.f32 %v3346, 1.442695
    %v3348 = vpow.pop %v3347
    %v3349 = vadd.f32 %v3348, 1.0
    %v3350 = vrcp.pop %v3349
    %v3351 = vmul.f32 1.0, %v3350
    %v3352 = vrot.slane %v3336, 4
    %v3354 = vtanh.pop %v3352
    %v3355 = vrot.slane %v3336, 6
    %v3357 = vxor.u32 %v3355, 2147483648
    %v3358 = vmul.f32 %v3357, 1.442695
    %v3359 = vpow.pop %v3358
    %v3360 = vadd.f32 %v3359, 1.0
    %v3361 = vrcp.pop %v3360
    %v3362 = vmul.f32 1.0, %v3361
    %v3363 = vld [vmem:[#allocation6] sm:$0x3]
    %v3364 = vmul.f32 %v3351, %v3363
    %v3365 = vmul.f32 %v3342, %v3354
    %v3366 = vadd.f32 %v3364, %v3365
    %v3367 = vtanh.pop %v3366
    %v3368 = vmul.f32 %v3362, %v3367
    %3369 = vst [vmem:[#allocation6] sm:$0x3] %v3366
    %3370 = vst [vmem:[#allocation5] sm:$0x3] %v3368
    %v3371 = vld [vmem:[%s1297] sm:$0xff]
    %v3372 = vld [vmem:[#allocation5] sm:$0x3]
    %3373 = vmatprep.subr.mxu0 %v2178
    %3374 = vmatpush1.msra.mxu0 %v2177
    %3375 = vmatprep.subr.mxu0 %v2182
    %3376 = vmatpush1.msra.mxu0 %v2181
    %3377 = vmatprep.subr.mxu0 %v2186
    %3378 = vmatpush1.msra.mxu0 %v2185
    %3379 = vmatprep.subr.mxu0 %v2190
    %3380 = vmatpush1.msra.mxu0 %v2189
    %3381 = vmatprep.subr.mxu0 %v2194
    %3382 = vmatpush1.msra.mxu0 %v2193
    %3383 = vmatprep.subr.mxu0 %v2198
    %3384 = vmatpush1.msra.mxu0 %v2197
    %3385 = vmatprep.subr.mxu0 %v2202
    %3386 = vmatpush1.msra.mxu0 %v2201
    %3387 = vmatprep.subr.mxu0 %v2206
    %3388 = vmatpush1.msra.mxu0 %v2205
    %3389 = vmatprep.subr.mxu0 %v2210
    %3390 = vmatpush1.msra.mxu0 %v2209
    %3391 = vmatprep.subr.mxu0 %v2214
    %3392 = vmatpush1.msra.mxu0 %v2213
    %3393 = vmatprep.subr.mxu0 %v2218
    %3394 = vmatpush1.msra.mxu0 %v2217
    %3395 = vmatprep.subr.mxu0 %v2222
    %3396 = vmatpush1.msra.mxu0 %v2221
    %3397 = vmatprep.subr.mxu0 %v2226
    %3398 = vmatpush1.msra.mxu0 %v2225
    %3399 = vmatprep.subr.mxu0 %v2230
    %3400 = vmatpush1.msra.mxu0 %v2229
    %3401 = vmatprep.subr.mxu0 %v2234
    %3402 = vmatpush1.msra.mxu0 %v2233
    %3403 = vmatprep.subr.mxu0 %v2238
    %3404 = vmatpush1.msra.mxu0 %v2237
    %3405 = vmatprep.subr.mxu0 0.0
    %3406 = vmatpush1.msra.mxu0 0.0
    %3407 = vmatprep.subr.mxu0 0.0
    %3408 = vmatpush1.msra.mxu0 0.0
    %3409 = vmatprep.subr.mxu0 0.0
    %3410 = vmatpush1.msra.mxu0 0.0
    %3411 = vmatprep.subr.mxu0 0.0
    %3412 = vmatpush1.msra.mxu0 0.0
    %3413 = vmatprep.subr.mxu0 0.0
    %3414 = vmatpush1.msra.mxu0 0.0
    %3415 = vmatprep.subr.mxu0 0.0
    %3416 = vmatpush1.msra.mxu0 0.0
    %3417 = vmatprep.subr.mxu0 0.0
    %3418 = vmatpush1.msra.mxu0 0.0
    %3419 = vmatprep.subr.mxu0 0.0
    %3420 = vmatpush1.msra.mxu0 0.0
    %3421 = vmatprep.subr.mxu0 0.0
    %3422 = vmatpush1.msra.mxu0 0.0
    %3423 = vmatprep.subr.mxu0 0.0
    %3424 = vmatpush1.msra.mxu0 0.0
    %3425 = vmatprep.subr.mxu0 0.0
    %3426 = vmatpush1.msra.mxu0 0.0
    %3427 = vmatprep.subr.mxu0 0.0
    %3428 = vmatpush1.msra.mxu0 0.0
    %3429 = vmatprep.subr.mxu0 0.0
    %3430 = vmatpush1.msra.mxu0 0.0
    %3431 = vmatprep.subr.mxu0 0.0
    %3432 = vmatpush1.msra.mxu0 0.0
    %3433 = vmatprep.subr.mxu0 0.0
    %3434 = vmatpush1.msra.mxu0 0.0
    %3435 = vmatprep.subr.mxu0 0.0
    %3436 = vmatpush1.msra.mxu0 0.0
    %3437 = vmatprep.mubr.f32.mxu0 0.0
    %3438 = vmatmul.mubr.f32.gmra.mrb[0].mxu0 %v3372
    %v3439 = vpop.f32.mrb[0].mxu0
    %v3440 = vadd.f32 0.0, %v3439
    %v3441 = vpop.f32.mrb[0].mxu0
    %v3442 = vadd.f32 0.0, %v3441
    %3443 = vdwg.mxu0
    %3444 = vmatprep.subr.mxu0 %v2180
    %3445 = vmatpush1.msra.mxu0 %v2179
    %3446 = vmatprep.subr.mxu0 %v2184
    %3447 = vmatpush1.msra.mxu0 %v2183
    %3448 = vmatprep.subr.mxu0 %v2188
    %3449 = vmatpush1.msra.mxu0 %v2187
    %3450 = vmatprep.subr.mxu0 %v2192
    %3451 = vmatpush1.msra.mxu0 %v2191
    %3452 = vmatprep.subr.mxu0 %v2196
    %3453 = vmatpush1.msra.mxu0 %v2195
    %3454 = vmatprep.subr.mxu0 %v2200
    %3455 = vmatpush1.msra.mxu0 %v2199
    %3456 = vmatprep.subr.mxu0 %v2204
    %3457 = vmatpush1.msra.mxu0 %v2203
    %3458 = vmatprep.subr.mxu0 %v2208
    %3459 = vmatpush1.msra.mxu0 %v2207
    %3460 = vmatprep.subr.mxu0 %v2212
    %3461 = vmatpush1.msra.mxu0 %v2211
    %3462 = vmatprep.subr.mxu0 %v2216
    %3463 = vmatpush1.msra.mxu0 %v2215
    %3464 = vmatprep.subr.mxu0 %v2220
    %3465 = vmatpush1.msra.mxu0 %v2219
    %3466 = vmatprep.subr.mxu0 %v2224
    %3467 = vmatpush1.msra.mxu0 %v2223
    %3468 = vmatprep.subr.mxu0 %v2228
    %3469 = vmatpush1.msra.mxu0 %v2227
    %3470 = vmatprep.subr.mxu0 %v2232
    %3471 = vmatpush1.msra.mxu0 %v2231
    %3472 = vmatprep.subr.mxu0 %v2236
    %3473 = vmatpush1.msra.mxu0 %v2235
    %3474 = vmatprep.subr.mxu0 %v2240
    %3475 = vmatpush1.msra.mxu0 %v2239
    %3476 = vmatprep.subr.mxu0 0.0
    %3477 = vmatpush1.msra.mxu0 0.0
    %3478 = vmatprep.subr.mxu0 0.0
    %3479 = vmatpush1.msra.mxu0 0.0
    %3480 = vmatprep.subr.mxu0 0.0
    %3481 = vmatpush1.msra.mxu0 0.0
    %3482 = vmatprep.subr.mxu0 0.0
    %3483 = vmatpush1.msra.mxu0 0.0
    %3484 = vmatprep.subr.mxu0 0.0
    %3485 = vmatpush1.msra.mxu0 0.0
    %3486 = vmatprep.subr.mxu0 0.0
    %3487 = vmatpush1.msra.mxu0 0.0
    %3488 = vmatprep.subr.mxu0 0.0
    %3489 = vmatpush1.msra.mxu0 0.0
    %3490 = vmatprep.subr.mxu0 0.0
    %3491 = vmatpush1.msra.mxu0 0.0
    %3492 = vmatprep.subr.mxu0 0.0
    %3493 = vmatpush1.msra.mxu0 0.0
    %3494 = vmatprep.subr.mxu0 0.0
    %3495 = vmatpush1.msra.mxu0 0.0
    %3496 = vmatprep.subr.mxu0 0.0
    %3497 = vmatpush1.msra.mxu0 0.0
    %3498 = vmatprep.subr.mxu0 0.0
    %3499 = vmatpush1.msra.mxu0 0.0
    %3500 = vmatprep.subr.mxu0 0.0
    %3501 = vmatpush1.msra.mxu0 0.0
    %3502 = vmatprep.subr.mxu0 0.0
    %3503 = vmatpush1.msra.mxu0 0.0
    %3504 = vmatprep.subr.mxu0 0.0
    %3505 = vmatpush1.msra.mxu0 0.0
    %3506 = vmatprep.subr.mxu0 0.0
    %3507 = vmatpush1.msra.mxu0 0.0
    %3508 = vmatprep.mubr.f32.mxu0 0.0
    %3509 = vmatmul.mubr.f32.gmra.mrb[0].mxu0 %v3372
    %v3510 = vpop.f32.mrb[0].mxu0
    %v3511 = vadd.f32 0.0, %v3510
    %v3512 = vpop.f32.mrb[0].mxu0
    %v3513 = vadd.f32 0.0, %v3512
    %3514 = vdwg.mxu0
    %v3519 = vcombine.low %v3440, %v3442
    %v3520 = vcombine.low %v3511, %v3513
    %v3522 = vunpack.c.l.s4 1983009808
    %v3523 = vunpack.c.0.s8 %v3522
    %v3524 = vlaneseq
    %v3525 = vshrl.u32 %v3524, 7
    %v3526 = vsub.s32 %v3523, %v3525
    %v3527 = vrot.slane %v3519, %v3526
    %v3529 = vunpack.c.l.s4 1983009808
    %v3530 = vunpack.c.0.s8 %v3529
    %v3531 = vlaneseq
    %v3532 = vshrl.u32 %v3531, 7
    %v3533 = vsub.s32 %v3530, %v3532
    %v3534 = vrot.slane %v3520, %v3533
    %v3535 = vcombine.low %v3527, %v3534
    %v3537 = vadd.f32 %v3371, %v3535
    %v3538 = vxor.u32 %v3537, 2147483648
    %v3539 = vmul.f32 %v3538, 1.442695
    %v3540 = vpow.pop %v3539
    %v3541 = vadd.f32 %v3540, 1.0
    %v3542 = vrcp.pop %v3541
    %v3543 = vmul.f32 1.0, %v3542
    %v3545 = vrot.slane %v3537, 2
    %v3547 = vxor.u32 %v3545, 2147483648
    %v3548 = vmul.f32 %v3547, 1.442695
    %v3549 = vpow.pop %v3548
    %v3550 = vadd.f32 %v3549, 1.0
    %v3551 = vrcp.pop %v3550
    %v3552 = vmul.f32 1.0, %v3551
    %v3553 = vrot.slane %v3537, 4
    %v3555 = vtanh.pop %v3553
    %v3556 = vrot.slane %v3537, 6
    %v3558 = vxor.u32 %v3556, 2147483648
    %v3559 = vmul.f32 %v3558, 1.442695
    %v3560 = vpow.pop %v3559
    %v3561 = vadd.f32 %v3560, 1.0
    %v3562 = vrcp.pop %v3561
    %v3563 = vmul.f32 1.0, %v3562
    %v3564 = vld [vmem:[#allocation6] sm:$0x3]
    %v3565 = vmul.f32 %v3552, %v3564
    %v3566 = vmul.f32 %v3543, %v3555
    %v3567 = vadd.f32 %v3565, %v3566
    %v3568 = vtanh.pop %v3567
    %v3569 = vmul.f32 %v3563, %v3568
    %3570 = vst [vmem:[#allocation6] sm:$0x3] %v3567
    %3571 = vst [vmem:[#allocation5] sm:$0x3] %v3569
    %v3572 = vld [vmem:[%s1501] sm:$0xff]
    %v3573 = vld [vmem:[#allocation5] sm:$0x3]
    %3574 = vmatprep.subr.mxu0 %v2178
    %3575 = vmatpush1.msra.mxu0 %v2177
    %3576 = vmatprep.subr.mxu0 %v2182
    %3577 = vmatpush1.msra.mxu0 %v2181
    %3578 = vmatprep.subr.mxu0 %v2186
    %3579 = vmatpush1.msra.mxu0 %v2185
    %3580 = vmatprep.subr.mxu0 %v2190
    %3581 = vmatpush1.msra.mxu0 %v2189
    %3582 = vmatprep.subr.mxu0 %v2194
    %3583 = vmatpush1.msra.mxu0 %v2193
    %3584 = vmatprep.subr.mxu0 %v2198
    %3585 = vmatpush1.msra.mxu0 %v2197
    %3586 = vmatprep.subr.mxu0 %v2202
    %3587 = vmatpush1.msra.mxu0 %v2201
    %3588 = vmatprep.subr.mxu0 %v2206
    %3589 = vmatpush1.msra.mxu0 %v2205
    %3590 = vmatprep.subr.mxu0 %v2210
    %3591 = vmatpush1.msra.mxu0 %v2209
    %3592 = vmatprep.subr.mxu0 %v2214
    %3593 = vmatpush1.msra.mxu0 %v2213
    %3594 = vmatprep.subr.mxu0 %v2218
    %3595 = vmatpush1.msra.mxu0 %v2217
    %3596 = vmatprep.subr.mxu0 %v2222
    %3597 = vmatpush1.msra.mxu0 %v2221
    %3598 = vmatprep.subr.mxu0 %v2226
    %3599 = vmatpush1.msra.mxu0 %v2225
    %3600 = vmatprep.subr.mxu0 %v2230
    %3601 = vmatpush1.msra.mxu0 %v2229
    %3602 = vmatprep.subr.mxu0 %v2234
    %3603 = vmatpush1.msra.mxu0 %v2233
    %3604 = vmatprep.subr.mxu0 %v2238
    %3605 = vmatpush1.msra.mxu0 %v2237
    %3606 = vmatprep.subr.mxu0 0.0
    %3607 = vmatpush1.msra.mxu0 0.0
    %3608 = vmatprep.subr.mxu0 0.0
    %3609 = vmatpush1.msra.mxu0 0.0
    %3610 = vmatprep.subr.mxu0 0.0
    %3611 = vmatpush1.msra.mxu0 0.0
    %3612 = vmatprep.subr.mxu0 0.0
    %3613 = vmatpush1.msra.mxu0 0.0
    %3614 = vmatprep.subr.mxu0 0.0
    %3615 = vmatpush1.msra.mxu0 0.0
    %3616 = vmatprep.subr.mxu0 0.0
    %3617 = vmatpush1.msra.mxu0 0.0
    %3618 = vmatprep.subr.mxu0 0.0
    %3619 = vmatpush1.msra.mxu0 0.0
    %3620 = vmatprep.subr.mxu0 0.0
    %3621 = vmatpush1.msra.mxu0 0.0
    %3622 = vmatprep.subr.mxu0 0.0
    %3623 = vmatpush1.msra.mxu0 0.0
    %3624 = vmatprep.subr.mxu0 0.0
    %3625 = vmatpush1.msra.mxu0 0.0
    %3626 = vmatprep.subr.mxu0 0.0
    %3627 = vmatpush1.msra.mxu0 0.0
    %3628 = vmatprep.subr.mxu0 0.0
    %3629 = vmatpush1.msra.mxu0 0.0
    %3630 = vmatprep.subr.mxu0 0.0
    %3631 = vmatpush1.msra.mxu0 0.0
    %3632 = vmatprep.subr.mxu0 0.0
    %3633 = vmatpush1.msra.mxu0 0.0
    %3634 = vmatprep.subr.mxu0 0.0
    %3635 = vmatpush1.msra.mxu0 0.0
    %3636 = vmatprep.subr.mxu0 0.0
    %3637 = vmatpush1.msra.mxu0 0.0
    %3638 = vmatprep.mubr.f32.mxu0 0.0
    %3639 = vmatmul.mubr.f32.gmra.mrb[0].mxu0 %v3573
    %v3640 = vpop.f32.mrb[0].mxu0
    %v3641 = vadd.f32 0.0, %v3640
    %v3642 = vpop.f32.mrb[0].mxu0
    %v3643 = vadd.f32 0.0, %v3642
    %3644 = vdwg.mxu0
    %3645 = vmatprep.subr.mxu0 %v2180
    %3646 = vmatpush1.msra.mxu0 %v2179
    %3647 = vmatprep.subr.mxu0 %v2184
    %3648 = vmatpush1.msra.mxu0 %v2183
    %3649 = vmatprep.subr.mxu0 %v2188
    %3650 = vmatpush1.msra.mxu0 %v2187
    %3651 = vmatprep.subr.mxu0 %v2192
    %3652 = vmatpush1.msra.mxu0 %v2191
    %3653 = vmatprep.subr.mxu0 %v2196
    %3654 = vmatpush1.msra.mxu0 %v2195
    %3655 = vmatprep.subr.mxu0 %v2200
    %3656 = vmatpush1.msra.mxu0 %v2199
    %3657 = vmatprep.subr.mxu0 %v2204
    %3658 = vmatpush1.msra.mxu0 %v2203
    %3659 = vmatprep.subr.mxu0 %v2208
    %3660 = vmatpush1.msra.mxu0 %v2207
    %3661 = vmatprep.subr.mxu0 %v2212
    %3662 = vmatpush1.msra.mxu0 %v2211
    %3663 = vmatprep.subr.mxu0 %v2216
    %3664 = vmatpush1.msra.mxu0 %v2215
    %3665 = vmatprep.subr.mxu0 %v2220
    %3666 = vmatpush1.msra.mxu0 %v2219
    %3667 = vmatprep.subr.mxu0 %v2224
    %3668 = vmatpush1.msra.mxu0 %v2223
    %3669 = vmatprep.subr.mxu0 %v2228
    %3670 = vmatpush1.msra.mxu0 %v2227
    %3671 = vmatprep.subr.mxu0 %v2232
    %3672 = vmatpush1.msra.mxu0 %v2231
    %3673 = vmatprep.subr.mxu0 %v2236
    %3674 = vmatpush1.msra.mxu0 %v2235
    %3675 = vmatprep.subr.mxu0 %v2240
    %3676 = vmatpush1.msra.mxu0 %v2239
    %3677 = vmatprep.subr.mxu0 0.0
    %3678 = vmatpush1.msra.mxu0 0.0
    %3679 = vmatprep.subr.mxu0 0.0
    %3680 = vmatpush1.msra.mxu0 0.0
    %3681 = vmatprep.subr.mxu0 0.0
    %3682 = vmatpush1.msra.mxu0 0.0
    %3683 = vmatprep.subr.mxu0 0.0
    %3684 = vmatpush1.msra.mxu0 0.0
    %3685 = vmatprep.subr.mxu0 0.0
    %3686 = vmatpush1.msra.mxu0 0.0
    %3687 = vmatprep.subr.mxu0 0.0
    %3688 = vmatpush1.msra.mxu0 0.0
    %3689 = vmatprep.subr.mxu0 0.0
    %3690 = vmatpush1.msra.mxu0 0.0
    %3691 = vmatprep.subr.mxu0 0.0
    %3692 = vmatpush1.msra.mxu0 0.0
    %3693 = vmatprep.subr.mxu0 0.0
    %3694 = vmatpush1.msra.mxu0 0.0
    %3695 = vmatprep.subr.mxu0 0.0
    %3696 = vmatpush1.msra.mxu0 0.0
    %3697 = vmatprep.subr.mxu0 0.0
    %3698 = vmatpush1.msra.mxu0 0.0
    %3699 = vmatprep.subr.mxu0 0.0
    %3700 = vmatpush1.msra.mxu0 0.0
    %3701 = vmatprep.subr.mxu0 0.0
    %3702 = vmatpush1.msra.mxu0 0.0
    %3703 = vmatprep.subr.mxu0 0.0
    %3704 = vmatpush1.msra.mxu0 0.0
    %3705 = vmatprep.subr.mxu0 0.0
    %3706 = vmatpush1.msra.mxu0 0.0
    %3707 = vmatprep.subr.mxu0 0.0
    %3708 = vmatpush1.msra.mxu0 0.0
    %3709 = vmatprep.mubr.f32.mxu0 0.0
    %3710 = vmatmul.mubr.f32.gmra.mrb[0].mxu0 %v3573
    %v3711 = vpop.f32.mrb[0].mxu0
    %v3712 = vadd.f32 0.0, %v3711
    %v3713 = vpop.f32.mrb[0].mxu0
    %v3714 = vadd.f32 0.0, %v3713
    %3715 = vdwg.mxu0
    %v3720 = vcombine.low %v3641, %v3643
    %v3721 = vcombine.low %v3712, %v3714
    %v3723 = vunpack.c.l.s4 1983009808
    %v3724 = vunpack.c.0.s8 %v3723
    %v3725 = vlaneseq
    %v3726 = vshrl.u32 %v3725, 7
    %v3727 = vsub.s32 %v3724, %v3726
    %v3728 = vrot.slane %v3720, %v3727
    %v3730 = vunpack.c.l.s4 1983009808
    %v3731 = vunpack.c.0.s8 %v3730
    %v3732 = vlaneseq
    %v3733 = vshrl.u32 %v3732, 7
    %v3734 = vsub.s32 %v3731, %v3733
    %v3735 = vrot.slane %v3721, %v3734
    %v3736 = vcombine.low %v3728, %v3735
    %v3738 = vadd.f32 %v3572, %v3736
    %v3739 = vxor.u32 %v3738, 2147483648
    %v3740 = vmul.f32 %v3739, 1.442695
    %v3741 = vpow.pop %v3740
    %v3742 = vadd.f32 %v3741, 1.0
    %v3743 = vrcp.pop %v3742
    %v3744 = vmul.f32 1.0, %v3743
    %v3746 = vrot.slane %v3738, 2
    %v3748 = vxor.u32 %v3746, 2147483648
    %v3749 = vmul.f32 %v3748, 1.442695
    %v3750 = vpow.pop %v3749
    %v3751 = vadd.f32 %v3750, 1.0
    %v3752 = vrcp.pop %v3751
    %v3753 = vmul.f32 1.0, %v3752
    %v3754 = vrot.slane %v3738, 4
    %v3756 = vtanh.pop %v3754
    %v3757 = vrot.slane %v3738, 6
    %v3759 = vxor.u32 %v3757, 2147483648
    %v3760 = vmul.f32 %v3759, 1.442695
    %v3761 = vpow.pop %v3760
    %v3762 = vadd.f32 %v3761, 1.0
    %v3763 = vrcp.pop %v3762
    %v3764 = vmul.f32 1.0, %v3763
    %v3765 = vld [vmem:[#allocation6] sm:$0x3]
    %v3766 = vmul.f32 %v3753, %v3765
    %v3767 = vmul.f32 %v3744, %v3756
    %v3768 = vadd.f32 %v3766, %v3767
    %v3769 = vtanh.pop %v3768
    %v3770 = vmul.f32 %v3764, %v3769
    %3771 = vst [vmem:[#allocation6] sm:$0x3] %v3768
    %3772 = vst [vmem:[#allocation5] sm:$0x3] %v3770
    %v3773 = vld [vmem:[%s1705] sm:$0xff]
    %v3774 = vld [vmem:[#allocation5] sm:$0x3]
    %3775 = vmatprep.subr.mxu0 %v2178
    %3776 = vmatpush1.msra.mxu0 %v2177
    %3777 = vmatprep.subr.mxu0 %v2182
    %3778 = vmatpush1.msra.mxu0 %v2181
    %3779 = vmatprep.subr.mxu0 %v2186
    %3780 = vmatpush1.msra.mxu0 %v2185
    %3781 = vmatprep.subr.mxu0 %v2190
    %3782 = vmatpush1.msra.mxu0 %v2189
    %3783 = vmatprep.subr.mxu0 %v2194
    %3784 = vmatpush1.msra.mxu0 %v2193
    %3785 = vmatprep.subr.mxu0 %v2198
    %3786 = vmatpush1.msra.mxu0 %v2197
    %3787 = vmatprep.subr.mxu0 %v2202
    %3788 = vmatpush1.msra.mxu0 %v2201
    %3789 = vmatprep.subr.mxu0 %v2206
    %3790 = vmatpush1.msra.mxu0 %v2205
    %3791 = vmatprep.subr.mxu0 %v2210
    %3792 = vmatpush1.msra.mxu0 %v2209
    %3793 = vmatprep.subr.mxu0 %v2214
    %3794 = vmatpush1.msra.mxu0 %v2213
    %3795 = vmatprep.subr.mxu0 %v2218
    %3796 = vmatpush1.msra.mxu0 %v2217
    %3797 = vmatprep.subr.mxu0 %v2222
    %3798 = vmatpush1.msra.mxu0 %v2221
    %3799 = vmatprep.subr.mxu0 %v2226
    %3800 = vmatpush1.msra.mxu0 %v2225
    %3801 = vmatprep.subr.mxu0 %v2230
    %3802 = vmatpush1.msra.mxu0 %v2229
    %3803 = vmatprep.subr.mxu0 %v2234
    %3804 = vmatpush1.msra.mxu0 %v2233
    %3805 = vmatprep.subr.mxu0 %v2238
    %3806 = vmatpush1.msra.mxu0 %v2237
    %3807 = vmatprep.subr.mxu0 0.0
    %3808 = vmatpush1.msra.mxu0 0.0
    %3809 = vmatprep.subr.mxu0 0.0
    %3810 = vmatpush1.msra.mxu0 0.0
    %3811 = vmatprep.subr.mxu0 0.0
    %3812 = vmatpush1.msra.mxu0 0.0
    %3813 = vmatprep.subr.mxu0 0.0
    %3814 = vmatpush1.msra.mxu0 0.0
    %3815 = vmatprep.subr.mxu0 0.0
    %3816 = vmatpush1.msra.mxu0 0.0
    %3817 = vmatprep.subr.mxu0 0.0
    %3818 = vmatpush1.msra.mxu0 0.0
    %3819 = vmatprep.subr.mxu0 0.0
    %3820 = vmatpush1.msra.mxu0 0.0
    %3821 = vmatprep.subr.mxu0 0.0
    %3822 = vmatpush1.msra.mxu0 0.0
    %3823 = vmatprep.subr.mxu0 0.0
    %3824 = vmatpush1.msra.mxu0 0.0
    %3825 = vmatprep.subr.mxu0 0.0
    %3826 = vmatpush1.msra.mxu0 0.0
    %3827 = vmatprep.subr.mxu0 0.0
    %3828 = vmatpush1.msra.mxu0 0.0
    %3829 = vmatprep.subr.mxu0 0.0
    %3830 = vmatpush1.msra.mxu0 0.0
    %3831 = vmatprep.subr.mxu0 0.0
    %3832 = vmatpush1.msra.mxu0 0.0
    %3833 = vmatprep.subr.mxu0 0.0
    %3834 = vmatpush1.msra.mxu0 0.0
    %3835 = vmatprep.subr.mxu0 0.0
    %3836 = vmatpush1.msra.mxu0 0.0
    %3837 = vmatprep.subr.mxu0 0.0
    %3838 = vmatpush1.msra.mxu0 0.0
    %3839 = vmatprep.mubr.f32.mxu0 0.0
    %3840 = vmatmul.mubr.f32.gmra.mrb[0].mxu0 %v3774
    %v3841 = vpop.f32.mrb[0].mxu0
    %v3842 = vadd.f32 0.0, %v3841
    %v3843 = vpop.f32.mrb[0].mxu0
    %v3844 = vadd.f32 0.0, %v3843
    %3845 = vdwg.mxu0
    %3846 = vmatprep.subr.mxu0 %v2180
    %3847 = vmatpush1.msra.mxu0 %v2179
    %3848 = vmatprep.subr.mxu0 %v2184
    %3849 = vmatpush1.msra.mxu0 %v2183
    %3850 = vmatprep.subr.mxu0 %v2188
    %3851 = vmatpush1.msra.mxu0 %v2187
    %3852 = vmatprep.subr.mxu0 %v2192
    %3853 = vmatpush1.msra.mxu0 %v2191
    %3854 = vmatprep.subr.mxu0 %v2196
    %3855 = vmatpush1.msra.mxu0 %v2195
    %3856 = vmatprep.subr.mxu0 %v2200
    %3857 = vmatpush1.msra.mxu0 %v2199
    %3858 = vmatprep.subr.mxu0 %v2204
    %3859 = vmatpush1.msra.mxu0 %v2203
    %3860 = vmatprep.subr.mxu0 %v2208
    %3861 = vmatpush1.msra.mxu0 %v2207
    %3862 = vmatprep.subr.mxu0 %v2212
    %3863 = vmatpush1.msra.mxu0 %v2211
    %3864 = vmatprep.subr.mxu0 %v2216
    %3865 = vmatpush1.msra.mxu0 %v2215
    %3866 = vmatprep.subr.mxu0 %v2220
    %3867 = vmatpush1.msra.mxu0 %v2219
    %3868 = vmatprep.subr.mxu0 %v2224
    %3869 = vmatpush1.msra.mxu0 %v2223
    %3870 = vmatprep.subr.mxu0 %v2228
    %3871 = vmatpush1.msra.mxu0 %v2227
    %3872 = vmatprep.subr.mxu0 %v2232
    %3873 = vmatpush1.msra.mxu0 %v2231
    %3874 = vmatprep.subr.mxu0 %v2236
    %3875 = vmatpush1.msra.mxu0 %v2235
    %3876 = vmatprep.subr.mxu0 %v2240
    %3877 = vmatpush1.msra.mxu0 %v2239
    %3878 = vmatprep.subr.mxu0 0.0
    %3879 = vmatpush1.msra.mxu0 0.0
    %3880 = vmatprep.subr.mxu0 0.0
    %3881 = vmatpush1.msra.mxu0 0.0
    %3882 = vmatprep.subr.mxu0 0.0
    %3883 = vmatpush1.msra.mxu0 0.0
    %3884 = vmatprep.subr.mxu0 0.0
    %3885 = vmatpush1.msra.mxu0 0.0
    %3886 = vmatprep.subr.mxu0 0.0
    %3887 = vmatpush1.msra.mxu0 0.0
    %3888 = vmatprep.subr.mxu0 0.0
    %3889 = vmatpush1.msra.mxu0 0.0
    %3890 = vmatprep.subr.mxu0 0.0
    %3891 = vmatpush1.msra.mxu0 0.0
    %3892 = vmatprep.subr.mxu0 0.0
    %3893 = vmatpush1.msra.mxu0 0.0
    %3894 = vmatprep.subr.mxu0 0.0
    %3895 = vmatpush1.msra.mxu0 0.0
    %3896 = vmatprep.subr.mxu0 0.0
    %3897 = vmatpush1.msra.mxu0 0.0
    %3898 = vmatprep.subr.mxu0 0.0
    %3899 = vmatpush1.msra.mxu0 0.0
    %3900 = vmatprep.subr.mxu0 0.0
    %3901 = vmatpush1.msra.mxu0 0.0
    %3902 = vmatprep.subr.mxu0 0.0
    %3903 = vmatpush1.msra.mxu0 0.0
    %3904 = vmatprep.subr.mxu0 0.0
    %3905 = vmatpush1.msra.mxu0 0.0
    %3906 = vmatprep.subr.mxu0 0.0
    %3907 = vmatpush1.msra.mxu0 0.0
    %3908 = vmatprep.subr.mxu0 0.0
    %3909 = vmatpush1.msra.mxu0 0.0
    %3910 = vmatprep.mubr.f32.mxu0 0.0
    %3911 = vmatmul.mubr.f32.gmra.mrb[0].mxu0 %v3774
    %v3912 = vpop.f32.mrb[0].mxu0
    %v3913 = vadd.f32 0.0, %v3912
    %v3914 = vpop.f32.mrb[0].mxu0
    %v3915 = vadd.f32 0.0, %v3914
    %3916 = vdwg.mxu0
    %v3921 = vcombine.low %v3842, %v3844
    %v3922 = vcombine.low %v3913, %v3915
    %v3924 = vunpack.c.l.s4 1983009808
    %v3925 = vunpack.c.0.s8 %v3924
    %v3926 = vlaneseq
    %v3927 = vshrl.u32 %v3926, 7
    %v3928 = vsub.s32 %v3925, %v3927
    %v3929 = vrot.slane %v3921, %v3928
    %v3931 = vunpack.c.l.s4 1983009808
    %v3932 = vunpack.c.0.s8 %v3931
    %v3933 = vlaneseq
    %v3934 = vshrl.u32 %v3933, 7
    %v3935 = vsub.s32 %v3932, %v3934
    %v3936 = vrot.slane %v3922, %v3935
    %v3937 = vcombine.low %v3929, %v3936
    %v3939 = vadd.f32 %v3773, %v3937
    %v3940 = vxor.u32 %v3939, 2147483648
    %v3941 = vmul.f32 %v3940, 1.442695
    %v3942 = vpow.pop %v3941
    %v3943 = vadd.f32 %v3942, 1.0
    %v3944 = vrcp.pop %v3943
    %v3945 = vmul.f32 1.0, %v3944
    %v3947 = vrot.slane %v3939, 2
    %v3949 = vxor.u32 %v3947, 2147483648
    %v3950 = vmul.f32 %v3949, 1.442695
    %v3951 = vpow.pop %v3950
    %v3952 = vadd.f32 %v3951, 1.0
    %v3953 = vrcp.pop %v3952
    %v3954 = vmul.f32 1.0, %v3953
    %v3955 = vrot.slane %v3939, 4
    %v3957 = vtanh.pop %v3955
    %v3958 = vrot.slane %v3939, 6
    %v3960 = vxor.u32 %v3958, 2147483648
    %v3961 = vmul.f32 %v3960, 1.442695
    %v3962 = vpow.pop %v3961
    %v3963 = vadd.f32 %v3962, 1.0
    %v3964 = vrcp.pop %v3963
    %v3965 = vmul.f32 1.0, %v3964
    %v3966 = vld [vmem:[#allocation6] sm:$0x3]
    %v3967 = vmul.f32 %v3954, %v3966
    %v3968 = vmul.f32 %v3945, %v3957
    %v3969 = vadd.f32 %v3967, %v3968
    %v3970 = vtanh.pop %v3969
    %v3971 = vmul.f32 %v3965, %v3970
    %3972 = vst [vmem:[#allocation6] sm:$0x3] %v3969
    %3973 = vst [vmem:[#allocation5] sm:$0x3] %v3971
    %v3974 = vld [vmem:[%s1909] sm:$0xff]
    %v3975 = vld [vmem:[#allocation5] sm:$0x3]
    %3976 = vmatprep.subr.mxu0 %v2178
    %3977 = vmatpush1.msra.mxu0 %v2177
    %3978 = vmatprep.subr.mxu0 %v2182
    %3979 = vmatpush1.msra.mxu0 %v2181
    %3980 = vmatprep.subr.mxu0 %v2186
    %3981 = vmatpush1.msra.mxu0 %v2185
    %3982 = vmatprep.subr.mxu0 %v2190
    %3983 = vmatpush1.msra.mxu0 %v2189
    %3984 = vmatprep.subr.mxu0 %v2194
    %3985 = vmatpush1.msra.mxu0 %v2193
    %3986 = vmatprep.subr.mxu0 %v2198
    %3987 = vmatpush1.msra.mxu0 %v2197
    %3988 = vmatprep.subr.mxu0 %v2202
    %3989 = vmatpush1.msra.mxu0 %v2201
    %3990 = vmatprep.subr.mxu0 %v2206
    %3991 = vmatpush1.msra.mxu0 %v2205
    %3992 = vmatprep.subr.mxu0 %v2210
    %3993 = vmatpush1.msra.mxu0 %v2209
    %3994 = vmatprep.subr.mxu0 %v2214
    %3995 = vmatpush1.msra.mxu0 %v2213
    %3996 = vmatprep.subr.mxu0 %v2218
    %3997 = vmatpush1.msra.mxu0 %v2217
    %3998 = vmatprep.subr.mxu0 %v2222
    %3999 = vmatpush1.msra.mxu0 %v2221
    %4000 = vmatprep.subr.mxu0 %v2226
    %4001 = vmatpush1.msra.mxu0 %v2225
    %4002 = vmatprep.subr.mxu0 %v2230
    %4003 = vmatpush1.msra.mxu0 %v2229
    %4004 = vmatprep.subr.mxu0 %v2234
    %4005 = vmatpush1.msra.mxu0 %v2233
    %4006 = vmatprep.subr.mxu0 %v2238
    %4007 = vmatpush1.msra.mxu0 %v2237
    %4008 = vmatprep.subr.mxu0 0.0
    %4009 = vmatpush1.msra.mxu0 0.0
    %4010 = vmatprep.subr.mxu0 0.0
    %4011 = vmatpush1.msra.mxu0 0.0
    %4012 = vmatprep.subr.mxu0 0.0
    %4013 = vmatpush1.msra.mxu0 0.0
    %4014 = vmatprep.subr.mxu0 0.0
    %4015 = vmatpush1.msra.mxu0 0.0
    %4016 = vmatprep.subr.mxu0 0.0
    %4017 = vmatpush1.msra.mxu0 0.0
    %4018 = vmatprep.subr.mxu0 0.0
    %4019 = vmatpush1.msra.mxu0 0.0
    %4020 = vmatprep.subr.mxu0 0.0
    %4021 = vmatpush1.msra.mxu0 0.0
    %4022 = vmatprep.subr.mxu0 0.0
    %4023 = vmatpush1.msra.mxu0 0.0
    %4024 = vmatprep.subr.mxu0 0.0
    %4025 = vmatpush1.msra.mxu0 0.0
    %4026 = vmatprep.subr.mxu0 0.0
    %4027 = vmatpush1.msra.mxu0 0.0
    %4028 = vmatprep.subr.mxu0 0.0
    %4029 = vmatpush1.msra.mxu0 0.0
    %4030 = vmatprep.subr.mxu0 0.0
    %4031 = vmatpush1.msra.mxu0 0.0
    %4032 = vmatprep.subr.mxu0 0.0
    %4033 = vmatpush1.msra.mxu0 0.0
    %4034 = vmatprep.subr.mxu0 0.0
    %4035 = vmatpush1.msra.mxu0 0.0
    %4036 = vmatprep.subr.mxu0 0.0
    %4037 = vmatpush1.msra.mxu0 0.0
    %4038 = vmatprep.subr.mxu0 0.0
    %4039 = vmatpush1.msra.mxu0 0.0
    %4040 = vmatprep.mubr.f32.mxu0 0.0
    %4041 = vmatmul.mubr.f32.gmra.mrb[0].mxu0 %v3975
    %v4042 = vpop.f32.mrb[0].mxu0
    %v4043 = vadd.f32 0.0, %v4042
    %v4044 = vpop.f32.mrb[0].mxu0
    %v4045 = vadd.f32 0.0, %v4044
    %4046 = vdwg.mxu0
    %4047 = vmatprep.subr.mxu0 %v2180
    %4048 = vmatpush1.msra.mxu0 %v2179
    %4049 = vmatprep.subr.mxu0 %v2184
    %4050 = vmatpush1.msra.mxu0 %v2183
    %4051 = vmatprep.subr.mxu0 %v2188
    %4052 = vmatpush1.msra.mxu0 %v2187
    %4053 = vmatprep.subr.mxu0 %v2192
    %4054 = vmatpush1.msra.mxu0 %v2191
    %4055 = vmatprep.subr.mxu0 %v2196
    %4056 = vmatpush1.msra.mxu0 %v2195
    %4057 = vmatprep.subr.mxu0 %v2200
    %4058 = vmatpush1.msra.mxu0 %v2199
    %4059 = vmatprep.subr.mxu0 %v2204
    %4060 = vmatpush1.msra.mxu0 %v2203
    %4061 = vmatprep.subr.mxu0 %v2208
    %4062 = vmatpush1.msra.mxu0 %v2207
    %4063 = vmatprep.subr.mxu0 %v2212
    %4064 = vmatpush1.msra.mxu0 %v2211
    %4065 = vmatprep.subr.mxu0 %v2216
    %4066 = vmatpush1.msra.mxu0 %v2215
    %4067 = vmatprep.subr.mxu0 %v2220
    %4068 = vmatpush1.msra.mxu0 %v2219
    %4069 = vmatprep.subr.mxu0 %v2224
    %4070 = vmatpush1.msra.mxu0 %v2223
    %4071 = vmatprep.subr.mxu0 %v2228
    %4072 = vmatpush1.msra.mxu0 %v2227
    %4073 = vmatprep.subr.mxu0 %v2232
    %4074 = vmatpush1.msra.mxu0 %v2231
    %4075 = vmatprep.subr.mxu0 %v2236
    %4076 = vmatpush1.msra.mxu0 %v2235
    %4077 = vmatprep.subr.mxu0 %v2240
    %4078 = vmatpush1.msra.mxu0 %v2239
    %4079 = vmatprep.subr.mxu0 0.0
    %4080 = vmatpush1.msra.mxu0 0.0
    %4081 = vmatprep.subr.mxu0 0.0
    %4082 = vmatpush1.msra.mxu0 0.0
    %4083 = vmatprep.subr.mxu0 0.0
    %4084 = vmatpush1.msra.mxu0 0.0
    %4085 = vmatprep.subr.mxu0 0.0
    %4086 = vmatpush1.msra.mxu0 0.0
    %4087 = vmatprep.subr.mxu0 0.0
    %4088 = vmatpush1.msra.mxu0 0.0
    %4089 = vmatprep.subr.mxu0 0.0
    %4090 = vmatpush1.msra.mxu0 0.0
    %4091 = vmatprep.subr.mxu0 0.0
    %4092 = vmatpush1.msra.mxu0 0.0
    %4093 = vmatprep.subr.mxu0 0.0
    %4094 = vmatpush1.msra.mxu0 0.0
    %4095 = vmatprep.subr.mxu0 0.0
    %4096 = vmatpush1.msra.mxu0 0.0
    %4097 = vmatprep.subr.mxu0 0.0
    %4098 = vmatpush1.msra.mxu0 0.0
    %4099 = vmatprep.subr.mxu0 0.0
    %4100 = vmatpush1.msra.mxu0 0.0
    %4101 = vmatprep.subr.mxu0 0.0
    %4102 = vmatpush1.msra.mxu0 0.0
    %4103 = vmatprep.subr.mxu0 0.0
    %4104 = vmatpush1.msra.mxu0 0.0
    %4105 = vmatprep.subr.mxu0 0.0
    %4106 = vmatpush1.msra.mxu0 0.0
    %4107 = vmatprep.subr.mxu0 0.0
    %4108 = vmatpush1.msra.mxu0 0.0
    %4109 = vmatprep.subr.mxu0 0.0
    %4110 = vmatpush1.msra.mxu0 0.0
    %4111 = vmatprep.mubr.f32.mxu0 0.0
    %4112 = vmatmul.mubr.f32.gmra.mrb[0].mxu0 %v3975
    %v4113 = vpop.f32.mrb[0].mxu0
    %v4114 = vadd.f32 0.0, %v4113
    %v4115 = vpop.f32.mrb[0].mxu0
    %v4116 = vadd.f32 0.0, %v4115
    %4117 = vdwg.mxu0
    %v4122 = vcombine.low %v4043, %v4045
    %v4123 = vcombine.low %v4114, %v4116
    %v4125 = vunpack.c.l.s4 1983009808
    %v4126 = vunpack.c.0.s8 %v4125
    %v4127 = vlaneseq
    %v4128 = vshrl.u32 %v4127, 7
    %v4129 = vsub.s32 %v4126, %v4128
    %v4130 = vrot.slane %v4122, %v4129
    %v4132 = vunpack.c.l.s4 1983009808
    %v4133 = vunpack.c.0.s8 %v4132
    %v4134 = vlaneseq
    %v4135 = vshrl.u32 %v4134, 7
    %v4136 = vsub.s32 %v4133, %v4135
    %v4137 = vrot.slane %v4123, %v4136
    %v4138 = vcombine.low %v4130, %v4137
    %v4140 = vadd.f32 %v3974, %v4138
    %v4141 = vxor.u32 %v4140, 2147483648
    %v4142 = vmul.f32 %v4141, 1.442695
    %v4143 = vpow.pop %v4142
    %v4144 = vadd.f32 %v4143, 1.0
    %v4145 = vrcp.pop %v4144
    %v4146 = vmul.f32 1.0, %v4145
    %v4148 = vrot.slane %v4140, 2
    %v4150 = vxor.u32 %v4148, 2147483648
    %v4151 = vmul.f32 %v4150, 1.442695
    %v4152 = vpow.pop %v4151
    %v4153 = vadd.f32 %v4152, 1.0
    %v4154 = vrcp.pop %v4153
    %v4155 = vmul.f32 1.0, %v4154
    %v4156 = vrot.slane %v4140, 4
    %v4158 = vtanh.pop %v4156
    %v4159 = vrot.slane %v4140, 6
    %v4161 = vxor.u32 %v4159, 2147483648
    %v4162 = vmul.f32 %v4161, 1.442695
    %v4163 = vpow.pop %v4162
    %v4164 = vadd.f32 %v4163, 1.0
    %v4165 = vrcp.pop %v4164
    %v4166 = vmul.f32 1.0, %v4165
    %v4167 = vld [vmem:[#allocation6] sm:$0x3]
    %v4168 = vmul.f32 %v4155, %v4167
    %v4169 = vmul.f32 %v4146, %v4158
    %v4170 = vadd.f32 %v4168, %v4169
    %v4171 = vtanh.pop %v4170
    %v4172 = vmul.f32 %v4166, %v4171
    %4173 = vst [vmem:[#allocation6] sm:$0x3] %v4170
    %4174 = vst [vmem:[#allocation5] sm:$0x3] %v4172
    %v4175 = vld [vmem:[#allocation5] sm:$0x3]
    %v4176 = vld [vmem:[%s7] sm:$0x1]
    %v4178 = vlaneseq
    %v4179 = vshrl.u32 %v4178, 7
    %v4180 = vsub.s32 0, %v4179
    %v4181 = vrot.slane %v4176, %v4180
    %v4183 = vmul.f32 %v4175, %v4181
    %vm4184 = vcmask 1041408
    %v4185 = vsel %vm4184, %v4183, 0.0
    %4186 = vadd.xlane.f32.xlu0 %v4185
    %v4187 = vpop.xlane.xlu0 %4186
    %v4188 = vld [vmem:[#allocation7] sm:$0x1]
    %v4190 = vlaneseq
    %v4191 = vshrl.u32 %v4190, 7
    %v4192 = vsub.s32 0, %v4191
    %v4193 = vrot.slane %v4188, %v4192
    %v4195 = vadd.f32 %v4187, %v4193
    %vm4196 = vcmask 1024
    %4197 = vst.msk [vmem:[%s9] sm:$0x3] %vm4196, %v4195
    // Predicated region
    $region50: #{tpu_custom_call.1} parent=1 // pred_check
      _
    $region51: #{tpu_custom_call.1} parent=1 // pred_check_branch
      %4199 = sbr.rel (0) target = $region53
    $region52: #{tpu_custom_call.1} parent=1 // pred_region
      _
    $region53: #{tpu_custom_call.1} parent=1 // pred_fallthru
      _
    // Predicated region
    $region54: #{tpu_custom_call.1} parent=1 // pred_check
      _
    $region55: #{tpu_custom_call.1} parent=1 // pred_check_branch
      %4201 = sbr.rel (0) target = $region57
    $region56: #{tpu_custom_call.1} parent=1 // pred_region
      _
    $region57: #{tpu_custom_call.1} parent=1 // pred_fallthru
      _
    %4202 = vsyncpa [#allocation9], 1
    %4203 = vsyncpa [#allocation11], 1

</llo_original>
